<compile_context>
chip_gen: v6e
topology: v6e:2x2x1
jax: 0.10.0
libtpu: 0.0.40
codegen_flags: <defaults>
</compile_context>

<pallas_src>
import math
import jax
import jax.numpy as jnp
from jax.experimental import pallas as pl
from jax.experimental.pallas import tpu as pltpu

# ---------------- synthetic "DistilBERT" config (scaled down from 768/12/12) ----------------
VOCAB = 100
SEQ = 8
HIDDEN = 32
N_HEADS = 4
HEAD_DIM = HIDDEN // N_HEADS
FFN = 64
N_LAYERS = 2
N_LABELS = 14
HEAD_PAD = 128            # lane-dense classifier output width (N_LABELS padded to 128)
LN_EPS = 1e-12
NEG_INF = -1e9            # DistilBERT masks attention scores to ~ -inf where mask == 0

# slots inside the packed per-layer (9, 1, HIDDEN) vector-parameter slab
_BQ, _BK, _BV, _BO, _LN1G, _LN1B, _B2, _LN2G, _LN2B = range(9)


def _layer_norm(x, gamma, beta):
    mu = jnp.mean(x, axis=-1, keepdims=True)
    var = jnp.mean((x - mu) ** 2, axis=-1, keepdims=True)
    return (x - mu) * jax.lax.rsqrt(var + LN_EPS) * gamma + beta


# ---------------- fused kernel: all encoder layers + classification head -------------------
def _make_fused_kernel(batch):
    rows = batch * SEQ
    scale = 1.0 / math.sqrt(HEAD_DIM)

    def kernel(x_ref, bias_ref, wqkvo_ref, vec_ref, w1_ref, b1_ref, w2_ref,
               fcw_ref, fcb_ref, o_ref, x_sc):
        layer = pl.program_id(0)

        # load the embedded input into the resident activation scratch once
        @pl.when(layer == 0)
        def _():
            x_sc[...] = x_ref[...]

        x = x_sc[...]                          # (rows, H), stays in VMEM across layers
        w_attn = wqkvo_ref[0]                  # (4, H, H): q, k, v, o
        vec = vec_ref[0]                       # (9, 1, H): biases + LayerNorm params

        # --- multi-head self-attention ---
        q = jnp.dot(x, w_attn[0], preferred_element_type=jnp.float32) + vec[_BQ]
        k = jnp.dot(x, w_attn[1], preferred_element_type=jnp.float32) + vec[_BK]
        v = jnp.dot(x, w_attn[2], preferred_element_type=jnp.float32) + vec[_BV]
        wo = w_attn[3]                         # (H, H)
        bias = bias_ref[...]                   # (B, 1, S) additive mask: 0 or -1e9

        attn = None
        for h in range(N_HEADS):               # static unroll over heads
            lo = h * HEAD_DIM
            qh = (q[:, lo:lo + HEAD_DIM] * scale).reshape(batch, SEQ, HEAD_DIM)
            kh = k[:, lo:lo + HEAD_DIM].reshape(batch, SEQ, HEAD_DIM)
            vh = v[:, lo:lo + HEAD_DIM].reshape(batch, SEQ, HEAD_DIM)
            s = jnp.einsum('bqd,bkd->bqk', qh, kh,
                           preferred_element_type=jnp.float32) + bias
            s = s - jnp.max(s, axis=-1, keepdims=True)
            p = jnp.exp(s)
            p = p * pl.reciprocal(jnp.sum(p, axis=-1, keepdims=True), approx=True)
            ctx = jnp.einsum('bqk,bkd->bqd', p, vh,
                             preferred_element_type=jnp.float32)
            # accumulate the output projection per head: ctx @ Wo == sum_h ctx_h @ Wo[rows_h]
            part = jnp.dot(ctx.reshape(rows, HEAD_DIM), wo[lo:lo + HEAD_DIM, :],
                           preferred_element_type=jnp.float32)
            attn = part if attn is None else attn + part
        attn = attn + vec[_BO]

        h1 = _layer_norm(attn + x, vec[_LN1G], vec[_LN1B])

        # --- feed-forward ---
        z = jnp.dot(h1, w1_ref[0], preferred_element_type=jnp.float32) + b1_ref[0]
        # TODO(synk): HF DistilBERT uses exact erf-GELU; tanh approximation used here.
        z = 0.5 * z * (1.0 + jnp.tanh(0.7978845608028654 * (z + 0.044715 * z * z * z)))
        ff = jnp.dot(z, w2_ref[0], preferred_element_type=jnp.float32) + vec[_B2]

        y = _layer_norm(ff + h1, vec[_LN2G], vec[_LN2B])
        x_sc[...] = y

        # --- classification head (fc1 + LogSoftmax), fused into the last layer step ---
        # Computed on all B*S rows for a lane/sublane-dense (rows, 128) store;
        # the wrapper slices out the CLS rows and the first N_LABELS lanes.
        @pl.when(layer == pl.num_programs(0) - 1)
        def _():
            logits = jnp.dot(y, fcw_ref[...],
                             preferred_element_type=jnp.float32) + fcb_ref[...]
            m = jnp.max(logits, axis=-1, keepdims=True)
            sh = logits - m
            lse = jnp.log(jnp.sum(jnp.exp(sh), axis=-1, keepdims=True))
            o_ref[...] = sh - lse

    return kernel


def _fused_forward(x2, bias, w_qkvo, vecs, w1, b1, w2, fcw, fcb, batch):
    rows = batch * SEQ
    kernel = _make_fused_kernel(batch)
    grid_spec = pltpu.PrefetchScalarGridSpec(
        num_scalar_prefetch=0,
        grid=(N_LAYERS,),
        in_specs=[
            pl.BlockSpec((rows, HIDDEN), lambda l: (0, 0)),             # embedded input
            pl.BlockSpec((batch, 1, SEQ), lambda l: (0, 0, 0)),         # additive mask bias
            pl.BlockSpec((1, 4, HIDDEN, HIDDEN), lambda l: (l, 0, 0, 0)),  # QKVO weights
            pl.BlockSpec((1, 9, 1, HIDDEN), lambda l: (l, 0, 0, 0)),    # biases + LN params
            pl.BlockSpec((1, HIDDEN, FFN), lambda l: (l, 0, 0)),        # w1
            pl.BlockSpec((1, 1, FFN), lambda l: (l, 0, 0)),             # b1
            pl.BlockSpec((1, FFN, HIDDEN), lambda l: (l, 0, 0)),        # w2
            pl.BlockSpec((HIDDEN, HEAD_PAD), lambda l: (0, 0)),         # fc1 weight (padded)
            pl.BlockSpec((1, HEAD_PAD), lambda l: (0, 0)),              # fc1 bias (padded)
        ],
        out_specs=pl.BlockSpec((rows, HEAD_PAD), lambda l: (0, 0)),
        scratch_shapes=[pltpu.VMEM((rows, HIDDEN), jnp.float32)],
    )
    return pl.pallas_call(
        kernel,
        out_shape=jax.ShapeDtypeStruct((rows, HEAD_PAD), jnp.float32),
        grid_spec=grid_spec,
        compiler_params=pltpu.CompilerParams(dimension_semantics=("arbitrary",)),
    )(x2, bias, w_qkvo, vecs, w1, b1, w2, fcw, fcb)


# ---------------- parameter init (deterministic, synthetic, pre-packed slabs) ---------------
def init_params(key):
    ks = jax.random.split(key, 6)
    nrm = lambda k, shape: 0.02 * jax.random.normal(k, shape, jnp.float32)

    vecs = jnp.zeros((N_LAYERS, 9, 1, HIDDEN), jnp.float32)
    vecs = vecs.at[:, _LN1G].set(1.0)
    vecs = vecs.at[:, _LN2G].set(1.0)

    fc1_w = nrm(ks[5], (HIDDEN, N_LABELS))      # == nn.Linear(768,14).weight.T (scaled)
    fcw = jnp.zeros((HIDDEN, HEAD_PAD), jnp.float32).at[:, :N_LABELS].set(fc1_w)
    # padded bias lanes get -1e9 so they vanish from the LogSoftmax reduction
    fcb = jnp.full((1, HEAD_PAD), NEG_INF, jnp.float32).at[:, :N_LABELS].set(0.0)

    return {
        "word_emb": nrm(ks[0], (VOCAB, HIDDEN)),
        "pos_emb": nrm(ks[1], (SEQ, HIDDEN)),
        "emb_ln_g": jnp.ones((1, HIDDEN), jnp.float32),
        "emb_ln_b": jnp.zeros((1, HIDDEN), jnp.float32),
        "w_qkvo": nrm(ks[2], (N_LAYERS, 4, HIDDEN, HIDDEN)),
        "vecs": vecs,
        "w1": nrm(ks[3], (N_LAYERS, HIDDEN, FFN)),
        "b1": jnp.zeros((N_LAYERS, 1, FFN), jnp.float32),
        "w2": nrm(ks[4], (N_LAYERS, FFN, HIDDEN)),
        "fc1_w_pad": fcw,
        "fc1_b_pad": fcb,
    }


# ---------------- full forward (BERT_Arch.forward) ------------------------------------------
def bert_arch_forward(sent_id, mask, params):
    B = sent_id.shape[0]
    # embeddings (glue: gather + add + LayerNorm; dropout inactive at inference)
    tok = jnp.take(params["word_emb"], sent_id, axis=0)          # (B, S, H)
    x = tok + params["pos_emb"][None, :, :]
    x = _layer_norm(x, params["emb_ln_g"], params["emb_ln_b"])
    x2 = x.reshape(B * SEQ, HIDDEN)

    # additive attention-mask bias: 0 where attended, -1e9 where masked
    bias = (1.0 - mask.astype(jnp.float32)).reshape(B, 1, SEQ) * NEG_INF

    out_pad = _fused_forward(x2, bias, params["w_qkvo"], params["vecs"],
                             params["w1"], params["b1"], params["w2"],
                             params["fc1_w_pad"], params["fc1_b_pad"], B)
    # CLS row per batch element, first N_LABELS lanes  (torch.no_grad slice + head output)
    return out_pad.reshape(B, SEQ, HEAD_PAD)[:, 0, :N_LABELS]


if __name__ == "__main__":
    key = jax.random.PRNGKey(0)
    kp, kid = jax.random.split(key)
    params = init_params(kp)

    B = 2
    sent_id = jax.random.randint(kid, (B, SEQ), 0, VOCAB, dtype=jnp.int32)
    mask = jnp.array([[1, 1, 1, 1, 1, 1, 1, 1],
                      [1, 1, 1, 1, 1, 0, 0, 0]], dtype=jnp.float32)

    out = bert_arch_forward(sent_id, mask, params)
    out = jax.block_until_ready(out)
    assert out.shape == (B, N_LABELS)
    # rows of LogSoftmax output must exp-sum to 1
    assert bool(jnp.allclose(jnp.sum(jnp.exp(out), axis=1), 1.0, atol=1e-4))
    print("KERNEL_OK")
</pallas_src>

<mosaic_0001>
module attributes {stable_mosaic.version = 11 : i64} {
  func.func @kernel(%arg0: i32, %arg1: memref<16x32xf32, #tpu.memory_space<vmem>>, %arg2: memref<2x1x8xf32, #tpu.memory_space<vmem>>, %arg3: memref<1x4x32x32xf32, #tpu.memory_space<vmem>>, %arg4: memref<1x9x1x32xf32, #tpu.memory_space<vmem>>, %arg5: memref<1x32x64xf32, #tpu.memory_space<vmem>>, %arg6: memref<1x1x64xf32, #tpu.memory_space<vmem>>, %arg7: memref<1x64x32xf32, #tpu.memory_space<vmem>>, %arg8: memref<32x128xf32, #tpu.memory_space<vmem>>, %arg9: memref<1x128xf32, #tpu.memory_space<vmem>>, %arg10: memref<16x128xf32, #tpu.memory_space<vmem>>, %arg11: memref<16x32xf32, #tpu.memory_space<vmem>>) attributes {dimension_semantics = [#tpu.dimension_semantics<arbitrary>], iteration_bounds = array<i64: 2>, scalar_prefetch = 0 : i64, scratch_operands = 1 : i64, tpu.core_type = #tpu.core_type<tc>, window_params = [{pipeline_mode = #tpu.pipeline_mode<synchronous>, transform_indices = @transform_0, window_bounds = array<i64: 16, 32>}, {pipeline_mode = #tpu.pipeline_mode<synchronous>, transform_indices = @transform_1, window_bounds = array<i64: 2, 1, 8>}, {transform_indices = @transform_2, window_bounds = array<i64: 1, 4, 32, 32>}, {transform_indices = @transform_3, window_bounds = array<i64: 1, 9, 1, 32>}, {transform_indices = @transform_4, window_bounds = array<i64: 1, 32, 64>}, {transform_indices = @transform_5, window_bounds = array<i64: 1, 1, 64>}, {transform_indices = @transform_6, window_bounds = array<i64: 1, 64, 32>}, {pipeline_mode = #tpu.pipeline_mode<synchronous>, transform_indices = @transform_7, window_bounds = array<i64: 32, 128>}, {pipeline_mode = #tpu.pipeline_mode<synchronous>, transform_indices = @transform_8, window_bounds = array<i64: 1, 128>}, {pipeline_mode = #tpu.pipeline_mode<synchronous>, transform_indices = @transform_9, window_bounds = array<i64: 16, 128>}]} {
    %c0_i32 = arith.constant 0 : i32
    %0 = arith.cmpi eq, %arg0, %c0_i32 : i32
    %1 = arith.extui %0 : i1 to i32
    %c0_i32_0 = arith.constant 0 : i32
    %2 = arith.cmpi ne, %1, %c0_i32_0 : i32
    scf.if %2 {
      %c0_67 = arith.constant 0 : index
      %c0_68 = arith.constant 0 : index
      %224 = vector.load %arg1[%c0_67, %c0_68] : memref<16x32xf32, #tpu.memory_space<vmem>>, vector<16x32xf32>
      %c0_69 = arith.constant 0 : index
      %c0_70 = arith.constant 0 : index
      %225 = vector.load %arg11[%c0_69, %c0_70] : memref<16x32xf32, #tpu.memory_space<vmem>>, vector<16x32xf32>
      tpu.vector_store %arg11[%c0_69, %c0_70], %224 {strides = array<i32>} : memref<16x32xf32, #tpu.memory_space<vmem>>, vector<16x32xf32>,
    } else {
    }
    %c0 = arith.constant 0 : index
    %c0_1 = arith.constant 0 : index
    %3 = vector.load %arg11[%c0, %c0_1] : memref<16x32xf32, #tpu.memory_space<vmem>>, vector<16x32xf32>
    %c0_2 = arith.constant 0 : index
    %c0_3 = arith.constant 0 : index
    %c0_4 = arith.constant 0 : index
    %c0_5 = arith.constant 0 : index
    %4 = vector.load %arg3[%c0_2, %c0_3, %c0_4, %c0_5] : memref<1x4x32x32xf32, #tpu.memory_space<vmem>>, vector<1x4x32x32xf32>
    %5 = vector.shape_cast %4 : vector<1x4x32x32xf32> to vector<4x32x32xf32>
    %c0_6 = arith.constant 0 : index
    %c0_7 = arith.constant 0 : index
    %c0_8 = arith.constant 0 : index
    %c0_9 = arith.constant 0 : index
    %6 = vector.load %arg4[%c0_6, %c0_7, %c0_8, %c0_9] : memref<1x9x1x32xf32, #tpu.memory_space<vmem>>, vector<1x9x1x32xf32>
    %7 = vector.shape_cast %6 : vector<1x9x1x32xf32> to vector<9x1x32xf32>
    %8 = vector.extract_strided_slice %5 {offsets = [0, 0, 0], sizes = [1, 32, 32], strides = [1, 1, 1]} : vector<4x32x32xf32> to vector<1x32x32xf32>
    %9 = vector.shape_cast %8 : vector<1x32x32xf32> to vector<32x32xf32>
    %cst = arith.constant dense<0.000000e+00> : vector<16x32xf32>
    %10 = tpu.matmul %3, %9, %cst {dimension_numbers = #tpu.dot_dimension_numbers<[1], [0], [0], [1], [0, 0, 1, 1], [], []>} : vector<16x32xf32>, vector<32x32xf32>, vector<16x32xf32> -> vector<16x32xf32>
    %11 = vector.extract_strided_slice %7 {offsets = [0, 0, 0], sizes = [1, 1, 32], strides = [1, 1, 1]} : vector<9x1x32xf32> to vector<1x1x32xf32>
    %12 = vector.shape_cast %11 : vector<1x1x32xf32> to vector<1x32xf32>
    %13 = vector.broadcast %12 : vector<1x32xf32> to vector<16x32xf32>
    %14 = arith.addf %10, %13 : vector<16x32xf32>
    %15 = vector.extract_strided_slice %5 {offsets = [1, 0, 0], sizes = [1, 32, 32], strides = [1, 1, 1]} : vector<4x32x32xf32> to vector<1x32x32xf32>
    %16 = vector.shape_cast %15 : vector<1x32x32xf32> to vector<32x32xf32>
    %cst_10 = arith.constant dense<0.000000e+00> : vector<16x32xf32>
    %17 = tpu.matmul %3, %16, %cst_10 {dimension_numbers = #tpu.dot_dimension_numbers<[1], [0], [0], [1], [0, 0, 1, 1], [], []>} : vector<16x32xf32>, vector<32x32xf32>, vector<16x32xf32> -> vector<16x32xf32>
    %18 = vector.extract_strided_slice %7 {offsets = [1, 0, 0], sizes = [1, 1, 32], strides = [1, 1, 1]} : vector<9x1x32xf32> to vector<1x1x32xf32>
    %19 = vector.shape_cast %18 : vector<1x1x32xf32> to vector<1x32xf32>
    %20 = vector.broadcast %19 : vector<1x32xf32> to vector<16x32xf32>
    %21 = arith.addf %17, %20 : vector<16x32xf32>
    %22 = vector.extract_strided_slice %5 {offsets = [2, 0, 0], sizes = [1, 32, 32], strides = [1, 1, 1]} : vector<4x32x32xf32> to vector<1x32x32xf32>
    %23 = vector.shape_cast %22 : vector<1x32x32xf32> to vector<32x32xf32>
    %cst_11 = arith.constant dense<0.000000e+00> : vector<16x32xf32>
    %24 = tpu.matmul %3, %23, %cst_11 {dimension_numbers = #tpu.dot_dimension_numbers<[1], [0], [0], [1], [0, 0, 1, 1], [], []>} : vector<16x32xf32>, vector<32x32xf32>, vector<16x32xf32> -> vector<16x32xf32>
    %25 = vector.extract_strided_slice %7 {offsets = [2, 0, 0], sizes = [1, 1, 32], strides = [1, 1, 1]} : vector<9x1x32xf32> to vector<1x1x32xf32>
    %26 = vector.shape_cast %25 : vector<1x1x32xf32> to vector<1x32xf32>
    %27 = vector.broadcast %26 : vector<1x32xf32> to vector<16x32xf32>
    %28 = arith.addf %24, %27 : vector<16x32xf32>
    %29 = vector.extract_strided_slice %5 {offsets = [3, 0, 0], sizes = [1, 32, 32], strides = [1, 1, 1]} : vector<4x32x32xf32> to vector<1x32x32xf32>
    %30 = vector.shape_cast %29 : vector<1x32x32xf32> to vector<32x32xf32>
    %c0_12 = arith.constant 0 : index
    %c0_13 = arith.constant 0 : index
    %c0_14 = arith.constant 0 : index
    %31 = vector.load %arg2[%c0_12, %c0_13, %c0_14] : memref<2x1x8xf32, #tpu.memory_space<vmem>>, vector<2x1x8xf32>
    %32 = vector.extract_strided_slice %14 {offsets = [0, 0], sizes = [16, 8], strides = [1, 1]} : vector<16x32xf32> to vector<16x8xf32>
    %cst_15 = arith.constant 0.353553385 : f32
    %33 = vector.broadcast %cst_15 : f32 to vector<16x8xf32>
    %34 = arith.mulf %32, %33 : vector<16x8xf32>
    %35 = vector.shape_cast %34 : vector<16x8xf32> to vector<2x8x8xf32>
    %36 = vector.extract_strided_slice %21 {offsets = [0, 0], sizes = [16, 8], strides = [1, 1]} : vector<16x32xf32> to vector<16x8xf32>
    %37 = vector.shape_cast %36 : vector<16x8xf32> to vector<2x8x8xf32>
    %38 = vector.extract_strided_slice %28 {offsets = [0, 0], sizes = [16, 8], strides = [1, 1]} : vector<16x32xf32> to vector<16x8xf32>
    %39 = vector.shape_cast %38 : vector<16x8xf32> to vector<2x8x8xf32>
    "tpu.trace_start"() <{level = 10 : i32, message = "bqd,bkd->bqk"}> : () -> ()
    %cst_16 = arith.constant dense<0.000000e+00> : vector<2x8x8xf32>
    %40 = tpu.matmul %35, %37, %cst_16 {dimension_numbers = #tpu.dot_dimension_numbers<[2], [2], [1], [1], [0, 0, 0, 1, 1, 1], [0], [0]>} : vector<2x8x8xf32>, vector<2x8x8xf32>, vector<2x8x8xf32> -> vector<2x8x8xf32>
    "tpu.trace_stop"() : () -> ()
    %41 = vector.broadcast %31 : vector<2x1x8xf32> to vector<2x8x8xf32>
    %42 = arith.addf %40, %41 : vector<2x8x8xf32>
    %cst_17 = arith.constant dense<0xFF800000> : vector<2x8xf32>
    %43 = vector.multi_reduction <maximumf>, %42, %cst_17 [2] : vector<2x8x8xf32> to vector<2x8xf32>
    %44 = vector.shape_cast %43 : vector<2x8xf32> to vector<2x8x1xf32>
    %45 = vector.broadcast %44 : vector<2x8x1xf32> to vector<2x8x8xf32>
    %46 = arith.subf %42, %45 : vector<2x8x8xf32>
    %47 = math.exp %46 : vector<2x8x8xf32>
    %cst_18 = arith.constant dense<0.000000e+00> : vector<2x8xf32>
    %48 = vector.multi_reduction <add>, %47, %cst_18 [2] : vector<2x8x8xf32> to vector<2x8xf32>
    %49 = vector.shape_cast %48 : vector<2x8xf32> to vector<2x8x1xf32>
    %50 = tpu.reciprocal %49 {approx = true} : vector<2x8x1xf32> -> vector<2x8x1xf32>
    %51 = vector.broadcast %50 : vector<2x8x1xf32> to vector<2x8x8xf32>
    %52 = arith.mulf %47, %51 : vector<2x8x8xf32>
    "tpu.trace_start"() <{level = 10 : i32, message = "bqk,bkd->bqd"}> : () -> ()
    %cst_19 = arith.constant dense<0.000000e+00> : vector<2x8x8xf32>
    %53 = tpu.matmul %52, %39, %cst_19 {dimension_numbers = #tpu.dot_dimension_numbers<[2], [1], [1], [2], [0, 0, 0, 1, 1, 2], [0], [0]>} : vector<2x8x8xf32>, vector<2x8x8xf32>, vector<2x8x8xf32> -> vector<2x8x8xf32>
    "tpu.trace_stop"() : () -> ()
    %54 = vector.shape_cast %53 : vector<2x8x8xf32> to vector<16x8xf32>
    %55 = vector.extract_strided_slice %30 {offsets = [0, 0], sizes = [8, 32], strides = [1, 1]} : vector<32x32xf32> to vector<8x32xf32>
    %cst_20 = arith.constant dense<0.000000e+00> : vector<16x32xf32>
    %56 = tpu.matmul %54, %55, %cst_20 {dimension_numbers = #tpu.dot_dimension_numbers<[1], [0], [0], [1], [0, 0, 1, 1], [], []>} : vector<16x8xf32>, vector<8x32xf32>, vector<16x32xf32> -> vector<16x32xf32>
    %57 = vector.extract_strided_slice %14 {offsets = [0, 8], sizes = [16, 8], strides = [1, 1]} : vector<16x32xf32> to vector<16x8xf32>
    %cst_21 = arith.constant 0.353553385 : f32
    %58 = vector.broadcast %cst_21 : f32 to vector<16x8xf32>
    %59 = arith.mulf %57, %58 : vector<16x8xf32>
    %60 = vector.shape_cast %59 : vector<16x8xf32> to vector<2x8x8xf32>
    %61 = vector.extract_strided_slice %21 {offsets = [0, 8], sizes = [16, 8], strides = [1, 1]} : vector<16x32xf32> to vector<16x8xf32>
    %62 = vector.shape_cast %61 : vector<16x8xf32> to vector<2x8x8xf32>
    %63 = vector.extract_strided_slice %28 {offsets = [0, 8], sizes = [16, 8], strides = [1, 1]} : vector<16x32xf32> to vector<16x8xf32>
    %64 = vector.shape_cast %63 : vector<16x8xf32> to vector<2x8x8xf32>
    "tpu.trace_start"() <{level = 10 : i32, message = "bqd,bkd->bqk"}> : () -> ()
    %cst_22 = arith.constant dense<0.000000e+00> : vector<2x8x8xf32>
    %65 = tpu.matmul %60, %62, %cst_22 {dimension_numbers = #tpu.dot_dimension_numbers<[2], [2], [1], [1], [0, 0, 0, 1, 1, 1], [0], [0]>} : vector<2x8x8xf32>, vector<2x8x8xf32>, vector<2x8x8xf32> -> vector<2x8x8xf32>
    "tpu.trace_stop"() : () -> ()
    %66 = vector.broadcast %31 : vector<2x1x8xf32> to vector<2x8x8xf32>
    %67 = arith.addf %65, %66 : vector<2x8x8xf32>
    %cst_23 = arith.constant dense<0xFF800000> : vector<2x8xf32>
    %68 = vector.multi_reduction <maximumf>, %67, %cst_23 [2] : vector<2x8x8xf32> to vector<2x8xf32>
    %69 = vector.shape_cast %68 : vector<2x8xf32> to vector<2x8x1xf32>
    %70 = vector.broadcast %69 : vector<2x8x1xf32> to vector<2x8x8xf32>
    %71 = arith.subf %67, %70 : vector<2x8x8xf32>
    %72 = math.exp %71 : vector<2x8x8xf32>
    %cst_24 = arith.constant dense<0.000000e+00> : vector<2x8xf32>
    %73 = vector.multi_reduction <add>, %72, %cst_24 [2] : vector<2x8x8xf32> to vector<2x8xf32>
    %74 = vector.shape_cast %73 : vector<2x8xf32> to vector<2x8x1xf32>
    %75 = tpu.reciprocal %74 {approx = true} : vector<2x8x1xf32> -> vector<2x8x1xf32>
    %76 = vector.broadcast %75 : vector<2x8x1xf32> to vector<2x8x8xf32>
    %77 = arith.mulf %72, %76 : vector<2x8x8xf32>
    "tpu.trace_start"() <{level = 10 : i32, message = "bqk,bkd->bqd"}> : () -> ()
    %cst_25 = arith.constant dense<0.000000e+00> : vector<2x8x8xf32>
    %78 = tpu.matmul %77, %64, %cst_25 {dimension_numbers = #tpu.dot_dimension_numbers<[2], [1], [1], [2], [0, 0, 0, 1, 1, 2], [0], [0]>} : vector<2x8x8xf32>, vector<2x8x8xf32>, vector<2x8x8xf32> -> vector<2x8x8xf32>
    "tpu.trace_stop"() : () -> ()
    %79 = vector.shape_cast %78 : vector<2x8x8xf32> to vector<16x8xf32>
    %80 = vector.extract_strided_slice %30 {offsets = [8, 0], sizes = [8, 32], strides = [1, 1]} : vector<32x32xf32> to vector<8x32xf32>
    %cst_26 = arith.constant dense<0.000000e+00> : vector<16x32xf32>
    %81 = tpu.matmul %79, %80, %cst_26 {dimension_numbers = #tpu.dot_dimension_numbers<[1], [0], [0], [1], [0, 0, 1, 1], [], []>} : vector<16x8xf32>, vector<8x32xf32>, vector<16x32xf32> -> vector<16x32xf32>
    %82 = arith.addf %56, %81 : vector<16x32xf32>
    %83 = vector.extract_strided_slice %14 {offsets = [0, 16], sizes = [16, 8], strides = [1, 1]} : vector<16x32xf32> to vector<16x8xf32>
    %cst_27 = arith.constant 0.353553385 : f32
    %84 = vector.broadcast %cst_27 : f32 to vector<16x8xf32>
    %85 = arith.mulf %83, %84 : vector<16x8xf32>
    %86 = vector.shape_cast %85 : vector<16x8xf32> to vector<2x8x8xf32>
    %87 = vector.extract_strided_slice %21 {offsets = [0, 16], sizes = [16, 8], strides = [1, 1]} : vector<16x32xf32> to vector<16x8xf32>
    %88 = vector.shape_cast %87 : vector<16x8xf32> to vector<2x8x8xf32>
    %89 = vector.extract_strided_slice %28 {offsets = [0, 16], sizes = [16, 8], strides = [1, 1]} : vector<16x32xf32> to vector<16x8xf32>
    %90 = vector.shape_cast %89 : vector<16x8xf32> to vector<2x8x8xf32>
    "tpu.trace_start"() <{level = 10 : i32, message = "bqd,bkd->bqk"}> : () -> ()
    %cst_28 = arith.constant dense<0.000000e+00> : vector<2x8x8xf32>
    %91 = tpu.matmul %86, %88, %cst_28 {dimension_numbers = #tpu.dot_dimension_numbers<[2], [2], [1], [1], [0, 0, 0, 1, 1, 1], [0], [0]>} : vector<2x8x8xf32>, vector<2x8x8xf32>, vector<2x8x8xf32> -> vector<2x8x8xf32>
    "tpu.trace_stop"() : () -> ()
    %92 = vector.broadcast %31 : vector<2x1x8xf32> to vector<2x8x8xf32>
    %93 = arith.addf %91, %92 : vector<2x8x8xf32>
    %cst_29 = arith.constant dense<0xFF800000> : vector<2x8xf32>
    %94 = vector.multi_reduction <maximumf>, %93, %cst_29 [2] : vector<2x8x8xf32> to vector<2x8xf32>
    %95 = vector.shape_cast %94 : vector<2x8xf32> to vector<2x8x1xf32>
    %96 = vector.broadcast %95 : vector<2x8x1xf32> to vector<2x8x8xf32>
    %97 = arith.subf %93, %96 : vector<2x8x8xf32>
    %98 = math.exp %97 : vector<2x8x8xf32>
    %cst_30 = arith.constant dense<0.000000e+00> : vector<2x8xf32>
    %99 = vector.multi_reduction <add>, %98, %cst_30 [2] : vector<2x8x8xf32> to vector<2x8xf32>
    %100 = vector.shape_cast %99 : vector<2x8xf32> to vector<2x8x1xf32>
    %101 = tpu.reciprocal %100 {approx = true} : vector<2x8x1xf32> -> vector<2x8x1xf32>
    %102 = vector.broadcast %101 : vector<2x8x1xf32> to vector<2x8x8xf32>
    %103 = arith.mulf %98, %102 : vector<2x8x8xf32>
    "tpu.trace_start"() <{level = 10 : i32, message = "bqk,bkd->bqd"}> : () -> ()
    %cst_31 = arith.constant dense<0.000000e+00> : vector<2x8x8xf32>
    %104 = tpu.matmul %103, %90, %cst_31 {dimension_numbers = #tpu.dot_dimension_numbers<[2], [1], [1], [2], [0, 0, 0, 1, 1, 2], [0], [0]>} : vector<2x8x8xf32>, vector<2x8x8xf32>, vector<2x8x8xf32> -> vector<2x8x8xf32>
    "tpu.trace_stop"() : () -> ()
    %105 = vector.shape_cast %104 : vector<2x8x8xf32> to vector<16x8xf32>
    %106 = vector.extract_strided_slice %30 {offsets = [16, 0], sizes = [8, 32], strides = [1, 1]} : vector<32x32xf32> to vector<8x32xf32>
    %cst_32 = arith.constant dense<0.000000e+00> : vector<16x32xf32>
    %107 = tpu.matmul %105, %106, %cst_32 {dimension_numbers = #tpu.dot_dimension_numbers<[1], [0], [0], [1], [0, 0, 1, 1], [], []>} : vector<16x8xf32>, vector<8x32xf32>, vector<16x32xf32> -> vector<16x32xf32>
    %108 = arith.addf %82, %107 : vector<16x32xf32>
    %109 = vector.extract_strided_slice %14 {offsets = [0, 24], sizes = [16, 8], strides = [1, 1]} : vector<16x32xf32> to vector<16x8xf32>
    %cst_33 = arith.constant 0.353553385 : f32
    %110 = vector.broadcast %cst_33 : f32 to vector<16x8xf32>
    %111 = arith.mulf %109, %110 : vector<16x8xf32>
    %112 = vector.shape_cast %111 : vector<16x8xf32> to vector<2x8x8xf32>
    %113 = vector.extract_strided_slice %21 {offsets = [0, 24], sizes = [16, 8], strides = [1, 1]} : vector<16x32xf32> to vector<16x8xf32>
    %114 = vector.shape_cast %113 : vector<16x8xf32> to vector<2x8x8xf32>
    %115 = vector.extract_strided_slice %28 {offsets = [0, 24], sizes = [16, 8], strides = [1, 1]} : vector<16x32xf32> to vector<16x8xf32>
    %116 = vector.shape_cast %115 : vector<16x8xf32> to vector<2x8x8xf32>
    "tpu.trace_start"() <{level = 10 : i32, message = "bqd,bkd->bqk"}> : () -> ()
    %cst_34 = arith.constant dense<0.000000e+00> : vector<2x8x8xf32>
    %117 = tpu.matmul %112, %114, %cst_34 {dimension_numbers = #tpu.dot_dimension_numbers<[2], [2], [1], [1], [0, 0, 0, 1, 1, 1], [0], [0]>} : vector<2x8x8xf32>, vector<2x8x8xf32>, vector<2x8x8xf32> -> vector<2x8x8xf32>
    "tpu.trace_stop"() : () -> ()
    %118 = vector.broadcast %31 : vector<2x1x8xf32> to vector<2x8x8xf32>
    %119 = arith.addf %117, %118 : vector<2x8x8xf32>
    %cst_35 = arith.constant dense<0xFF800000> : vector<2x8xf32>
    %120 = vector.multi_reduction <maximumf>, %119, %cst_35 [2] : vector<2x8x8xf32> to vector<2x8xf32>
    %121 = vector.shape_cast %120 : vector<2x8xf32> to vector<2x8x1xf32>
    %122 = vector.broadcast %121 : vector<2x8x1xf32> to vector<2x8x8xf32>
    %123 = arith.subf %119, %122 : vector<2x8x8xf32>
    %124 = math.exp %123 : vector<2x8x8xf32>
    %cst_36 = arith.constant dense<0.000000e+00> : vector<2x8xf32>
    %125 = vector.multi_reduction <add>, %124, %cst_36 [2] : vector<2x8x8xf32> to vector<2x8xf32>
    %126 = vector.shape_cast %125 : vector<2x8xf32> to vector<2x8x1xf32>
    %127 = tpu.reciprocal %126 {approx = true} : vector<2x8x1xf32> -> vector<2x8x1xf32>
    %128 = vector.broadcast %127 : vector<2x8x1xf32> to vector<2x8x8xf32>
    %129 = arith.mulf %124, %128 : vector<2x8x8xf32>
    "tpu.trace_start"() <{level = 10 : i32, message = "bqk,bkd->bqd"}> : () -> ()
    %cst_37 = arith.constant dense<0.000000e+00> : vector<2x8x8xf32>
    %130 = tpu.matmul %129, %116, %cst_37 {dimension_numbers = #tpu.dot_dimension_numbers<[2], [1], [1], [2], [0, 0, 0, 1, 1, 2], [0], [0]>} : vector<2x8x8xf32>, vector<2x8x8xf32>, vector<2x8x8xf32> -> vector<2x8x8xf32>
    "tpu.trace_stop"() : () -> ()
    %131 = vector.shape_cast %130 : vector<2x8x8xf32> to vector<16x8xf32>
    %132 = vector.extract_strided_slice %30 {offsets = [24, 0], sizes = [8, 32], strides = [1, 1]} : vector<32x32xf32> to vector<8x32xf32>
    %cst_38 = arith.constant dense<0.000000e+00> : vector<16x32xf32>
    %133 = tpu.matmul %131, %132, %cst_38 {dimension_numbers = #tpu.dot_dimension_numbers<[1], [0], [0], [1], [0, 0, 1, 1], [], []>} : vector<16x8xf32>, vector<8x32xf32>, vector<16x32xf32> -> vector<16x32xf32>
    %134 = arith.addf %108, %133 : vector<16x32xf32>
    %135 = vector.extract_strided_slice %7 {offsets = [3, 0, 0], sizes = [1, 1, 32], strides = [1, 1, 1]} : vector<9x1x32xf32> to vector<1x1x32xf32>
    %136 = vector.shape_cast %135 : vector<1x1x32xf32> to vector<1x32xf32>
    %137 = vector.broadcast %136 : vector<1x32xf32> to vector<16x32xf32>
    %138 = arith.addf %134, %137 : vector<16x32xf32>
    %139 = arith.addf %138, %3 : vector<16x32xf32>
    %140 = vector.extract_strided_slice %7 {offsets = [4, 0, 0], sizes = [1, 1, 32], strides = [1, 1, 1]} : vector<9x1x32xf32> to vector<1x1x32xf32>
    %141 = vector.shape_cast %140 : vector<1x1x32xf32> to vector<1x32xf32>
    %142 = vector.extract_strided_slice %7 {offsets = [5, 0, 0], sizes = [1, 1, 32], strides = [1, 1, 1]} : vector<9x1x32xf32> to vector<1x1x32xf32>
    %143 = vector.shape_cast %142 : vector<1x1x32xf32> to vector<1x32xf32>
    %cst_39 = arith.constant dense<0.000000e+00> : vector<16xf32>
    %144 = vector.multi_reduction <add>, %139, %cst_39 [1] : vector<16x32xf32> to vector<16xf32>
    %145 = vector.shape_cast %144 : vector<16xf32> to vector<16x1xf32>
    %cst_40 = arith.constant 3.200000e+01 : f32
    %146 = vector.broadcast %cst_40 : f32 to vector<16x1xf32>
    %147 = arith.divf %145, %146 : vector<16x1xf32>
    %148 = vector.broadcast %147 : vector<16x1xf32> to vector<16x32xf32>
    %149 = arith.subf %139, %148 : vector<16x32xf32>
    %150 = arith.mulf %149, %149 : vector<16x32xf32>
    %cst_41 = arith.constant dense<0.000000e+00> : vector<16xf32>
    %151 = vector.multi_reduction <add>, %150, %cst_41 [1] : vector<16x32xf32> to vector<16xf32>
    %152 = vector.shape_cast %151 : vector<16xf32> to vector<16x1xf32>
    %cst_42 = arith.constant 3.200000e+01 : f32
    %153 = vector.broadcast %cst_42 : f32 to vector<16x1xf32>
    %154 = arith.divf %152, %153 : vector<16x1xf32>
    %155 = vector.broadcast %147 : vector<16x1xf32> to vector<16x32xf32>
    %156 = arith.subf %139, %155 : vector<16x32xf32>
    %cst_43 = arith.constant 9.99999996E-13 : f32
    %157 = vector.broadcast %cst_43 : f32 to vector<16x1xf32>
    %158 = arith.addf %154, %157 : vector<16x1xf32>
    %159 = math.rsqrt %158 : vector<16x1xf32>
    %160 = vector.broadcast %159 : vector<16x1xf32> to vector<16x32xf32>
    %161 = arith.mulf %156, %160 : vector<16x32xf32>
    %162 = vector.broadcast %141 : vector<1x32xf32> to vector<16x32xf32>
    %163 = arith.mulf %161, %162 : vector<16x32xf32>
    %164 = vector.broadcast %143 : vector<1x32xf32> to vector<16x32xf32>
    %165 = arith.addf %163, %164 : vector<16x32xf32>
    %c0_44 = arith.constant 0 : index
    %c0_45 = arith.constant 0 : index
    %c0_46 = arith.constant 0 : index
    %166 = vector.load %arg5[%c0_44, %c0_45, %c0_46] : memref<1x32x64xf32, #tpu.memory_space<vmem>>, vector<1x32x64xf32>
    %167 = vector.shape_cast %166 : vector<1x32x64xf32> to vector<32x64xf32>
    %cst_47 = arith.constant dense<0.000000e+00> : vector<16x64xf32>
    %168 = tpu.matmul %165, %167, %cst_47 {dimension_numbers = #tpu.dot_dimension_numbers<[1], [0], [0], [1], [0, 0, 1, 1], [], []>} : vector<16x32xf32>, vector<32x64xf32>, vector<16x64xf32> -> vector<16x64xf32>
    %c0_48 = arith.constant 0 : index
    %c0_49 = arith.constant 0 : index
    %c0_50 = arith.constant 0 : index
    %169 = vector.load %arg6[%c0_48, %c0_49, %c0_50] : memref<1x1x64xf32, #tpu.memory_space<vmem>>, vector<1x1x64xf32>
    %170 = vector.shape_cast %169 : vector<1x1x64xf32> to vector<1x64xf32>
    %171 = vector.broadcast %170 : vector<1x64xf32> to vector<16x64xf32>
    %172 = arith.addf %168, %171 : vector<16x64xf32>
    %cst_51 = arith.constant 5.000000e-01 : f32
    %173 = vector.broadcast %cst_51 : f32 to vector<16x64xf32>
    %174 = arith.mulf %173, %172 : vector<16x64xf32>
    %cst_52 = arith.constant 4.471500e-02 : f32
    %175 = vector.broadcast %cst_52 : f32 to vector<16x64xf32>
    %176 = arith.mulf %175, %172 : vector<16x64xf32>
    %177 = arith.mulf %176, %172 : vector<16x64xf32>
    %178 = arith.mulf %177, %172 : vector<16x64xf32>
    %179 = arith.addf %172, %178 : vector<16x64xf32>
    %cst_53 = arith.constant 0.797884583 : f32
    %180 = vector.broadcast %cst_53 : f32 to vector<16x64xf32>
    %181 = arith.mulf %180, %179 : vector<16x64xf32>
    %182 = math.tanh %181 : vector<16x64xf32>
    %cst_54 = arith.constant 1.000000e+00 : f32
    %183 = vector.broadcast %cst_54 : f32 to vector<16x64xf32>
    %184 = arith.addf %183, %182 : vector<16x64xf32>
    %185 = arith.mulf %174, %184 : vector<16x64xf32>
    %c0_55 = arith.constant 0 : index
    %c0_56 = arith.constant 0 : index
    %c0_57 = arith.constant 0 : index
    %186 = vector.load %arg7[%c0_55, %c0_56, %c0_57] : memref<1x64x32xf32, #tpu.memory_space<vmem>>, vector<1x64x32xf32>
    %187 = vector.shape_cast %186 : vector<1x64x32xf32> to vector<64x32xf32>
    %cst_58 = arith.constant dense<0.000000e+00> : vector<16x32xf32>
    %188 = tpu.matmul %185, %187, %cst_58 {dimension_numbers = #tpu.dot_dimension_numbers<[1], [0], [0], [1], [0, 0, 1, 1], [], []>} : vector<16x64xf32>, vector<64x32xf32>, vector<16x32xf32> -> vector<16x32xf32>
    %189 = vector.extract_strided_slice %7 {offsets = [6, 0, 0], sizes = [1, 1, 32], strides = [1, 1, 1]} : vector<9x1x32xf32> to vector<1x1x32xf32>
    %190 = vector.shape_cast %189 : vector<1x1x32xf32> to vector<1x32xf32>
    %191 = vector.broadcast %190 : vector<1x32xf32> to vector<16x32xf32>
    %192 = arith.addf %188, %191 : vector<16x32xf32>
    %193 = arith.addf %192, %165 : vector<16x32xf32>
    %194 = vector.extract_strided_slice %7 {offsets = [7, 0, 0], sizes = [1, 1, 32], strides = [1, 1, 1]} : vector<9x1x32xf32> to vector<1x1x32xf32>
    %195 = vector.shape_cast %194 : vector<1x1x32xf32> to vector<1x32xf32>
    %196 = vector.extract_strided_slice %7 {offsets = [8, 0, 0], sizes = [1, 1, 32], strides = [1, 1, 1]} : vector<9x1x32xf32> to vector<1x1x32xf32>
    %197 = vector.shape_cast %196 : vector<1x1x32xf32> to vector<1x32xf32>
    %cst_59 = arith.constant dense<0.000000e+00> : vector<16xf32>
    %198 = vector.multi_reduction <add>, %193, %cst_59 [1] : vector<16x32xf32> to vector<16xf32>
    %199 = vector.shape_cast %198 : vector<16xf32> to vector<16x1xf32>
    %cst_60 = arith.constant 3.200000e+01 : f32
    %200 = vector.broadcast %cst_60 : f32 to vector<16x1xf32>
    %201 = arith.divf %199, %200 : vector<16x1xf32>
    %202 = vector.broadcast %201 : vector<16x1xf32> to vector<16x32xf32>
    %203 = arith.subf %193, %202 : vector<16x32xf32>
    %204 = arith.mulf %203, %203 : vector<16x32xf32>
    %cst_61 = arith.constant dense<0.000000e+00> : vector<16xf32>
    %205 = vector.multi_reduction <add>, %204, %cst_61 [1] : vector<16x32xf32> to vector<16xf32>
    %206 = vector.shape_cast %205 : vector<16xf32> to vector<16x1xf32>
    %cst_62 = arith.constant 3.200000e+01 : f32
    %207 = vector.broadcast %cst_62 : f32 to vector<16x1xf32>
    %208 = arith.divf %206, %207 : vector<16x1xf32>
    %209 = vector.broadcast %201 : vector<16x1xf32> to vector<16x32xf32>
    %210 = arith.subf %193, %209 : vector<16x32xf32>
    %cst_63 = arith.constant 9.99999996E-13 : f32
    %211 = vector.broadcast %cst_63 : f32 to vector<16x1xf32>
    %212 = arith.addf %208, %211 : vector<16x1xf32>
    %213 = math.rsqrt %212 : vector<16x1xf32>
    %214 = vector.broadcast %213 : vector<16x1xf32> to vector<16x32xf32>
    %215 = arith.mulf %210, %214 : vector<16x32xf32>
    %216 = vector.broadcast %195 : vector<1x32xf32> to vector<16x32xf32>
    %217 = arith.mulf %215, %216 : vector<16x32xf32>
    %218 = vector.broadcast %197 : vector<1x32xf32> to vector<16x32xf32>
    %219 = arith.addf %217, %218 : vector<16x32xf32>
    %c0_64 = arith.constant 0 : index
    %c0_65 = arith.constant 0 : index
    %220 = vector.load %arg11[%c0_64, %c0_65] : memref<16x32xf32, #tpu.memory_space<vmem>>, vector<16x32xf32>
    tpu.vector_store %arg11[%c0_64, %c0_65], %219 {strides = array<i32>} : memref<16x32xf32, #tpu.memory_space<vmem>>, vector<16x32xf32>,
    %c1_i32 = arith.constant 1 : i32
    %221 = arith.cmpi eq, %arg0, %c1_i32 : i32
    %222 = arith.extui %221 : i1 to i32
    %c0_i32_66 = arith.constant 0 : i32
    %223 = arith.cmpi ne, %222, %c0_i32_66 : i32
    scf.if %223 {
      %c0_67 = arith.constant 0 : index
      %c0_68 = arith.constant 0 : index
      %224 = vector.load %arg8[%c0_67, %c0_68] : memref<32x128xf32, #tpu.memory_space<vmem>>, vector<32x128xf32>
      %cst_69 = arith.constant dense<0.000000e+00> : vector<16x128xf32>
      %225 = tpu.matmul %219, %224, %cst_69 {dimension_numbers = #tpu.dot_dimension_numbers<[1], [0], [0], [1], [0, 0, 1, 1], [], []>} : vector<16x32xf32>, vector<32x128xf32>, vector<16x128xf32> -> vector<16x128xf32>
      %c0_70 = arith.constant 0 : index
      %c0_71 = arith.constant 0 : index
      %226 = vector.load %arg9[%c0_70, %c0_71] : memref<1x128xf32, #tpu.memory_space<vmem>>, vector<1x128xf32>
      %227 = vector.broadcast %226 : vector<1x128xf32> to vector<16x128xf32>
      %228 = arith.addf %225, %227 : vector<16x128xf32>
      %cst_72 = arith.constant dense<0xFF800000> : vector<16xf32>
      %229 = vector.multi_reduction <maximumf>, %228, %cst_72 [1] : vector<16x128xf32> to vector<16xf32>
      %230 = vector.shape_cast %229 : vector<16xf32> to vector<16x1xf32>
      %231 = vector.broadcast %230 : vector<16x1xf32> to vector<16x128xf32>
      %232 = arith.subf %228, %231 : vector<16x128xf32>
      %233 = math.exp %232 : vector<16x128xf32>
      %cst_73 = arith.constant dense<0.000000e+00> : vector<16xf32>
      %234 = vector.multi_reduction <add>, %233, %cst_73 [1] : vector<16x128xf32> to vector<16xf32>
      %235 = vector.shape_cast %234 : vector<16xf32> to vector<16x1xf32>
      %236 = math.log %235 : vector<16x1xf32>
      %237 = vector.broadcast %236 : vector<16x1xf32> to vector<16x128xf32>
      %238 = arith.subf %232, %237 : vector<16x128xf32>
      %c0_74 = arith.constant 0 : index
      %c0_75 = arith.constant 0 : index
      %239 = vector.load %arg10[%c0_74, %c0_75] : memref<16x128xf32, #tpu.memory_space<vmem>>, vector<16x128xf32>
      tpu.vector_store %arg10[%c0_74, %c0_75], %238 {strides = array<i32>} : memref<16x128xf32, #tpu.memory_space<vmem>>, vector<16x128xf32>,
    } else {
    }
    return
  }
  func.func @transform_0(%arg0: i32) -> (i32, i32) {
    %c0_i32 = arith.constant 0 : i32
    %c0_i32_0 = arith.constant 0 : i32
    %c0_i32_1 = arith.constant 0 : i32
    return %c0_i32, %c0_i32_0 : i32, i32
  }
  func.func @transform_1(%arg0: i32) -> (i32, i32, i32) {
    %c0_i32 = arith.constant 0 : i32
    %c0_i32_0 = arith.constant 0 : i32
    %c0_i32_1 = arith.constant 0 : i32
    %c0_i32_2 = arith.constant 0 : i32
    return %c0_i32, %c0_i32_0, %c0_i32_1 : i32, i32, i32
  }
  func.func @transform_2(%arg0: i32) -> (i32, i32, i32, i32) {
    %c0_i32 = arith.constant 0 : i32
    %c0_i32_0 = arith.constant 0 : i32
    %c0_i32_1 = arith.constant 0 : i32
    %c0_i32_2 = arith.constant 0 : i32
    return %arg0, %c0_i32, %c0_i32_0, %c0_i32_1 : i32, i32, i32, i32
  }
  func.func @transform_3(%arg0: i32) -> (i32, i32, i32, i32) {
    %c0_i32 = arith.constant 0 : i32
    %c0_i32_0 = arith.constant 0 : i32
    %c0_i32_1 = arith.constant 0 : i32
    %c0_i32_2 = arith.constant 0 : i32
    return %arg0, %c0_i32, %c0_i32_0, %c0_i32_1 : i32, i32, i32, i32
  }
  func.func @transform_4(%arg0: i32) -> (i32, i32, i32) {
    %c0_i32 = arith.constant 0 : i32
    %c0_i32_0 = arith.constant 0 : i32
    %c0_i32_1 = arith.constant 0 : i32
    return %arg0, %c0_i32, %c0_i32_0 : i32, i32, i32
  }
  func.func @transform_5(%arg0: i32) -> (i32, i32, i32) {
    %c0_i32 = arith.constant 0 : i32
    %c0_i32_0 = arith.constant 0 : i32
    %c0_i32_1 = arith.constant 0 : i32
    return %arg0, %c0_i32, %c0_i32_0 : i32, i32, i32
  }
  func.func @transform_6(%arg0: i32) -> (i32, i32, i32) {
    %c0_i32 = arith.constant 0 : i32
    %c0_i32_0 = arith.constant 0 : i32
    %c0_i32_1 = arith.constant 0 : i32
    return %arg0, %c0_i32, %c0_i32_0 : i32, i32, i32
  }
  func.func @transform_7(%arg0: i32) -> (i32, i32) {
    %c0_i32 = arith.constant 0 : i32
    %c0_i32_0 = arith.constant 0 : i32
    %c0_i32_1 = arith.constant 0 : i32
    return %c0_i32, %c0_i32_0 : i32, i32
  }
  func.func @transform_8(%arg0: i32) -> (i32, i32) {
    %c0_i32 = arith.constant 0 : i32
    %c0_i32_0 = arith.constant 0 : i32
    %c0_i32_1 = arith.constant 0 : i32
    return %c0_i32, %c0_i32_0 : i32, i32
  }
  func.func @transform_9(%arg0: i32) -> (i32, i32) {
    %c0_i32 = arith.constant 0 : i32
    %c0_i32_0 = arith.constant 0 : i32
    %c0_i32_1 = arith.constant 0 : i32
    return %c0_i32, %c0_i32_0 : i32, i32
  }
}

</mosaic_0001>

<llo_original>
// kernel: tpu_custom_call.1
$region0: #{tpu_custom_call.1}
  #allocation0 [shape = 'u32[]', space=smem, size = 0x4, offset = 0x4, fixed_abs, tag = 'smem constant byte address 0x4 - core index']
  #allocation1 [shape = 'u32[144,128]{1,0:T(1,128)}', space=vmem, size = 0x12000, scoped, tag = 'internal scratch']
  #allocation2 [shape = 'f32[16,32]{1,0:T(8,128)}', space=vmem, size = 0x2000, scoped, tag = 'scratch operand']
  %s0 = inlined_call_operand.vmem [shape: f32[16,32], index: 0, kind: input, shape index: {}]
  %s1 = inlined_call_operand.vmem [shape: f32[2,1,8], index: 1, kind: input, shape index: {}]
  %s2 = inlined_call_operand.hbm [shape: f32[2,4,32,32], index: 2, kind: input, shape index: {}]
  %s3 = inlined_call_operand.vmem [shape: f32[2,9,1,32], index: 3, kind: input, shape index: {}]
  %s4 = inlined_call_operand.vmem [shape: f32[2,32,64], index: 4, kind: input, shape index: {}]
  %s5 = inlined_call_operand.vmem [shape: f32[2,1,64], index: 5, kind: input, shape index: {}]
  %s6 = inlined_call_operand.vmem [shape: f32[2,64,32], index: 6, kind: input, shape index: {}]
  %s7 = inlined_call_operand.vmem [shape: f32[32,128], index: 7, kind: input, shape index: {}]
  %s8 = inlined_call_operand.vmem [shape: f32[1,128], index: 8, kind: input, shape index: {}]
  %s9 = inlined_call_operand.hbm [shape: f32[16,128], index: 9, kind: output, shape index: {}]
  %s10 = sld [smem:[#allocation0]]
  $region81: #{tpu_custom_call.1} parent=0
    _
  %s12 = ssub.s32 1, %s10
  %s13 = scalar_select 0, %s12, %s10
  $region1: #{tpu_custom_call.1} parent=0
    #allocation3 [shape = 'u8[131072]{0}', space=vmem, size = 0x20000, scoped, tag = 'input window, operand 2']
    #allocation4 [shape = 's32[2]{0}', space=sflag, size = 0x8, scoped, tag = 'scoped memory for tpu_custom_call.1']
    #allocation5 [shape = 's32[2]{0}', space=sflag, size = 0x8, scoped, tag = 'scoped memory for tpu_custom_call.1']
    #allocation6 [shape = 'u8[8192]{0}', space=vmem, size = 0x2000, scoped, tag = 'output window, operand 0, single buffered']
    %14 = vsyncpa [#allocation4], 0
    %s15 = scalar_lea.sflag [#allocation4], 1
    %16 = vsyncpa %s15, 0
    %17 = vsyncpa [#allocation5], 0
    loop: start=0, step=1, limit=4
    $region2: #{tpu_custom_call.1} parent=1 // loop_pre_header
      _
    $region3: #{tpu_custom_call.1} parent=1 // loop_header
      %s19 = sphi 0, %s23
      %p20 = scmp.ge.s32.totalorder %s19, 4
      %s27 = sphi 0, %s27
      %s29 = sphi 0, %s27
      %s30 = sphi 0, %s29
      %s44 = sphi 0, %s30
      %s48 = sphi 0, %s48
      %s50 = sphi 0, %s48
      %s51 = sphi 0, %s50
      %s65 = sphi 0, %s51
      %s71 = sphi 0, %s73
      %s74 = sphi 0, %s71
      %s75 = sphi 0, %s74
      %s91 = sphi 0, %s75
      %s97 = sphi 0, %s99
      %s100 = sphi 0, %s97
      %s101 = sphi 0, %s100
      %s117 = sphi 0, %s101
      %s123 = sphi 0, %s125
      %s126 = sphi 0, %s123
      %s127 = sphi 0, %s126
      %s143 = sphi 0, %s127
      %s149 = sphi 0, %s151
      %s152 = sphi 0, %s149
      %s153 = sphi 0, %s152
      %s169 = sphi 0, %s153
      %s175 = sphi 0, %s177
      %s178 = sphi 0, %s175
      %s179 = sphi 0, %s178
      %s195 = sphi 0, %s179
      %s199 = sphi 0, %s199
      %s201 = sphi 0, %s199
      %s202 = sphi 0, %s201
      %s216 = sphi 0, %s202
      %s220 = sphi 0, %s220
      %s222 = sphi 0, %s220
      %s223 = sphi 0, %s222
      %s237 = sphi 0, %s223
      %s241 = sphi 0, %s241
      %s243 = sphi 0, %s241
      %s244 = sphi 0, %s243
      %s258 = sphi 0, %s244
    $region4: #{tpu_custom_call.1} parent=1 // loop_header_branch
      %22 = sbr.rel (%p20) target = $region8
    $region5: #{tpu_custom_call.1} parent=1 // loop_body
      %s24 = ssub.s32 %s19, 1
      %s25 = ssub.s32 %s19, 2
      %s26 = sadd.s32 %s19, 1
      %s28 = sadd.s32 %s27, 1
      %p31 = scmp.eq.s32.totalorder %s19, 1
      %p32 = scmp.ne.s32.totalorder %s27, %s29
      %p33 = scmp.eq.s32.totalorder %s19, 0
      %p34 = por %p32, %p33
      %p35 = scmp.ne.s32.totalorder %s27, %s29
      %p36 = scmp.eq.s32.totalorder %s24, 1
      %p37 = por %p35, %p36
      %p38 = scmp.ne.s32.totalorder %s29, %s30
      %p39 = scmp.eq.s32.totalorder %s24, 0
      %p40 = por %p38, %p39
      %p41 = scmp.ne.s32.totalorder %s29, %s30
      %p42 = scmp.eq.s32.totalorder %s25, 1
      %p43 = por %p41, %p42
      %p45 = scmp.ne.s32.totalorder %s30, %s44
      %p46 = scmp.eq.s32.totalorder %s25, 0
      %p47 = por %p45, %p46
      %s49 = sadd.s32 %s48, 1
      %p52 = scmp.eq.s32.totalorder %s19, 1
      %p53 = scmp.ne.s32.totalorder %s48, %s50
      %p54 = scmp.eq.s32.totalorder %s19, 0
      %p55 = por %p53, %p54
      %p56 = scmp.ne.s32.totalorder %s48, %s50
      %p57 = scmp.eq.s32.totalorder %s24, 1
      %p58 = por %p56, %p57
      %p59 = scmp.ne.s32.totalorder %s50, %s51
      %p60 = scmp.eq.s32.totalorder %s24, 0
      %p61 = por %p59, %p60
      %p62 = scmp.ne.s32.totalorder %s50, %s51
      %p63 = scmp.eq.s32.totalorder %s25, 1
      %p64 = por %p62, %p63
      %p66 = scmp.ne.s32.totalorder %s51, %s65
      %p67 = scmp.eq.s32.totalorder %s25, 0
      %p68 = por %p66, %p67
      %s69 = ssub.s32 %s19, %s26
      %p70 = scmp.eq.s32.totalorder %s69, 0
      %s72 = sadd.s32 %s71, 1
      %s73 = scalar_select %p70, %s71, %s72
      %p76 = pneg %p70
      %p77 = scmp.eq.s32.totalorder %s19, 1
      %p78 = por %p76, %p77
      %p79 = scmp.ne.s32.totalorder %s71, %s74
      %p80 = scmp.eq.s32.totalorder %s19, 0
      %p81 = por %p79, %p80
      %p82 = scmp.ne.s32.totalorder %s71, %s74
      %p83 = scmp.eq.s32.totalorder %s24, 1
      %p84 = por %p82, %p83
      %p85 = scmp.ne.s32.totalorder %s74, %s75
      %p86 = scmp.eq.s32.totalorder %s24, 0
      %p87 = por %p85, %p86
      %p88 = scmp.ne.s32.totalorder %s74, %s75
      %p89 = scmp.eq.s32.totalorder %s25, 1
      %p90 = por %p88, %p89
      %p92 = scmp.ne.s32.totalorder %s75, %s91
      %p93 = scmp.eq.s32.totalorder %s25, 0
      %p94 = por %p92, %p93
      %s95 = ssub.s32 %s19, %s26
      %p96 = scmp.eq.s32.totalorder %s95, 0
      %s98 = sadd.s32 %s97, 1
      %s99 = scalar_select %p96, %s97, %s98
      %p102 = pneg %p96
      %p103 = scmp.eq.s32.totalorder %s19, 1
      %p104 = por %p102, %p103
      %p105 = scmp.ne.s32.totalorder %s97, %s100
      %p106 = scmp.eq.s32.totalorder %s19, 0
      %p107 = por %p105, %p106
      %p108 = scmp.ne.s32.totalorder %s97, %s100
      %p109 = scmp.eq.s32.totalorder %s24, 1
      %p110 = por %p108, %p109
      %p111 = scmp.ne.s32.totalorder %s100, %s101
      %p112 = scmp.eq.s32.totalorder %s24, 0
      %p113 = por %p111, %p112
      %p114 = scmp.ne.s32.totalorder %s100, %s101
      %p115 = scmp.eq.s32.totalorder %s25, 1
      %p116 = por %p114, %p115
      %p118 = scmp.ne.s32.totalorder %s101, %s117
      %p119 = scmp.eq.s32.totalorder %s25, 0
      %p120 = por %p118, %p119
      %s121 = ssub.s32 %s19, %s26
      %p122 = scmp.eq.s32.totalorder %s121, 0
      %s124 = sadd.s32 %s123, 1
      %s125 = scalar_select %p122, %s123, %s124
      %p128 = pneg %p122
      %p129 = scmp.eq.s32.totalorder %s19, 1
      %p130 = por %p128, %p129
      %p131 = scmp.ne.s32.totalorder %s123, %s126
      %p132 = scmp.eq.s32.totalorder %s19, 0
      %p133 = por %p131, %p132
      %p134 = scmp.ne.s32.totalorder %s123, %s126
      %p135 = scmp.eq.s32.totalorder %s24, 1
      %p136 = por %p134, %p135
      %p137 = scmp.ne.s32.totalorder %s126, %s127
      %p138 = scmp.eq.s32.totalorder %s24, 0
      %p139 = por %p137, %p138
      %p140 = scmp.ne.s32.totalorder %s126, %s127
      %p141 = scmp.eq.s32.totalorder %s25, 1
      %p142 = por %p140, %p141
      %p144 = scmp.ne.s32.totalorder %s127, %s143
      %p145 = scmp.eq.s32.totalorder %s25, 0
      %p146 = por %p144, %p145
      %s147 = ssub.s32 %s19, %s26
      %p148 = scmp.eq.s32.totalorder %s147, 0
      %s150 = sadd.s32 %s149, 1
      %s151 = scalar_select %p148, %s149, %s150
      %p154 = pneg %p148
      %p155 = scmp.eq.s32.totalorder %s19, 1
      %p156 = por %p154, %p155
      %p157 = scmp.ne.s32.totalorder %s149, %s152
      %p158 = scmp.eq.s32.totalorder %s19, 0
      %p159 = por %p157, %p158
      %p160 = scmp.ne.s32.totalorder %s149, %s152
      %p161 = scmp.eq.s32.totalorder %s24, 1
      %p162 = por %p160, %p161
      %p163 = scmp.ne.s32.totalorder %s152, %s153
      %p164 = scmp.eq.s32.totalorder %s24, 0
      %p165 = por %p163, %p164
      %p166 = scmp.ne.s32.totalorder %s152, %s153
      %p167 = scmp.eq.s32.totalorder %s25, 1
      %p168 = por %p166, %p167
      %p170 = scmp.ne.s32.totalorder %s153, %s169
      %p171 = scmp.eq.s32.totalorder %s25, 0
      %p172 = por %p170, %p171
      %s173 = ssub.s32 %s19, %s26
      %p174 = scmp.eq.s32.totalorder %s173, 0
      %s176 = sadd.s32 %s175, 1
      %s177 = scalar_select %p174, %s175, %s176
      %p180 = pneg %p174
      %p181 = scmp.eq.s32.totalorder %s19, 1
      %p182 = por %p180, %p181
      %p183 = scmp.ne.s32.totalorder %s175, %s178
      %p184 = scmp.eq.s32.totalorder %s19, 0
      %p185 = por %p183, %p184
      %p186 = scmp.ne.s32.totalorder %s175, %s178
      %p187 = scmp.eq.s32.totalorder %s24, 1
      %p188 = por %p186, %p187
      %p189 = scmp.ne.s32.totalorder %s178, %s179
      %p190 = scmp.eq.s32.totalorder %s24, 0
      %p191 = por %p189, %p190
      %p192 = scmp.ne.s32.totalorder %s178, %s179
      %p193 = scmp.eq.s32.totalorder %s25, 1
      %p194 = por %p192, %p193
      %p196 = scmp.ne.s32.totalorder %s179, %s195
      %p197 = scmp.eq.s32.totalorder %s25, 0
      %p198 = por %p196, %p197
      %s200 = sadd.s32 %s199, 1
      %p203 = scmp.eq.s32.totalorder %s19, 1
      %p204 = scmp.ne.s32.totalorder %s199, %s201
      %p205 = scmp.eq.s32.totalorder %s19, 0
      %p206 = por %p204, %p205
      %p207 = scmp.ne.s32.totalorder %s199, %s201
      %p208 = scmp.eq.s32.totalorder %s24, 1
      %p209 = por %p207, %p208
      %p210 = scmp.ne.s32.totalorder %s201, %s202
      %p211 = scmp.eq.s32.totalorder %s24, 0
      %p212 = por %p210, %p211
      %p213 = scmp.ne.s32.totalorder %s201, %s202
      %p214 = scmp.eq.s32.totalorder %s25, 1
      %p215 = por %p213, %p214
      %p217 = scmp.ne.s32.totalorder %s202, %s216
      %p218 = scmp.eq.s32.totalorder %s25, 0
      %p219 = por %p217, %p218
      %s221 = sadd.s32 %s220, 1
      %p224 = scmp.eq.s32.totalorder %s19, 1
      %p225 = scmp.ne.s32.totalorder %s220, %s222
      %p226 = scmp.eq.s32.totalorder %s19, 0
      %p227 = por %p225, %p226
      %p228 = scmp.ne.s32.totalorder %s220, %s222
      %p229 = scmp.eq.s32.totalorder %s24, 1
      %p230 = por %p228, %p229
      %p231 = scmp.ne.s32.totalorder %s222, %s223
      %p232 = scmp.eq.s32.totalorder %s24, 0
      %p233 = por %p231, %p232
      %p234 = scmp.ne.s32.totalorder %s222, %s223
      %p235 = scmp.eq.s32.totalorder %s25, 1
      %p236 = por %p234, %p235
      %p238 = scmp.ne.s32.totalorder %s223, %s237
      %p239 = scmp.eq.s32.totalorder %s25, 0
      %p240 = por %p238, %p239
      %s242 = sadd.s32 %s241, 1
      %p245 = scmp.eq.s32.totalorder %s19, 1
      %p246 = scmp.ne.s32.totalorder %s241, %s243
      %p247 = scmp.eq.s32.totalorder %s19, 0
      %p248 = por %p246, %p247
      %p249 = scmp.ne.s32.totalorder %s241, %s243
      %p250 = scmp.eq.s32.totalorder %s24, 1
      %p251 = por %p249, %p250
      %p252 = scmp.ne.s32.totalorder %s243, %s244
      %p253 = scmp.eq.s32.totalorder %s24, 0
      %p254 = por %p252, %p253
      %p255 = scmp.ne.s32.totalorder %s243, %s244
      %p256 = scmp.eq.s32.totalorder %s25, 1
      %p257 = por %p255, %p256
      %p259 = scmp.ne.s32.totalorder %s244, %s258
      %p260 = scmp.eq.s32.totalorder %s25, 0
      %p261 = por %p259, %p260
      %p262 = scmp.le.s32.totalorder 1, %s19
      %p263 = scmp.lt.s32.totalorder %s19, 3
      %p264 = pnand %p262, %p263
      %p265 = pneg %p264
      // Predicated region
      $region9: #{tpu_custom_call.1} parent=5 // pred_check
        _
      $region10: #{tpu_custom_call.1} parent=5 // pred_check_branch
        %267 = sbr.rel (%p264) target = $region12
      $region11: #{tpu_custom_call.1} parent=5 // pred_region
        %s268 = ssub.s32 %s19, 1
        // Predicated region
        $region13: #{tpu_custom_call.1} parent=11 // pred_check
          %p269 = pneg %p40
        $region14: #{tpu_custom_call.1} parent=11 // pred_check_branch
          %271 = sbr.rel (%p269) target = $region16
        $region15: #{tpu_custom_call.1} parent=11 // pred_region
          _
        $region16: #{tpu_custom_call.1} parent=11 // pred_fallthru
          _
        // Predicated region
        $region17: #{tpu_custom_call.1} parent=11 // pred_check
          %p272 = pneg %p61
        $region18: #{tpu_custom_call.1} parent=11 // pred_check_branch
          %274 = sbr.rel (%p272) target = $region20
        $region19: #{tpu_custom_call.1} parent=11 // pred_region
          _
        $region20: #{tpu_custom_call.1} parent=11 // pred_fallthru
          _
        // Predicated region
        $region21: #{tpu_custom_call.1} parent=11 // pred_check
          %p275 = pneg %p212
        $region22: #{tpu_custom_call.1} parent=11 // pred_check_branch
          %277 = sbr.rel (%p275) target = $region24
        $region23: #{tpu_custom_call.1} parent=11 // pred_region
          _
        $region24: #{tpu_custom_call.1} parent=11 // pred_fallthru
          _
        // Predicated region
        $region25: #{tpu_custom_call.1} parent=11 // pred_check
          %p278 = pneg %p233
        $region26: #{tpu_custom_call.1} parent=11 // pred_check_branch
          %280 = sbr.rel (%p278) target = $region28
        $region27: #{tpu_custom_call.1} parent=11 // pred_region
          _
        $region28: #{tpu_custom_call.1} parent=11 // pred_fallthru
          _
      $region12: #{tpu_custom_call.1} parent=5 // pred_fallthru
        _
      %p281 = scmp.lt.s32.totalorder %s19, 2
      // Predicated region
      $region29: #{tpu_custom_call.1} parent=5 // pred_check
        %p282 = pneg %p281
      $region30: #{tpu_custom_call.1} parent=5 // pred_check_branch
        %284 = sbr.rel (%p282) target = $region32
      $region31: #{tpu_custom_call.1} parent=5 // pred_region
        // Predicated region
        $region33: #{tpu_custom_call.1} parent=31 // pred_check
          %p285 = pneg %p81
        $region34: #{tpu_custom_call.1} parent=31 // pred_check_branch
          %287 = sbr.rel (%p285) target = $region36
        $region35: #{tpu_custom_call.1} parent=31 // pred_region
          %s288 = sand.u32 %s71, 1
          %s289 = scalar_lea.sflag [#allocation4], %s288
          %s290 = sand.u32 %s71, 1
          %s291 = smul.addr %s290, 128
          %s292 = scalar_lea.vmem [#allocation3], %s291
          %s294 = ssub.s32 2048, 2048
          %295 = vsyncadd %s289, %s294
          %s296 = smul.addr %s19, 16
          %s297 = smul.addr %s296, 128
          %s298 = scalar_lea.hbm %s2, %s297
          %s299 = sshll.u32 %s292, 4
          %s300 = int_to_ptr.vmem [resolvable:$true] %s299
          %305 = dma.hbm_to_vmem [thread:$0]  %s298, 2048, %s300, %s289, 128, 128, 8
        $region36: #{tpu_custom_call.1} parent=31 // pred_fallthru
          _
        // Predicated region
        $region37: #{tpu_custom_call.1} parent=31 // pred_check
          %p306 = pneg %p107
        $region38: #{tpu_custom_call.1} parent=31 // pred_check_branch
          %308 = sbr.rel (%p306) target = $region40
        $region39: #{tpu_custom_call.1} parent=31 // pred_region
          %p309 = scmp.lt.s32.totalorder %s19, 1
          %s310 = scalar_select %p309, %s19, 1
          %s311 = smul.addr %s310, 9
          %s312 = scalar_lea.vmem %s3, %s311
        $region40: #{tpu_custom_call.1} parent=31 // pred_fallthru
          _
        // Predicated region
        $region41: #{tpu_custom_call.1} parent=31 // pred_check
          %p313 = pneg %p133
        $region42: #{tpu_custom_call.1} parent=31 // pred_check_branch
          %315 = sbr.rel (%p313) target = $region44
        $region43: #{tpu_custom_call.1} parent=31 // pred_region
          %p316 = scmp.lt.s32.totalorder %s19, 1
          %s317 = scalar_select %p316, %s19, 1
          %s318 = smul.addr %s317, 4
          %s319 = smul.addr %s318, 8
          %s320 = scalar_lea.vmem %s4, %s319
        $region44: #{tpu_custom_call.1} parent=31 // pred_fallthru
          _
        // Predicated region
        $region45: #{tpu_custom_call.1} parent=31 // pred_check
          %p321 = pneg %p159
        $region46: #{tpu_custom_call.1} parent=31 // pred_check_branch
          %323 = sbr.rel (%p321) target = $region48
        $region47: #{tpu_custom_call.1} parent=31 // pred_region
          %p324 = scmp.lt.s32.totalorder %s19, 1
          %s325 = scalar_select %p324, %s19, 1
          %s326 = scalar_lea.vmem %s5, %s325
        $region48: #{tpu_custom_call.1} parent=31 // pred_fallthru
          _
        // Predicated region
        $region49: #{tpu_custom_call.1} parent=31 // pred_check
          %p327 = pneg %p185
        $region50: #{tpu_custom_call.1} parent=31 // pred_check_branch
          %329 = sbr.rel (%p327) target = $region52
        $region51: #{tpu_custom_call.1} parent=31 // pred_region
          %p330 = scmp.lt.s32.totalorder %s19, 1
          %s331 = scalar_select %p330, %s19, 1
          %s332 = smul.addr %s331, 8
          %s333 = smul.addr %s332, 8
          %s334 = scalar_lea.vmem %s6, %s333
        $region52: #{tpu_custom_call.1} parent=31 // pred_fallthru
          _
      $region32: #{tpu_custom_call.1} parent=5 // pred_fallthru
        _
      %p335 = scmp.le.s32.totalorder 1, %s19
      %p336 = scmp.lt.s32.totalorder %s19, 3
      %p337 = pnand %p335, %p336
      %p338 = pneg %p337
      // Predicated region
      $region53: #{tpu_custom_call.1} parent=5 // pred_check
        _
      $region54: #{tpu_custom_call.1} parent=5 // pred_check_branch
        %340 = sbr.rel (%p337) target = $region56
      $region55: #{tpu_custom_call.1} parent=5 // pred_region
        %s341 = ssub.s32 %s19, 1
        %s342 = sand.u32 %s74, 1
        %s343 = scalar_lea.sflag [#allocation4], %s342
        %s344 = sand.u32 %s74, 1
        %s345 = smul.addr %s344, 128
        %s346 = scalar_lea.vmem [#allocation3], %s345
        // Predicated region
        $region57: #{tpu_custom_call.1} parent=55 // pred_check
          %p347 = pneg %p87
        $region58: #{tpu_custom_call.1} parent=55 // pred_check_branch
          %349 = sbr.rel (%p347) target = $region60
        $region59: #{tpu_custom_call.1} parent=55 // pred_region
          %350 = dma.done %s343, 2048
        $region60: #{tpu_custom_call.1} parent=55 // pred_fallthru
          _
        %p351 = pneg %p40
        %p352 = pneg %p37
        %p353 = pneg %p61
        %p354 = pneg %p58
        %s355 = sand.u32 %s74, 1
        %s356 = scalar_lea.sflag [#allocation4], %s355
        %s357 = sand.u32 %s74, 1
        %s358 = smul.addr %s357, 128
        %s359 = scalar_lea.vmem [#allocation3], %s358
        %p360 = pneg %p87
        %p361 = pneg %p84
        %p362 = scmp.lt.s32.totalorder %s24, 1
        %s363 = scalar_select %p362, %s24, 1
        %s364 = smul.addr %s363, 9
        %s365 = scalar_lea.vmem %s3, %s364
        %p366 = pneg %p113
        %p367 = pneg %p110
        %p368 = scmp.lt.s32.totalorder %s24, 1
        %s369 = scalar_select %p368, %s24, 1
        %s370 = smul.addr %s369, 4
        %s371 = smul.addr %s370, 8
        %s372 = scalar_lea.vmem %s4, %s371
        %p373 = pneg %p139
        %p374 = pneg %p136
        %p375 = scmp.lt.s32.totalorder %s24, 1
        %s376 = scalar_select %p375, %s24, 1
        %s377 = scalar_lea.vmem %s5, %s376
        %p378 = pneg %p165
        %p379 = pneg %p162
        %p380 = scmp.lt.s32.totalorder %s24, 1
        %s381 = scalar_select %p380, %s24, 1
        %s382 = smul.addr %s381, 8
        %s383 = smul.addr %s382, 8
        %s384 = scalar_lea.vmem %s6, %s383
        %p385 = pneg %p191
        %p386 = pneg %p188
        %p387 = pneg %p212
        %p388 = pneg %p209
        %p389 = pneg %p233
        %p390 = pneg %p230
        %p391 = pneg %p254
        %p392 = pneg %p251
        %p393 = scmp.lt.s32.totalorder %s24, 1
        %s394 = scalar_select %p393, %s24, 1
        %s395 = smul.addr %s394, 9
        %s396 = scalar_lea.vmem %s3, %s395
        %p397 = scmp.lt.s32.totalorder %s24, 1
        %s398 = scalar_select %p397, %s24, 1
        %s399 = smul.addr %s398, 4
        %s400 = smul.addr %s399, 8
        %s401 = scalar_lea.vmem %s4, %s400
        %p402 = scmp.lt.s32.totalorder %s24, 1
        %s403 = scalar_select %p402, %s24, 1
        %s404 = scalar_lea.vmem %s5, %s403
        %p405 = scmp.lt.s32.totalorder %s24, 1
        %s406 = scalar_select %p405, %s24, 1
        %s407 = smul.addr %s406, 8
        %s408 = smul.addr %s407, 8
        %s409 = scalar_lea.vmem %s6, %s408
        %p410 = scmp.eq.s32.totalorder %s24, 0
        // Predicated region
        $region61: #{tpu_custom_call.1} parent=55 // pred_check
          %p411 = pneg %p410
        $region62: #{tpu_custom_call.1} parent=55 // pred_check_branch
          %413 = sbr.rel (%p411) target = $region64
        $region63: #{tpu_custom_call.1} parent=55 // pred_region
          %v414 = vld [vmem:[%s0] sm:$0xff]
          %v415 = vld [vmem:[%s0 + $0x8] sm:$0xff]
          %vm416 = vcmask 261120
          %417 = vst.msk [vmem:[#allocation2] sm:$0xff] %vm416, %v414
          %418 = vst.msk [vmem:[#allocation2 + $0x8] sm:$0xff] %vm416, %v415
        $region64: #{tpu_custom_call.1} parent=55 // pred_fallthru
          _
        %v419 = vld [vmem:[#allocation2] sm:$0xff]
        %v420 = vld [vmem:[#allocation2 + $0x8] sm:$0xff]
        %v421 = vld [vmem:[%s346] sm:$0xff]
        %v422 = vld [vmem:[%s346 + $0x8] sm:$0xff]
        %v423 = vld [vmem:[%s346 + $0x10] sm:$0xff]
        %v424 = vld [vmem:[%s346 + $0x18] sm:$0xff]
        %v425 = vld [vmem:[%s346 + $0x20] sm:$0xff]
        %v426 = vld [vmem:[%s346 + $0x28] sm:$0xff]
        %v427 = vld [vmem:[%s346 + $0x30] sm:$0xff]
        %v428 = vld [vmem:[%s346 + $0x38] sm:$0xff]
        %v429 = vld [vmem:[%s346 + $0x40] sm:$0xff]
        %v430 = vld [vmem:[%s346 + $0x48] sm:$0xff]
        %v431 = vld [vmem:[%s346 + $0x50] sm:$0xff]
        %v432 = vld [vmem:[%s346 + $0x58] sm:$0xff]
        %v433 = vld [vmem:[%s346 + $0x60] sm:$0xff]
        %v434 = vld [vmem:[%s346 + $0x68] sm:$0xff]
        %v435 = vld [vmem:[%s346 + $0x70] sm:$0xff]
        %v436 = vld [vmem:[%s346 + $0x78] sm:$0xff]
        %v437 = vld [vmem:[%s396] sm:$0x1]
        %v438 = vld [vmem:[%s396 + $0x1] sm:$0x1]
        %v439 = vld [vmem:[%s396 + $0x2] sm:$0x1]
        %v440 = vld [vmem:[%s396 + $0x3] sm:$0x1]
        %v441 = vld [vmem:[%s396 + $0x4] sm:$0x1]
        %v442 = vld [vmem:[%s396 + $0x5] sm:$0x1]
        %v443 = vld [vmem:[%s396 + $0x6] sm:$0x1]
        %v444 = vld [vmem:[%s396 + $0x7] sm:$0x1]
        %v445 = vld [vmem:[%s396 + $0x8] sm:$0x1]
        %v447 = vlaneseq
        %v448 = vshrl.u32 %v447, 7
        %v449 = vsub.s32 0, %v448
        %v450 = vrot.slane %v437, %v449
        %vm452 = vcmask 261120
        %v454 = vsel %vm452, %v419, 0
        %v457 = vsel %vm452, %v420, 0
        %459 = vmatprep.subr.mxu0 0.0
        %460 = vmatpush1.msra.mxu0 0.0
        %461 = vmatprep.subr.mxu0 0.0
        %462 = vmatpush1.msra.mxu0 0.0
        %463 = vmatprep.subr.mxu0 0.0
        %464 = vmatpush1.msra.mxu0 0.0
        %465 = vmatprep.subr.mxu0 0.0
        %466 = vmatpush1.msra.mxu0 0.0
        %467 = vmatprep.subr.mxu0 0.0
        %468 = vmatpush1.msra.mxu0 0.0
        %469 = vmatprep.subr.mxu0 0.0
        %470 = vmatpush1.msra.mxu0 0.0
        %471 = vmatprep.subr.mxu0 0.0
        %472 = vmatpush1.msra.mxu0 0.0
        %473 = vmatprep.subr.mxu0 0.0
        %474 = vmatpush1.msra.mxu0 0.0
        %475 = vmatprep.subr.mxu0 0.0
        %476 = vmatpush1.msra.mxu0 0.0
        %477 = vmatprep.subr.mxu0 0.0
        %478 = vmatpush1.msra.mxu0 0.0
        %479 = vmatprep.subr.mxu0 0.0
        %480 = vmatpush1.msra.mxu0 0.0
        %481 = vmatprep.subr.mxu0 0.0
        %482 = vmatpush1.msra.mxu0 0.0
        %483 = vmatprep.subr.mxu0 0.0
        %484 = vmatpush1.msra.mxu0 %v424
        %485 = vmatprep.subr.mxu0 0.0
        %486 = vmatpush1.msra.mxu0 %v423
        %487 = vmatprep.subr.mxu0 0.0
        %488 = vmatpush1.msra.mxu0 %v422
        %489 = vmatprep.subr.mxu0 0.0
        %490 = vmatpush1.msra.mxu0 %v421
        %491 = vmatprep.subr.mxu0 0.0
        %492 = vmatpush2.msra.mxu0 0.0
        %493 = vmatprep.subr.mxu0 0.0
        %494 = vmatpush2.msra.mxu0 0.0
        %495 = vmatprep.subr.mxu0 0.0
        %496 = vmatpush2.msra.mxu0 0.0
        %497 = vmatprep.subr.mxu0 0.0
        %498 = vmatpush2.msra.mxu0 0.0
        %499 = vmatprep.subr.mxu0 0.0
        %500 = vmatpush2.msra.mxu0 0.0
        %501 = vmatprep.subr.mxu0 0.0
        %502 = vmatpush2.msra.mxu0 0.0
        %503 = vmatprep.subr.mxu0 0.0
        %504 = vmatpush2.msra.mxu0 0.0
        %505 = vmatprep.subr.mxu0 0.0
        %506 = vmatpush2.msra.mxu0 0.0
        %507 = vmatprep.subr.mxu0 0.0
        %508 = vmatpush2.msra.mxu0 0.0
        %509 = vmatprep.subr.mxu0 0.0
        %510 = vmatpush2.msra.mxu0 0.0
        %511 = vmatprep.subr.mxu0 0.0
        %512 = vmatpush2.msra.mxu0 0.0
        %513 = vmatprep.subr.mxu0 0.0
        %514 = vmatpush2.msra.mxu0 0.0
        %515 = vmatprep.subr.mxu0 0.0
        %516 = vmatpush2.msra.mxu0 0.0
        %517 = vmatprep.subr.mxu0 0.0
        %518 = vmatpush2.msra.mxu0 0.0
        %519 = vmatprep.subr.mxu0 0.0
        %520 = vmatpush2.msra.mxu0 0.0
        %521 = vmatprep.subr.mxu0 0.0
        %522 = vmatpush2.msra.mxu0 0.0
        %523 = vmatprep.mubr.f32.mxu0 0.0
        %524 = vmatmul.mubr.f32.gmra.mxu0 %v454
        %v525 = vpop.f32.mrf.mxu0
        %v526 = vadd.f32 %v450, %v525
        %v527 = vpop.f32.mrf.mxu0
        %528 = vmatprep.mubr.f32.mxu0 0.0
        %529 = vmatmul.mubr.f32.gmra.mxu0 %v457
        %v530 = vpop.f32.mrf.mxu0
        %v531 = vadd.f32 %v450, %v530
        %v532 = vpop.f32.mrf.mxu0
        %533 = vdwg.mxu0
        %v535 = vlaneseq
        %v536 = vshrl.u32 %v535, 7
        %v537 = vsub.s32 0, %v536
        %v538 = vrot.slane %v438, %v537
        %540 = vmatprep.subr.mxu0 0.0
        %541 = vmatpush1.msra.mxu0 0.0
        %542 = vmatprep.subr.mxu0 0.0
        %543 = vmatpush1.msra.mxu0 0.0
        %544 = vmatprep.subr.mxu0 0.0
        %545 = vmatpush1.msra.mxu0 0.0
        %546 = vmatprep.subr.mxu0 0.0
        %547 = vmatpush1.msra.mxu0 0.0
        %548 = vmatprep.subr.mxu0 0.0
        %549 = vmatpush1.msra.mxu0 0.0
        %550 = vmatprep.subr.mxu0 0.0
        %551 = vmatpush1.msra.mxu0 0.0
        %552 = vmatprep.subr.mxu0 0.0
        %553 = vmatpush1.msra.mxu0 0.0
        %554 = vmatprep.subr.mxu0 0.0
        %555 = vmatpush1.msra.mxu0 0.0
        %556 = vmatprep.subr.mxu0 0.0
        %557 = vmatpush1.msra.mxu0 0.0
        %558 = vmatprep.subr.mxu0 0.0
        %559 = vmatpush1.msra.mxu0 0.0
        %560 = vmatprep.subr.mxu0 0.0
        %561 = vmatpush1.msra.mxu0 0.0
        %562 = vmatprep.subr.mxu0 0.0
        %563 = vmatpush1.msra.mxu0 0.0
        %564 = vmatprep.subr.mxu0 0.0
        %565 = vmatpush1.msra.mxu0 %v428
        %566 = vmatprep.subr.mxu0 0.0
        %567 = vmatpush1.msra.mxu0 %v427
        %568 = vmatprep.subr.mxu0 0.0
        %569 = vmatpush1.msra.mxu0 %v426
        %570 = vmatprep.subr.mxu0 0.0
        %571 = vmatpush1.msra.mxu0 %v425
        %572 = vmatprep.subr.mxu0 0.0
        %573 = vmatpush2.msra.mxu0 0.0
        %574 = vmatprep.subr.mxu0 0.0
        %575 = vmatpush2.msra.mxu0 0.0
        %576 = vmatprep.subr.mxu0 0.0
        %577 = vmatpush2.msra.mxu0 0.0
        %578 = vmatprep.subr.mxu0 0.0
        %579 = vmatpush2.msra.mxu0 0.0
        %580 = vmatprep.subr.mxu0 0.0
        %581 = vmatpush2.msra.mxu0 0.0
        %582 = vmatprep.subr.mxu0 0.0
        %583 = vmatpush2.msra.mxu0 0.0
        %584 = vmatprep.subr.mxu0 0.0
        %585 = vmatpush2.msra.mxu0 0.0
        %586 = vmatprep.subr.mxu0 0.0
        %587 = vmatpush2.msra.mxu0 0.0
        %588 = vmatprep.subr.mxu0 0.0
        %589 = vmatpush2.msra.mxu0 0.0
        %590 = vmatprep.subr.mxu0 0.0
        %591 = vmatpush2.msra.mxu0 0.0
        %592 = vmatprep.subr.mxu0 0.0
        %593 = vmatpush2.msra.mxu0 0.0
        %594 = vmatprep.subr.mxu0 0.0
        %595 = vmatpush2.msra.mxu0 0.0
        %596 = vmatprep.subr.mxu0 0.0
        %597 = vmatpush2.msra.mxu0 0.0
        %598 = vmatprep.subr.mxu0 0.0
        %599 = vmatpush2.msra.mxu0 0.0
        %600 = vmatprep.subr.mxu0 0.0
        %601 = vmatpush2.msra.mxu0 0.0
        %602 = vmatprep.subr.mxu0 0.0
        %603 = vmatpush2.msra.mxu0 0.0
        %604 = vmatprep.mubr.f32.mxu0 0.0
        %605 = vmatmul.mubr.f32.gmra.mxu0 %v454
        %v606 = vpop.f32.mrf.mxu0
        %v607 = vadd.f32 %v538, %v606
        %v608 = vpop.f32.mrf.mxu0
        %609 = vmatprep.mubr.f32.mxu0 0.0
        %610 = vmatmul.mubr.f32.gmra.mxu0 %v457
        %v611 = vpop.f32.mrf.mxu0
        %v612 = vadd.f32 %v538, %v611
        %v613 = vpop.f32.mrf.mxu0
        %614 = vdwg.mxu0
        %v616 = vlaneseq
        %v617 = vshrl.u32 %v616, 7
        %v618 = vsub.s32 0, %v617
        %v619 = vrot.slane %v439, %v618
        %621 = vmatprep.subr.mxu0 0.0
        %622 = vmatpush1.msra.mxu0 0.0
        %623 = vmatprep.subr.mxu0 0.0
        %624 = vmatpush1.msra.mxu0 0.0
        %625 = vmatprep.subr.mxu0 0.0
        %626 = vmatpush1.msra.mxu0 0.0
        %627 = vmatprep.subr.mxu0 0.0
        %628 = vmatpush1.msra.mxu0 0.0
        %629 = vmatprep.subr.mxu0 0.0
        %630 = vmatpush1.msra.mxu0 0.0
        %631 = vmatprep.subr.mxu0 0.0
        %632 = vmatpush1.msra.mxu0 0.0
        %633 = vmatprep.subr.mxu0 0.0
        %634 = vmatpush1.msra.mxu0 0.0
        %635 = vmatprep.subr.mxu0 0.0
        %636 = vmatpush1.msra.mxu0 0.0
        %637 = vmatprep.subr.mxu0 0.0
        %638 = vmatpush1.msra.mxu0 0.0
        %639 = vmatprep.subr.mxu0 0.0
        %640 = vmatpush1.msra.mxu0 0.0
        %641 = vmatprep.subr.mxu0 0.0
        %642 = vmatpush1.msra.mxu0 0.0
        %643 = vmatprep.subr.mxu0 0.0
        %644 = vmatpush1.msra.mxu0 0.0
        %645 = vmatprep.subr.mxu0 0.0
        %646 = vmatpush1.msra.mxu0 %v432
        %647 = vmatprep.subr.mxu0 0.0
        %648 = vmatpush1.msra.mxu0 %v431
        %649 = vmatprep.subr.mxu0 0.0
        %650 = vmatpush1.msra.mxu0 %v430
        %651 = vmatprep.subr.mxu0 0.0
        %652 = vmatpush1.msra.mxu0 %v429
        %653 = vmatprep.subr.mxu0 0.0
        %654 = vmatpush2.msra.mxu0 0.0
        %655 = vmatprep.subr.mxu0 0.0
        %656 = vmatpush2.msra.mxu0 0.0
        %657 = vmatprep.subr.mxu0 0.0
        %658 = vmatpush2.msra.mxu0 0.0
        %659 = vmatprep.subr.mxu0 0.0
        %660 = vmatpush2.msra.mxu0 0.0
        %661 = vmatprep.subr.mxu0 0.0
        %662 = vmatpush2.msra.mxu0 0.0
        %663 = vmatprep.subr.mxu0 0.0
        %664 = vmatpush2.msra.mxu0 0.0
        %665 = vmatprep.subr.mxu0 0.0
        %666 = vmatpush2.msra.mxu0 0.0
        %667 = vmatprep.subr.mxu0 0.0
        %668 = vmatpush2.msra.mxu0 0.0
        %669 = vmatprep.subr.mxu0 0.0
        %670 = vmatpush2.msra.mxu0 0.0
        %671 = vmatprep.subr.mxu0 0.0
        %672 = vmatpush2.msra.mxu0 0.0
        %673 = vmatprep.subr.mxu0 0.0
        %674 = vmatpush2.msra.mxu0 0.0
        %675 = vmatprep.subr.mxu0 0.0
        %676 = vmatpush2.msra.mxu0 0.0
        %677 = vmatprep.subr.mxu0 0.0
        %678 = vmatpush2.msra.mxu0 0.0
        %679 = vmatprep.subr.mxu0 0.0
        %680 = vmatpush2.msra.mxu0 0.0
        %681 = vmatprep.subr.mxu0 0.0
        %682 = vmatpush2.msra.mxu0 0.0
        %683 = vmatprep.subr.mxu0 0.0
        %684 = vmatpush2.msra.mxu0 0.0
        %685 = vmatprep.mubr.f32.mxu0 0.0
        %686 = vmatmul.mubr.f32.gmra.mxu0 %v454
        %v687 = vpop.f32.mrf.mxu0
        %v688 = vadd.f32 %v619, %v687
        %v689 = vpop.f32.mrf.mxu0
        %690 = vmatprep.mubr.f32.mxu0 0.0
        %691 = vmatmul.mubr.f32.gmra.mxu0 %v457
        %v692 = vpop.f32.mrf.mxu0
        %v693 = vadd.f32 %v619, %v692
        %v694 = vpop.f32.mrf.mxu0
        %695 = vdwg.mxu0
        %v696 = vld [vmem:[%s1] sm:$0x1]
        %v697 = vld [vmem:[%s1 + $0x1] sm:$0x1]
        %v698 = vmul.f32 %v526, 0.35355338
        %v699 = vmul.f32 %v531, 0.35355338
        %v702 = vlaneseq
        %v703 = vshrl.u32 %v702, 7
        %v704 = vsub.s32 0, %v703
        %v705 = vrot.slane %v696, %v704
        %v706 = vlaneseq
        %v707 = vshrl.u32 %v706, 7
        %v708 = vsub.s32 0, %v707
        %v709 = vrot.slane %v697, %v708
        %vm712 = vcmask 64512
        %v714 = vsel %vm712, %v698, 0
        %v717 = vsel %vm712, %v607, 0
        %719 = vmatprep.subr.mxu0 0.0
        %720 = vmatpush1.xpose.msra.mxu0 0.0
        %721 = vmatprep.subr.mxu0 0.0
        %722 = vmatpush1.xpose.msra.mxu0 0.0
        %723 = vmatprep.subr.mxu0 0.0
        %724 = vmatpush1.xpose.msra.mxu0 0.0
        %725 = vmatprep.subr.mxu0 0.0
        %726 = vmatpush1.xpose.msra.mxu0 0.0
        %727 = vmatprep.subr.mxu0 0.0
        %728 = vmatpush1.xpose.msra.mxu0 0.0
        %729 = vmatprep.subr.mxu0 0.0
        %730 = vmatpush1.xpose.msra.mxu0 0.0
        %731 = vmatprep.subr.mxu0 0.0
        %732 = vmatpush1.xpose.msra.mxu0 0.0
        %733 = vmatprep.subr.mxu0 0.0
        %734 = vmatpush1.xpose.msra.mxu0 0.0
        %735 = vmatprep.subr.mxu0 0.0
        %736 = vmatpush1.xpose.msra.mxu0 0.0
        %737 = vmatprep.subr.mxu0 0.0
        %738 = vmatpush1.xpose.msra.mxu0 0.0
        %739 = vmatprep.subr.mxu0 0.0
        %740 = vmatpush1.xpose.msra.mxu0 0.0
        %741 = vmatprep.subr.mxu0 0.0
        %742 = vmatpush1.xpose.msra.mxu0 0.0
        %743 = vmatprep.subr.mxu0 0.0
        %744 = vmatpush1.xpose.msra.mxu0 0.0
        %745 = vmatprep.subr.mxu0 0.0
        %746 = vmatpush1.xpose.msra.mxu0 0.0
        %747 = vmatprep.subr.mxu0 0.0
        %748 = vmatpush1.xpose.msra.mxu0 0.0
        %749 = vmatprep.subr.mxu0 0.0
        %750 = vmatpush1.xpose.msra.mxu0 %v717
        %751 = vmatprep.subr.mxu0 0.0
        %752 = vmatpush2.xpose.msra.mxu0 0.0
        %753 = vmatprep.subr.mxu0 0.0
        %754 = vmatpush2.xpose.msra.mxu0 0.0
        %755 = vmatprep.subr.mxu0 0.0
        %756 = vmatpush2.xpose.msra.mxu0 0.0
        %757 = vmatprep.subr.mxu0 0.0
        %758 = vmatpush2.xpose.msra.mxu0 0.0
        %759 = vmatprep.subr.mxu0 0.0
        %760 = vmatpush2.xpose.msra.mxu0 0.0
        %761 = vmatprep.subr.mxu0 0.0
        %762 = vmatpush2.xpose.msra.mxu0 0.0
        %763 = vmatprep.subr.mxu0 0.0
        %764 = vmatpush2.xpose.msra.mxu0 0.0
        %765 = vmatprep.subr.mxu0 0.0
        %766 = vmatpush2.xpose.msra.mxu0 0.0
        %767 = vmatprep.subr.mxu0 0.0
        %768 = vmatpush2.xpose.msra.mxu0 0.0
        %769 = vmatprep.subr.mxu0 0.0
        %770 = vmatpush2.xpose.msra.mxu0 0.0
        %771 = vmatprep.subr.mxu0 0.0
        %772 = vmatpush2.xpose.msra.mxu0 0.0
        %773 = vmatprep.subr.mxu0 0.0
        %774 = vmatpush2.xpose.msra.mxu0 0.0
        %775 = vmatprep.subr.mxu0 0.0
        %776 = vmatpush2.xpose.msra.mxu0 0.0
        %777 = vmatprep.subr.mxu0 0.0
        %778 = vmatpush2.xpose.msra.mxu0 0.0
        %779 = vmatprep.subr.mxu0 0.0
        %780 = vmatpush2.xpose.msra.mxu0 0.0
        %781 = vmatprep.subr.mxu0 0.0
        %782 = vmatpush2.xpose.msra.mxu0 0.0
        %783 = vmatprep.mubr.f32.mxu0 0.0
        %784 = vmatmul.mubr.f32.gmra.mxu0 %v714
        %v785 = vpop.f32.mrf.mxu0
        %v786 = vadd.f32 %v705, %v785
        %v787 = vpop.f32.mrf.mxu0
        %788 = vdwg.mxu0
        %v790 = vsel %vm712, %v699, 0
        %v793 = vsel %vm712, %v612, 0
        %795 = vmatprep.subr.mxu0 0.0
        %796 = vmatpush1.xpose.msra.mxu0 0.0
        %797 = vmatprep.subr.mxu0 0.0
        %798 = vmatpush1.xpose.msra.mxu0 0.0
        %799 = vmatprep.subr.mxu0 0.0
        %800 = vmatpush1.xpose.msra.mxu0 0.0
        %801 = vmatprep.subr.mxu0 0.0
        %802 = vmatpush1.xpose.msra.mxu0 0.0
        %803 = vmatprep.subr.mxu0 0.0
        %804 = vmatpush1.xpose.msra.mxu0 0.0
        %805 = vmatprep.subr.mxu0 0.0
        %806 = vmatpush1.xpose.msra.mxu0 0.0
        %807 = vmatprep.subr.mxu0 0.0
        %808 = vmatpush1.xpose.msra.mxu0 0.0
        %809 = vmatprep.subr.mxu0 0.0
        %810 = vmatpush1.xpose.msra.mxu0 0.0
        %811 = vmatprep.subr.mxu0 0.0
        %812 = vmatpush1.xpose.msra.mxu0 0.0
        %813 = vmatprep.subr.mxu0 0.0
        %814 = vmatpush1.xpose.msra.mxu0 0.0
        %815 = vmatprep.subr.mxu0 0.0
        %816 = vmatpush1.xpose.msra.mxu0 0.0
        %817 = vmatprep.subr.mxu0 0.0
        %818 = vmatpush1.xpose.msra.mxu0 0.0
        %819 = vmatprep.subr.mxu0 0.0
        %820 = vmatpush1.xpose.msra.mxu0 0.0
        %821 = vmatprep.subr.mxu0 0.0
        %822 = vmatpush1.xpose.msra.mxu0 0.0
        %823 = vmatprep.subr.mxu0 0.0
        %824 = vmatpush1.xpose.msra.mxu0 0.0
        %825 = vmatprep.subr.mxu0 0.0
        %826 = vmatpush1.xpose.msra.mxu0 %v793
        %827 = vmatprep.subr.mxu0 0.0
        %828 = vmatpush2.xpose.msra.mxu0 0.0
        %829 = vmatprep.subr.mxu0 0.0
        %830 = vmatpush2.xpose.msra.mxu0 0.0
        %831 = vmatprep.subr.mxu0 0.0
        %832 = vmatpush2.xpose.msra.mxu0 0.0
        %833 = vmatprep.subr.mxu0 0.0
        %834 = vmatpush2.xpose.msra.mxu0 0.0
        %835 = vmatprep.subr.mxu0 0.0
        %836 = vmatpush2.xpose.msra.mxu0 0.0
        %837 = vmatprep.subr.mxu0 0.0
        %838 = vmatpush2.xpose.msra.mxu0 0.0
        %839 = vmatprep.subr.mxu0 0.0
        %840 = vmatpush2.xpose.msra.mxu0 0.0
        %841 = vmatprep.subr.mxu0 0.0
        %842 = vmatpush2.xpose.msra.mxu0 0.0
        %843 = vmatprep.subr.mxu0 0.0
        %844 = vmatpush2.xpose.msra.mxu0 0.0
        %845 = vmatprep.subr.mxu0 0.0
        %846 = vmatpush2.xpose.msra.mxu0 0.0
        %847 = vmatprep.subr.mxu0 0.0
        %848 = vmatpush2.xpose.msra.mxu0 0.0
        %849 = vmatprep.subr.mxu0 0.0
        %850 = vmatpush2.xpose.msra.mxu0 0.0
        %851 = vmatprep.subr.mxu0 0.0
        %852 = vmatpush2.xpose.msra.mxu0 0.0
        %853 = vmatprep.subr.mxu0 0.0
        %854 = vmatpush2.xpose.msra.mxu0 0.0
        %855 = vmatprep.subr.mxu0 0.0
        %856 = vmatpush2.xpose.msra.mxu0 0.0
        %857 = vmatprep.subr.mxu0 0.0
        %858 = vmatpush2.xpose.msra.mxu0 0.0
        %859 = vmatprep.mubr.f32.mxu0 0.0
        %860 = vmatmul.mubr.f32.gmra.mxu0 %v790
        %v861 = vpop.f32.mrf.mxu0
        %v862 = vadd.f32 %v709, %v861
        %v863 = vpop.f32.mrf.mxu0
        %864 = vdwg.mxu0
        %v865 = vsel %vm712, %v786, -inf
        %866 = vmax.xlane.f32.xlu0 %v865
        %v867 = vpop.xlane.xlu0 %866
        %v868 = vsel %vm712, %v862, -inf
        %869 = vmax.xlane.f32.xlu0 %v868
        %v870 = vpop.xlane.xlu0 %869
        %v871 = vsub.f32 %v786, %v867
        %v872 = vsub.f32 %v862, %v870
        %v873 = vmul.f32 %v871, 1.442695
        %v874 = vpow.pop %v873
        %v875 = vmul.f32 %v872, 1.442695
        %v876 = vpow.pop %v875
        %v877 = vsel %vm712, %v874, 0.0
        %878 = vadd.xlane.f32.xlu0 %v877
        %v879 = vpop.xlane.xlu0 %878
        %v880 = vsel %vm712, %v876, 0.0
        %881 = vadd.xlane.f32.xlu0 %v880
        %v882 = vpop.xlane.xlu0 %881
        %v883 = vrcp.pop %v879
        %v884 = vrcp.pop %v882
        %v885 = vmul.f32 %v874, %v883
        %v886 = vmul.f32 %v876, %v884
        %v888 = vsel %vm712, %v885, 0
        %890 = vmatprep.subr.mxu0 0.0
        %891 = vmatpush1.msra.mxu0 0.0
        %892 = vmatprep.subr.mxu0 0.0
        %893 = vmatpush1.msra.mxu0 0.0
        %894 = vmatprep.subr.mxu0 0.0
        %895 = vmatpush1.msra.mxu0 0.0
        %896 = vmatprep.subr.mxu0 0.0
        %897 = vmatpush1.msra.mxu0 0.0
        %898 = vmatprep.subr.mxu0 0.0
        %899 = vmatpush1.msra.mxu0 0.0
        %900 = vmatprep.subr.mxu0 0.0
        %901 = vmatpush1.msra.mxu0 0.0
        %902 = vmatprep.subr.mxu0 0.0
        %903 = vmatpush1.msra.mxu0 0.0
        %904 = vmatprep.subr.mxu0 0.0
        %905 = vmatpush1.msra.mxu0 0.0
        %906 = vmatprep.subr.mxu0 0.0
        %907 = vmatpush1.msra.mxu0 0.0
        %908 = vmatprep.subr.mxu0 0.0
        %909 = vmatpush1.msra.mxu0 0.0
        %910 = vmatprep.subr.mxu0 0.0
        %911 = vmatpush1.msra.mxu0 0.0
        %912 = vmatprep.subr.mxu0 0.0
        %913 = vmatpush1.msra.mxu0 0.0
        %914 = vmatprep.subr.mxu0 0.0
        %915 = vmatpush1.msra.mxu0 0.0
        %916 = vmatprep.subr.mxu0 0.0
        %917 = vmatpush1.msra.mxu0 0.0
        %918 = vmatprep.subr.mxu0 0.0
        %919 = vmatpush1.msra.mxu0 0.0
        %920 = vmatprep.subr.mxu0 0.0
        %921 = vmatpush1.msra.mxu0 %v688
        %922 = vmatprep.subr.mxu0 0.0
        %923 = vmatpush2.msra.mxu0 0.0
        %924 = vmatprep.subr.mxu0 0.0
        %925 = vmatpush2.msra.mxu0 0.0
        %926 = vmatprep.subr.mxu0 0.0
        %927 = vmatpush2.msra.mxu0 0.0
        %928 = vmatprep.subr.mxu0 0.0
        %929 = vmatpush2.msra.mxu0 0.0
        %930 = vmatprep.subr.mxu0 0.0
        %931 = vmatpush2.msra.mxu0 0.0
        %932 = vmatprep.subr.mxu0 0.0
        %933 = vmatpush2.msra.mxu0 0.0
        %934 = vmatprep.subr.mxu0 0.0
        %935 = vmatpush2.msra.mxu0 0.0
        %936 = vmatprep.subr.mxu0 0.0
        %937 = vmatpush2.msra.mxu0 0.0
        %938 = vmatprep.subr.mxu0 0.0
        %939 = vmatpush2.msra.mxu0 0.0
        %940 = vmatprep.subr.mxu0 0.0
        %941 = vmatpush2.msra.mxu0 0.0
        %942 = vmatprep.subr.mxu0 0.0
        %943 = vmatpush2.msra.mxu0 0.0
        %944 = vmatprep.subr.mxu0 0.0
        %945 = vmatpush2.msra.mxu0 0.0
        %946 = vmatprep.subr.mxu0 0.0
        %947 = vmatpush2.msra.mxu0 0.0
        %948 = vmatprep.subr.mxu0 0.0
        %949 = vmatpush2.msra.mxu0 0.0
        %950 = vmatprep.subr.mxu0 0.0
        %951 = vmatpush2.msra.mxu0 0.0
        %952 = vmatprep.subr.mxu0 0.0
        %953 = vmatpush2.msra.mxu0 0.0
        %954 = vmatprep.mubr.f32.mxu0 0.0
        %955 = vmatmul.mubr.f32.gmra.mxu0 %v888
        %v956 = vpop.f32.mrf.mxu0
        %v957 = vadd.f32 0.0, %v956
        %v958 = vpop.f32.mrf.mxu0
        %959 = vdwg.mxu0
        %v961 = vsel %vm712, %v886, 0
        %963 = vmatprep.subr.mxu0 0.0
        %964 = vmatpush1.msra.mxu0 0.0
        %965 = vmatprep.subr.mxu0 0.0
        %966 = vmatpush1.msra.mxu0 0.0
        %967 = vmatprep.subr.mxu0 0.0
        %968 = vmatpush1.msra.mxu0 0.0
        %969 = vmatprep.subr.mxu0 0.0
        %970 = vmatpush1.msra.mxu0 0.0
        %971 = vmatprep.subr.mxu0 0.0
        %972 = vmatpush1.msra.mxu0 0.0
        %973 = vmatprep.subr.mxu0 0.0
        %974 = vmatpush1.msra.mxu0 0.0
        %975 = vmatprep.subr.mxu0 0.0
        %976 = vmatpush1.msra.mxu0 0.0
        %977 = vmatprep.subr.mxu0 0.0
        %978 = vmatpush1.msra.mxu0 0.0
        %979 = vmatprep.subr.mxu0 0.0
        %980 = vmatpush1.msra.mxu0 0.0
        %981 = vmatprep.subr.mxu0 0.0
        %982 = vmatpush1.msra.mxu0 0.0
        %983 = vmatprep.subr.mxu0 0.0
        %984 = vmatpush1.msra.mxu0 0.0
        %985 = vmatprep.subr.mxu0 0.0
        %986 = vmatpush1.msra.mxu0 0.0
        %987 = vmatprep.subr.mxu0 0.0
        %988 = vmatpush1.msra.mxu0 0.0
        %989 = vmatprep.subr.mxu0 0.0
        %990 = vmatpush1.msra.mxu0 0.0
        %991 = vmatprep.subr.mxu0 0.0
        %992 = vmatpush1.msra.mxu0 0.0
        %993 = vmatprep.subr.mxu0 0.0
        %994 = vmatpush1.msra.mxu0 %v693
        %995 = vmatprep.subr.mxu0 0.0
        %996 = vmatpush2.msra.mxu0 0.0
        %997 = vmatprep.subr.mxu0 0.0
        %998 = vmatpush2.msra.mxu0 0.0
        %999 = vmatprep.subr.mxu0 0.0
        %1000 = vmatpush2.msra.mxu0 0.0
        %1001 = vmatprep.subr.mxu0 0.0
        %1002 = vmatpush2.msra.mxu0 0.0
        %1003 = vmatprep.subr.mxu0 0.0
        %1004 = vmatpush2.msra.mxu0 0.0
        %1005 = vmatprep.subr.mxu0 0.0
        %1006 = vmatpush2.msra.mxu0 0.0
        %1007 = vmatprep.subr.mxu0 0.0
        %1008 = vmatpush2.msra.mxu0 0.0
        %1009 = vmatprep.subr.mxu0 0.0
        %1010 = vmatpush2.msra.mxu0 0.0
        %1011 = vmatprep.subr.mxu0 0.0
        %1012 = vmatpush2.msra.mxu0 0.0
        %1013 = vmatprep.subr.mxu0 0.0
        %1014 = vmatpush2.msra.mxu0 0.0
        %1015 = vmatprep.subr.mxu0 0.0
        %1016 = vmatpush2.msra.mxu0 0.0
        %1017 = vmatprep.subr.mxu0 0.0
        %1018 = vmatpush2.msra.mxu0 0.0
        %1019 = vmatprep.subr.mxu0 0.0
        %1020 = vmatpush2.msra.mxu0 0.0
        %1021 = vmatprep.subr.mxu0 0.0
        %1022 = vmatpush2.msra.mxu0 0.0
        %1023 = vmatprep.subr.mxu0 0.0
        %1024 = vmatpush2.msra.mxu0 0.0
        %1025 = vmatprep.subr.mxu0 0.0
        %1026 = vmatpush2.msra.mxu0 0.0
        %1027 = vmatprep.mubr.f32.mxu0 0.0
        %1028 = vmatmul.mubr.f32.gmra.mxu0 %v961
        %v1029 = vpop.f32.mrf.mxu0
        %v1030 = vadd.f32 0.0, %v1029
        %v1031 = vpop.f32.mrf.mxu0
        %1032 = vdwg.mxu0
        %1033 = vrot.lane.b32.xlu0 %v698, 120
        %v1034 = vpop.permute.xlu0 %1033
        %1035 = vrot.lane.b32.xlu0 %v607, 120
        %v1036 = vpop.permute.xlu0 %1035
        %v1037 = vsel %vm712, %v1034, 0
        %v1039 = vsel %vm712, %v1036, 0
        %1041 = vmatprep.subr.mxu0 0.0
        %1042 = vmatpush1.xpose.msra.mxu0 0.0
        %1043 = vmatprep.subr.mxu0 0.0
        %1044 = vmatpush1.xpose.msra.mxu0 0.0
        %1045 = vmatprep.subr.mxu0 0.0
        %1046 = vmatpush1.xpose.msra.mxu0 0.0
        %1047 = vmatprep.subr.mxu0 0.0
        %1048 = vmatpush1.xpose.msra.mxu0 0.0
        %1049 = vmatprep.subr.mxu0 0.0
        %1050 = vmatpush1.xpose.msra.mxu0 0.0
        %1051 = vmatprep.subr.mxu0 0.0
        %1052 = vmatpush1.xpose.msra.mxu0 0.0
        %1053 = vmatprep.subr.mxu0 0.0
        %1054 = vmatpush1.xpose.msra.mxu0 0.0
        %1055 = vmatprep.subr.mxu0 0.0
        %1056 = vmatpush1.xpose.msra.mxu0 0.0
        %1057 = vmatprep.subr.mxu0 0.0
        %1058 = vmatpush1.xpose.msra.mxu0 0.0
        %1059 = vmatprep.subr.mxu0 0.0
        %1060 = vmatpush1.xpose.msra.mxu0 0.0
        %1061 = vmatprep.subr.mxu0 0.0
        %1062 = vmatpush1.xpose.msra.mxu0 0.0
        %1063 = vmatprep.subr.mxu0 0.0
        %1064 = vmatpush1.xpose.msra.mxu0 0.0
        %1065 = vmatprep.subr.mxu0 0.0
        %1066 = vmatpush1.xpose.msra.mxu0 0.0
        %1067 = vmatprep.subr.mxu0 0.0
        %1068 = vmatpush1.xpose.msra.mxu0 0.0
        %1069 = vmatprep.subr.mxu0 0.0
        %1070 = vmatpush1.xpose.msra.mxu0 0.0
        %1071 = vmatprep.subr.mxu0 0.0
        %1072 = vmatpush1.xpose.msra.mxu0 %v1039
        %1073 = vmatprep.subr.mxu0 0.0
        %1074 = vmatpush2.xpose.msra.mxu0 0.0
        %1075 = vmatprep.subr.mxu0 0.0
        %1076 = vmatpush2.xpose.msra.mxu0 0.0
        %1077 = vmatprep.subr.mxu0 0.0
        %1078 = vmatpush2.xpose.msra.mxu0 0.0
        %1079 = vmatprep.subr.mxu0 0.0
        %1080 = vmatpush2.xpose.msra.mxu0 0.0
        %1081 = vmatprep.subr.mxu0 0.0
        %1082 = vmatpush2.xpose.msra.mxu0 0.0
        %1083 = vmatprep.subr.mxu0 0.0
        %1084 = vmatpush2.xpose.msra.mxu0 0.0
        %1085 = vmatprep.subr.mxu0 0.0
        %1086 = vmatpush2.xpose.msra.mxu0 0.0
        %1087 = vmatprep.subr.mxu0 0.0
        %1088 = vmatpush2.xpose.msra.mxu0 0.0
        %1089 = vmatprep.subr.mxu0 0.0
        %1090 = vmatpush2.xpose.msra.mxu0 0.0
        %1091 = vmatprep.subr.mxu0 0.0
        %1092 = vmatpush2.xpose.msra.mxu0 0.0
        %1093 = vmatprep.subr.mxu0 0.0
        %1094 = vmatpush2.xpose.msra.mxu0 0.0
        %1095 = vmatprep.subr.mxu0 0.0
        %1096 = vmatpush2.xpose.msra.mxu0 0.0
        %1097 = vmatprep.subr.mxu0 0.0
        %1098 = vmatpush2.xpose.msra.mxu0 0.0
        %1099 = vmatprep.subr.mxu0 0.0
        %1100 = vmatpush2.xpose.msra.mxu0 0.0
        %1101 = vmatprep.subr.mxu0 0.0
        %1102 = vmatpush2.xpose.msra.mxu0 0.0
        %1103 = vmatprep.subr.mxu0 0.0
        %1104 = vmatpush2.xpose.msra.mxu0 0.0
        %1105 = vmatprep.mubr.f32.mxu0 0.0
        %1106 = vmatmul.mubr.f32.gmra.mxu0 %v1037
        %v1107 = vpop.f32.mrf.mxu0
        %v1108 = vadd.f32 %v705, %v1107
        %v1109 = vpop.f32.mrf.mxu0
        %1110 = vdwg.mxu0
        %1111 = vrot.lane.b32.xlu0 %v699, 120
        %v1112 = vpop.permute.xlu0 %1111
        %1113 = vrot.lane.b32.xlu0 %v612, 120
        %v1114 = vpop.permute.xlu0 %1113
        %v1115 = vsel %vm712, %v1112, 0
        %v1117 = vsel %vm712, %v1114, 0
        %1119 = vmatprep.subr.mxu0 0.0
        %1120 = vmatpush1.xpose.msra.mxu0 0.0
        %1121 = vmatprep.subr.mxu0 0.0
        %1122 = vmatpush1.xpose.msra.mxu0 0.0
        %1123 = vmatprep.subr.mxu0 0.0
        %1124 = vmatpush1.xpose.msra.mxu0 0.0
        %1125 = vmatprep.subr.mxu0 0.0
        %1126 = vmatpush1.xpose.msra.mxu0 0.0
        %1127 = vmatprep.subr.mxu0 0.0
        %1128 = vmatpush1.xpose.msra.mxu0 0.0
        %1129 = vmatprep.subr.mxu0 0.0
        %1130 = vmatpush1.xpose.msra.mxu0 0.0
        %1131 = vmatprep.subr.mxu0 0.0
        %1132 = vmatpush1.xpose.msra.mxu0 0.0
        %1133 = vmatprep.subr.mxu0 0.0
        %1134 = vmatpush1.xpose.msra.mxu0 0.0
        %1135 = vmatprep.subr.mxu0 0.0
        %1136 = vmatpush1.xpose.msra.mxu0 0.0
        %1137 = vmatprep.subr.mxu0 0.0
        %1138 = vmatpush1.xpose.msra.mxu0 0.0
        %1139 = vmatprep.subr.mxu0 0.0
        %1140 = vmatpush1.xpose.msra.mxu0 0.0
        %1141 = vmatprep.subr.mxu0 0.0
        %1142 = vmatpush1.xpose.msra.mxu0 0.0
        %1143 = vmatprep.subr.mxu0 0.0
        %1144 = vmatpush1.xpose.msra.mxu0 0.0
        %1145 = vmatprep.subr.mxu0 0.0
        %1146 = vmatpush1.xpose.msra.mxu0 0.0
        %1147 = vmatprep.subr.mxu0 0.0
        %1148 = vmatpush1.xpose.msra.mxu0 0.0
        %1149 = vmatprep.subr.mxu0 0.0
        %1150 = vmatpush1.xpose.msra.mxu0 %v1117
        %1151 = vmatprep.subr.mxu0 0.0
        %1152 = vmatpush2.xpose.msra.mxu0 0.0
        %1153 = vmatprep.subr.mxu0 0.0
        %1154 = vmatpush2.xpose.msra.mxu0 0.0
        %1155 = vmatprep.subr.mxu0 0.0
        %1156 = vmatpush2.xpose.msra.mxu0 0.0
        %1157 = vmatprep.subr.mxu0 0.0
        %1158 = vmatpush2.xpose.msra.mxu0 0.0
        %1159 = vmatprep.subr.mxu0 0.0
        %1160 = vmatpush2.xpose.msra.mxu0 0.0
        %1161 = vmatprep.subr.mxu0 0.0
        %1162 = vmatpush2.xpose.msra.mxu0 0.0
        %1163 = vmatprep.subr.mxu0 0.0
        %1164 = vmatpush2.xpose.msra.mxu0 0.0
        %1165 = vmatprep.subr.mxu0 0.0
        %1166 = vmatpush2.xpose.msra.mxu0 0.0
        %1167 = vmatprep.subr.mxu0 0.0
        %1168 = vmatpush2.xpose.msra.mxu0 0.0
        %1169 = vmatprep.subr.mxu0 0.0
        %1170 = vmatpush2.xpose.msra.mxu0 0.0
        %1171 = vmatprep.subr.mxu0 0.0
        %1172 = vmatpush2.xpose.msra.mxu0 0.0
        %1173 = vmatprep.subr.mxu0 0.0
        %1174 = vmatpush2.xpose.msra.mxu0 0.0
        %1175 = vmatprep.subr.mxu0 0.0
        %1176 = vmatpush2.xpose.msra.mxu0 0.0
        %1177 = vmatprep.subr.mxu0 0.0
        %1178 = vmatpush2.xpose.msra.mxu0 0.0
        %1179 = vmatprep.subr.mxu0 0.0
        %1180 = vmatpush2.xpose.msra.mxu0 0.0
        %1181 = vmatprep.subr.mxu0 0.0
        %1182 = vmatpush2.xpose.msra.mxu0 0.0
        %1183 = vmatprep.mubr.f32.mxu0 0.0
        %1184 = vmatmul.mubr.f32.gmra.mxu0 %v1115
        %v1185 = vpop.f32.mrf.mxu0
        %v1186 = vadd.f32 %v709, %v1185
        %v1187 = vpop.f32.mrf.mxu0
        %1188 = vdwg.mxu0
        %v1189 = vsel %vm712, %v1108, -inf
        %1190 = vmax.xlane.f32.xlu0 %v1189
        %v1191 = vpop.xlane.xlu0 %1190
        %v1192 = vsel %vm712, %v1186, -inf
        %1193 = vmax.xlane.f32.xlu0 %v1192
        %v1194 = vpop.xlane.xlu0 %1193
        %v1195 = vsub.f32 %v1108, %v1191
        %v1196 = vsub.f32 %v1186, %v1194
        %v1197 = vmul.f32 %v1195, 1.442695
        %v1198 = vpow.pop %v1197
        %v1199 = vmul.f32 %v1196, 1.442695
        %v1200 = vpow.pop %v1199
        %v1201 = vsel %vm712, %v1198, 0.0
        %1202 = vadd.xlane.f32.xlu0 %v1201
        %v1203 = vpop.xlane.xlu0 %1202
        %v1204 = vsel %vm712, %v1200, 0.0
        %1205 = vadd.xlane.f32.xlu0 %v1204
        %v1206 = vpop.xlane.xlu0 %1205
        %v1207 = vrcp.pop %v1203
        %v1208 = vrcp.pop %v1206
        %v1209 = vmul.f32 %v1198, %v1207
        %v1210 = vmul.f32 %v1200, %v1208
        %1212 = vrot.lane.b32.xlu0 %v688, 120
        %v1213 = vpop.permute.xlu0 %1212
        %v1216 = vsel %vm712, %v1209, 0
        %1218 = vmatprep.subr.mxu0 0.0
        %1219 = vmatpush1.msra.mxu0 0.0
        %1220 = vmatprep.subr.mxu0 0.0
        %1221 = vmatpush1.msra.mxu0 0.0
        %1222 = vmatprep.subr.mxu0 0.0
        %1223 = vmatpush1.msra.mxu0 0.0
        %1224 = vmatprep.subr.mxu0 0.0
        %1225 = vmatpush1.msra.mxu0 0.0
        %1226 = vmatprep.subr.mxu0 0.0
        %1227 = vmatpush1.msra.mxu0 0.0
        %1228 = vmatprep.subr.mxu0 0.0
        %1229 = vmatpush1.msra.mxu0 0.0
        %1230 = vmatprep.subr.mxu0 0.0
        %1231 = vmatpush1.msra.mxu0 0.0
        %1232 = vmatprep.subr.mxu0 0.0
        %1233 = vmatpush1.msra.mxu0 0.0
        %1234 = vmatprep.subr.mxu0 0.0
        %1235 = vmatpush1.msra.mxu0 0.0
        %1236 = vmatprep.subr.mxu0 0.0
        %1237 = vmatpush1.msra.mxu0 0.0
        %1238 = vmatprep.subr.mxu0 0.0
        %1239 = vmatpush1.msra.mxu0 0.0
        %1240 = vmatprep.subr.mxu0 0.0
        %1241 = vmatpush1.msra.mxu0 0.0
        %1242 = vmatprep.subr.mxu0 0.0
        %1243 = vmatpush1.msra.mxu0 0.0
        %1244 = vmatprep.subr.mxu0 0.0
        %1245 = vmatpush1.msra.mxu0 0.0
        %1246 = vmatprep.subr.mxu0 0.0
        %1247 = vmatpush1.msra.mxu0 0.0
        %1248 = vmatprep.subr.mxu0 0.0
        %1249 = vmatpush1.msra.mxu0 %v1213
        %1250 = vmatprep.subr.mxu0 0.0
        %1251 = vmatpush2.msra.mxu0 0.0
        %1252 = vmatprep.subr.mxu0 0.0
        %1253 = vmatpush2.msra.mxu0 0.0
        %1254 = vmatprep.subr.mxu0 0.0
        %1255 = vmatpush2.msra.mxu0 0.0
        %1256 = vmatprep.subr.mxu0 0.0
        %1257 = vmatpush2.msra.mxu0 0.0
        %1258 = vmatprep.subr.mxu0 0.0
        %1259 = vmatpush2.msra.mxu0 0.0
        %1260 = vmatprep.subr.mxu0 0.0
        %1261 = vmatpush2.msra.mxu0 0.0
        %1262 = vmatprep.subr.mxu0 0.0
        %1263 = vmatpush2.msra.mxu0 0.0
        %1264 = vmatprep.subr.mxu0 0.0
        %1265 = vmatpush2.msra.mxu0 0.0
        %1266 = vmatprep.subr.mxu0 0.0
        %1267 = vmatpush2.msra.mxu0 0.0
        %1268 = vmatprep.subr.mxu0 0.0
        %1269 = vmatpush2.msra.mxu0 0.0
        %1270 = vmatprep.subr.mxu0 0.0
        %1271 = vmatpush2.msra.mxu0 0.0
        %1272 = vmatprep.subr.mxu0 0.0
        %1273 = vmatpush2.msra.mxu0 0.0
        %1274 = vmatprep.subr.mxu0 0.0
        %1275 = vmatpush2.msra.mxu0 0.0
        %1276 = vmatprep.subr.mxu0 0.0
        %1277 = vmatpush2.msra.mxu0 0.0
        %1278 = vmatprep.subr.mxu0 0.0
        %1279 = vmatpush2.msra.mxu0 0.0
        %1280 = vmatprep.subr.mxu0 0.0
        %1281 = vmatpush2.msra.mxu0 0.0
        %1282 = vmatprep.mubr.f32.mxu0 0.0
        %1283 = vmatmul.mubr.f32.gmra.mxu0 %v1216
        %v1284 = vpop.f32.mrf.mxu0
        %v1285 = vadd.f32 0.0, %v1284
        %v1286 = vpop.f32.mrf.mxu0
        %1287 = vdwg.mxu0
        %1289 = vrot.lane.b32.xlu0 %v693, 120
        %v1290 = vpop.permute.xlu0 %1289
        %v1293 = vsel %vm712, %v1210, 0
        %1295 = vmatprep.subr.mxu0 0.0
        %1296 = vmatpush1.msra.mxu0 0.0
        %1297 = vmatprep.subr.mxu0 0.0
        %1298 = vmatpush1.msra.mxu0 0.0
        %1299 = vmatprep.subr.mxu0 0.0
        %1300 = vmatpush1.msra.mxu0 0.0
        %1301 = vmatprep.subr.mxu0 0.0
        %1302 = vmatpush1.msra.mxu0 0.0
        %1303 = vmatprep.subr.mxu0 0.0
        %1304 = vmatpush1.msra.mxu0 0.0
        %1305 = vmatprep.subr.mxu0 0.0
        %1306 = vmatpush1.msra.mxu0 0.0
        %1307 = vmatprep.subr.mxu0 0.0
        %1308 = vmatpush1.msra.mxu0 0.0
        %1309 = vmatprep.subr.mxu0 0.0
        %1310 = vmatpush1.msra.mxu0 0.0
        %1311 = vmatprep.subr.mxu0 0.0
        %1312 = vmatpush1.msra.mxu0 0.0
        %1313 = vmatprep.subr.mxu0 0.0
        %1314 = vmatpush1.msra.mxu0 0.0
        %1315 = vmatprep.subr.mxu0 0.0
        %1316 = vmatpush1.msra.mxu0 0.0
        %1317 = vmatprep.subr.mxu0 0.0
        %1318 = vmatpush1.msra.mxu0 0.0
        %1319 = vmatprep.subr.mxu0 0.0
        %1320 = vmatpush1.msra.mxu0 0.0
        %1321 = vmatprep.subr.mxu0 0.0
        %1322 = vmatpush1.msra.mxu0 0.0
        %1323 = vmatprep.subr.mxu0 0.0
        %1324 = vmatpush1.msra.mxu0 0.0
        %1325 = vmatprep.subr.mxu0 0.0
        %1326 = vmatpush1.msra.mxu0 %v1290
        %1327 = vmatprep.subr.mxu0 0.0
        %1328 = vmatpush2.msra.mxu0 0.0
        %1329 = vmatprep.subr.mxu0 0.0
        %1330 = vmatpush2.msra.mxu0 0.0
        %1331 = vmatprep.subr.mxu0 0.0
        %1332 = vmatpush2.msra.mxu0 0.0
        %1333 = vmatprep.subr.mxu0 0.0
        %1334 = vmatpush2.msra.mxu0 0.0
        %1335 = vmatprep.subr.mxu0 0.0
        %1336 = vmatpush2.msra.mxu0 0.0
        %1337 = vmatprep.subr.mxu0 0.0
        %1338 = vmatpush2.msra.mxu0 0.0
        %1339 = vmatprep.subr.mxu0 0.0
        %1340 = vmatpush2.msra.mxu0 0.0
        %1341 = vmatprep.subr.mxu0 0.0
        %1342 = vmatpush2.msra.mxu0 0.0
        %1343 = vmatprep.subr.mxu0 0.0
        %1344 = vmatpush2.msra.mxu0 0.0
        %1345 = vmatprep.subr.mxu0 0.0
        %1346 = vmatpush2.msra.mxu0 0.0
        %1347 = vmatprep.subr.mxu0 0.0
        %1348 = vmatpush2.msra.mxu0 0.0
        %1349 = vmatprep.subr.mxu0 0.0
        %1350 = vmatpush2.msra.mxu0 0.0
        %1351 = vmatprep.subr.mxu0 0.0
        %1352 = vmatpush2.msra.mxu0 0.0
        %1353 = vmatprep.subr.mxu0 0.0
        %1354 = vmatpush2.msra.mxu0 0.0
        %1355 = vmatprep.subr.mxu0 0.0
        %1356 = vmatpush2.msra.mxu0 0.0
        %1357 = vmatprep.subr.mxu0 0.0
        %1358 = vmatpush2.msra.mxu0 0.0
        %1359 = vmatprep.mubr.f32.mxu0 0.0
        %1360 = vmatmul.mubr.f32.gmra.mxu0 %v1293
        %v1361 = vpop.f32.mrf.mxu0
        %v1362 = vadd.f32 0.0, %v1361
        %v1363 = vpop.f32.mrf.mxu0
        %1364 = vdwg.mxu0
        %v1366 = vsel %vm712, %v1285, 0
        %v1369 = vsel %vm712, %v1362, 0
        %1371 = vmatprep.subr.mxu0 0.0
        %1372 = vmatpush1.msra.mxu0 0.0
        %1373 = vmatprep.subr.mxu0 0.0
        %1374 = vmatpush1.msra.mxu0 0.0
        %1375 = vmatprep.subr.mxu0 0.0
        %1376 = vmatpush1.msra.mxu0 0.0
        %1377 = vmatprep.subr.mxu0 0.0
        %1378 = vmatpush1.msra.mxu0 0.0
        %1379 = vmatprep.subr.mxu0 0.0
        %1380 = vmatpush1.msra.mxu0 0.0
        %1381 = vmatprep.subr.mxu0 0.0
        %1382 = vmatpush1.msra.mxu0 0.0
        %1383 = vmatprep.subr.mxu0 0.0
        %1384 = vmatpush1.msra.mxu0 0.0
        %1385 = vmatprep.subr.mxu0 0.0
        %1386 = vmatpush1.msra.mxu0 0.0
        %1387 = vmatprep.subr.mxu0 0.0
        %1388 = vmatpush1.msra.mxu0 0.0
        %1389 = vmatprep.subr.mxu0 0.0
        %1390 = vmatpush1.msra.mxu0 0.0
        %1391 = vmatprep.subr.mxu0 0.0
        %1392 = vmatpush1.msra.mxu0 0.0
        %1393 = vmatprep.subr.mxu0 0.0
        %1394 = vmatpush1.msra.mxu0 0.0
        %1395 = vmatprep.subr.mxu0 0.0
        %1396 = vmatpush1.msra.mxu0 0.0
        %1397 = vmatprep.subr.mxu0 0.0
        %1398 = vmatpush1.msra.mxu0 0.0
        %1399 = vmatprep.subr.mxu0 0.0
        %1400 = vmatpush1.msra.mxu0 0.0
        %1401 = vmatprep.subr.mxu0 0.0
        %1402 = vmatpush1.msra.mxu0 %v434
        %1403 = vmatprep.subr.mxu0 0.0
        %1404 = vmatpush2.msra.mxu0 0.0
        %1405 = vmatprep.subr.mxu0 0.0
        %1406 = vmatpush2.msra.mxu0 0.0
        %1407 = vmatprep.subr.mxu0 0.0
        %1408 = vmatpush2.msra.mxu0 0.0
        %1409 = vmatprep.subr.mxu0 0.0
        %1410 = vmatpush2.msra.mxu0 0.0
        %1411 = vmatprep.subr.mxu0 0.0
        %1412 = vmatpush2.msra.mxu0 0.0
        %1413 = vmatprep.subr.mxu0 0.0
        %1414 = vmatpush2.msra.mxu0 0.0
        %1415 = vmatprep.subr.mxu0 0.0
        %1416 = vmatpush2.msra.mxu0 0.0
        %1417 = vmatprep.subr.mxu0 0.0
        %1418 = vmatpush2.msra.mxu0 0.0
        %1419 = vmatprep.subr.mxu0 0.0
        %1420 = vmatpush2.msra.mxu0 0.0
        %1421 = vmatprep.subr.mxu0 0.0
        %1422 = vmatpush2.msra.mxu0 0.0
        %1423 = vmatprep.subr.mxu0 0.0
        %1424 = vmatpush2.msra.mxu0 0.0
        %1425 = vmatprep.subr.mxu0 0.0
        %1426 = vmatpush2.msra.mxu0 0.0
        %1427 = vmatprep.subr.mxu0 0.0
        %1428 = vmatpush2.msra.mxu0 0.0
        %1429 = vmatprep.subr.mxu0 0.0
        %1430 = vmatpush2.msra.mxu0 0.0
        %1431 = vmatprep.subr.mxu0 0.0
        %1432 = vmatpush2.msra.mxu0 0.0
        %1433 = vmatprep.subr.mxu0 0.0
        %1434 = vmatpush2.msra.mxu0 0.0
        %1435 = vmatprep.mubr.f32.mxu0 0.0
        %1436 = vmatmul.mubr.f32.gmra.mxu0 %v1366
        %v1437 = vpop.f32.mrf.mxu0
        %v1438 = vadd.f32 0.0, %v1437
        %v1439 = vpop.f32.mrf.mxu0
        %1440 = vmatprep.mubr.f32.mxu0 0.0
        %1441 = vmatmul.mubr.f32.gmra.mxu0 %v1369
        %v1442 = vpop.f32.mrf.mxu0
        %v1443 = vadd.f32 0.0, %v1442
        %v1444 = vpop.f32.mrf.mxu0
        %1445 = vdwg.mxu0
        %v1447 = vsel %vm712, %v957, 0
        %v1450 = vsel %vm712, %v1030, 0
        %1452 = vmatprep.subr.mxu0 0.0
        %1453 = vmatpush1.msra.mxu0 0.0
        %1454 = vmatprep.subr.mxu0 0.0
        %1455 = vmatpush1.msra.mxu0 0.0
        %1456 = vmatprep.subr.mxu0 0.0
        %1457 = vmatpush1.msra.mxu0 0.0
        %1458 = vmatprep.subr.mxu0 0.0
        %1459 = vmatpush1.msra.mxu0 0.0
        %1460 = vmatprep.subr.mxu0 0.0
        %1461 = vmatpush1.msra.mxu0 0.0
        %1462 = vmatprep.subr.mxu0 0.0
        %1463 = vmatpush1.msra.mxu0 0.0
        %1464 = vmatprep.subr.mxu0 0.0
        %1465 = vmatpush1.msra.mxu0 0.0
        %1466 = vmatprep.subr.mxu0 0.0
        %1467 = vmatpush1.msra.mxu0 0.0
        %1468 = vmatprep.subr.mxu0 0.0
        %1469 = vmatpush1.msra.mxu0 0.0
        %1470 = vmatprep.subr.mxu0 0.0
        %1471 = vmatpush1.msra.mxu0 0.0
        %1472 = vmatprep.subr.mxu0 0.0
        %1473 = vmatpush1.msra.mxu0 0.0
        %1474 = vmatprep.subr.mxu0 0.0
        %1475 = vmatpush1.msra.mxu0 0.0
        %1476 = vmatprep.subr.mxu0 0.0
        %1477 = vmatpush1.msra.mxu0 0.0
        %1478 = vmatprep.subr.mxu0 0.0
        %1479 = vmatpush1.msra.mxu0 0.0
        %1480 = vmatprep.subr.mxu0 0.0
        %1481 = vmatpush1.msra.mxu0 0.0
        %1482 = vmatprep.subr.mxu0 0.0
        %1483 = vmatpush1.msra.mxu0 %v433
        %1484 = vmatprep.subr.mxu0 0.0
        %1485 = vmatpush2.msra.mxu0 0.0
        %1486 = vmatprep.subr.mxu0 0.0
        %1487 = vmatpush2.msra.mxu0 0.0
        %1488 = vmatprep.subr.mxu0 0.0
        %1489 = vmatpush2.msra.mxu0 0.0
        %1490 = vmatprep.subr.mxu0 0.0
        %1491 = vmatpush2.msra.mxu0 0.0
        %1492 = vmatprep.subr.mxu0 0.0
        %1493 = vmatpush2.msra.mxu0 0.0
        %1494 = vmatprep.subr.mxu0 0.0
        %1495 = vmatpush2.msra.mxu0 0.0
        %1496 = vmatprep.subr.mxu0 0.0
        %1497 = vmatpush2.msra.mxu0 0.0
        %1498 = vmatprep.subr.mxu0 0.0
        %1499 = vmatpush2.msra.mxu0 0.0
        %1500 = vmatprep.subr.mxu0 0.0
        %1501 = vmatpush2.msra.mxu0 0.0
        %1502 = vmatprep.subr.mxu0 0.0
        %1503 = vmatpush2.msra.mxu0 0.0
        %1504 = vmatprep.subr.mxu0 0.0
        %1505 = vmatpush2.msra.mxu0 0.0
        %1506 = vmatprep.subr.mxu0 0.0
        %1507 = vmatpush2.msra.mxu0 0.0
        %1508 = vmatprep.subr.mxu0 0.0
        %1509 = vmatpush2.msra.mxu0 0.0
        %1510 = vmatprep.subr.mxu0 0.0
        %1511 = vmatpush2.msra.mxu0 0.0
        %1512 = vmatprep.subr.mxu0 0.0
        %1513 = vmatpush2.msra.mxu0 0.0
        %1514 = vmatprep.subr.mxu0 0.0
        %1515 = vmatpush2.msra.mxu0 0.0
        %1516 = vmatprep.mubr.f32.mxu0 0.0
        %1517 = vmatmul.mubr.f32.gmra.mxu0 %v1447
        %v1518 = vpop.f32.mrf.mxu0
        %v1519 = vadd.f32 %v1438, %v1518
        %v1520 = vpop.f32.mrf.mxu0
        %1521 = vmatprep.mubr.f32.mxu0 0.0
        %1522 = vmatmul.mubr.f32.gmra.mxu0 %v1450
        %v1523 = vpop.f32.mrf.mxu0
        %v1524 = vadd.f32 %v1443, %v1523
        %v1525 = vpop.f32.mrf.mxu0
        %1526 = vdwg.mxu0
        %1527 = vrot.lane.b32.xlu0 %v698, 112
        %v1528 = vpop.permute.xlu0 %1527
        %1529 = vrot.lane.b32.xlu0 %v607, 112
        %v1530 = vpop.permute.xlu0 %1529
        %v1531 = vsel %vm712, %v1528, 0
        %v1533 = vsel %vm712, %v1530, 0
        %1535 = vmatprep.subr.mxu0 0.0
        %1536 = vmatpush1.xpose.msra.mxu0 0.0
        %1537 = vmatprep.subr.mxu0 0.0
        %1538 = vmatpush1.xpose.msra.mxu0 0.0
        %1539 = vmatprep.subr.mxu0 0.0
        %1540 = vmatpush1.xpose.msra.mxu0 0.0
        %1541 = vmatprep.subr.mxu0 0.0
        %1542 = vmatpush1.xpose.msra.mxu0 0.0
        %1543 = vmatprep.subr.mxu0 0.0
        %1544 = vmatpush1.xpose.msra.mxu0 0.0
        %1545 = vmatprep.subr.mxu0 0.0
        %1546 = vmatpush1.xpose.msra.mxu0 0.0
        %1547 = vmatprep.subr.mxu0 0.0
        %1548 = vmatpush1.xpose.msra.mxu0 0.0
        %1549 = vmatprep.subr.mxu0 0.0
        %1550 = vmatpush1.xpose.msra.mxu0 0.0
        %1551 = vmatprep.subr.mxu0 0.0
        %1552 = vmatpush1.xpose.msra.mxu0 0.0
        %1553 = vmatprep.subr.mxu0 0.0
        %1554 = vmatpush1.xpose.msra.mxu0 0.0
        %1555 = vmatprep.subr.mxu0 0.0
        %1556 = vmatpush1.xpose.msra.mxu0 0.0
        %1557 = vmatprep.subr.mxu0 0.0
        %1558 = vmatpush1.xpose.msra.mxu0 0.0
        %1559 = vmatprep.subr.mxu0 0.0
        %1560 = vmatpush1.xpose.msra.mxu0 0.0
        %1561 = vmatprep.subr.mxu0 0.0
        %1562 = vmatpush1.xpose.msra.mxu0 0.0
        %1563 = vmatprep.subr.mxu0 0.0
        %1564 = vmatpush1.xpose.msra.mxu0 0.0
        %1565 = vmatprep.subr.mxu0 0.0
        %1566 = vmatpush1.xpose.msra.mxu0 %v1533
        %1567 = vmatprep.subr.mxu0 0.0
        %1568 = vmatpush2.xpose.msra.mxu0 0.0
        %1569 = vmatprep.subr.mxu0 0.0
        %1570 = vmatpush2.xpose.msra.mxu0 0.0
        %1571 = vmatprep.subr.mxu0 0.0
        %1572 = vmatpush2.xpose.msra.mxu0 0.0
        %1573 = vmatprep.subr.mxu0 0.0
        %1574 = vmatpush2.xpose.msra.mxu0 0.0
        %1575 = vmatprep.subr.mxu0 0.0
        %1576 = vmatpush2.xpose.msra.mxu0 0.0
        %1577 = vmatprep.subr.mxu0 0.0
        %1578 = vmatpush2.xpose.msra.mxu0 0.0
        %1579 = vmatprep.subr.mxu0 0.0
        %1580 = vmatpush2.xpose.msra.mxu0 0.0
        %1581 = vmatprep.subr.mxu0 0.0
        %1582 = vmatpush2.xpose.msra.mxu0 0.0
        %1583 = vmatprep.subr.mxu0 0.0
        %1584 = vmatpush2.xpose.msra.mxu0 0.0
        %1585 = vmatprep.subr.mxu0 0.0
        %1586 = vmatpush2.xpose.msra.mxu0 0.0
        %1587 = vmatprep.subr.mxu0 0.0
        %1588 = vmatpush2.xpose.msra.mxu0 0.0
        %1589 = vmatprep.subr.mxu0 0.0
        %1590 = vmatpush2.xpose.msra.mxu0 0.0
        %1591 = vmatprep.subr.mxu0 0.0
        %1592 = vmatpush2.xpose.msra.mxu0 0.0
        %1593 = vmatprep.subr.mxu0 0.0
        %1594 = vmatpush2.xpose.msra.mxu0 0.0
        %1595 = vmatprep.subr.mxu0 0.0
        %1596 = vmatpush2.xpose.msra.mxu0 0.0
        %1597 = vmatprep.subr.mxu0 0.0
        %1598 = vmatpush2.xpose.msra.mxu0 0.0
        %1599 = vmatprep.mubr.f32.mxu0 0.0
        %1600 = vmatmul.mubr.f32.gmra.mxu0 %v1531
        %v1601 = vpop.f32.mrf.mxu0
        %v1602 = vadd.f32 %v705, %v1601
        %v1603 = vpop.f32.mrf.mxu0
        %1604 = vdwg.mxu0
        %1605 = vrot.lane.b32.xlu0 %v699, 112
        %v1606 = vpop.permute.xlu0 %1605
        %1607 = vrot.lane.b32.xlu0 %v612, 112
        %v1608 = vpop.permute.xlu0 %1607
        %v1609 = vsel %vm712, %v1606, 0
        %v1611 = vsel %vm712, %v1608, 0
        %1613 = vmatprep.subr.mxu0 0.0
        %1614 = vmatpush1.xpose.msra.mxu0 0.0
        %1615 = vmatprep.subr.mxu0 0.0
        %1616 = vmatpush1.xpose.msra.mxu0 0.0
        %1617 = vmatprep.subr.mxu0 0.0
        %1618 = vmatpush1.xpose.msra.mxu0 0.0
        %1619 = vmatprep.subr.mxu0 0.0
        %1620 = vmatpush1.xpose.msra.mxu0 0.0
        %1621 = vmatprep.subr.mxu0 0.0
        %1622 = vmatpush1.xpose.msra.mxu0 0.0
        %1623 = vmatprep.subr.mxu0 0.0
        %1624 = vmatpush1.xpose.msra.mxu0 0.0
        %1625 = vmatprep.subr.mxu0 0.0
        %1626 = vmatpush1.xpose.msra.mxu0 0.0
        %1627 = vmatprep.subr.mxu0 0.0
        %1628 = vmatpush1.xpose.msra.mxu0 0.0
        %1629 = vmatprep.subr.mxu0 0.0
        %1630 = vmatpush1.xpose.msra.mxu0 0.0
        %1631 = vmatprep.subr.mxu0 0.0
        %1632 = vmatpush1.xpose.msra.mxu0 0.0
        %1633 = vmatprep.subr.mxu0 0.0
        %1634 = vmatpush1.xpose.msra.mxu0 0.0
        %1635 = vmatprep.subr.mxu0 0.0
        %1636 = vmatpush1.xpose.msra.mxu0 0.0
        %1637 = vmatprep.subr.mxu0 0.0
        %1638 = vmatpush1.xpose.msra.mxu0 0.0
        %1639 = vmatprep.subr.mxu0 0.0
        %1640 = vmatpush1.xpose.msra.mxu0 0.0
        %1641 = vmatprep.subr.mxu0 0.0
        %1642 = vmatpush1.xpose.msra.mxu0 0.0
        %1643 = vmatprep.subr.mxu0 0.0
        %1644 = vmatpush1.xpose.msra.mxu0 %v1611
        %1645 = vmatprep.subr.mxu0 0.0
        %1646 = vmatpush2.xpose.msra.mxu0 0.0
        %1647 = vmatprep.subr.mxu0 0.0
        %1648 = vmatpush2.xpose.msra.mxu0 0.0
        %1649 = vmatprep.subr.mxu0 0.0
        %1650 = vmatpush2.xpose.msra.mxu0 0.0
        %1651 = vmatprep.subr.mxu0 0.0
        %1652 = vmatpush2.xpose.msra.mxu0 0.0
        %1653 = vmatprep.subr.mxu0 0.0
        %1654 = vmatpush2.xpose.msra.mxu0 0.0
        %1655 = vmatprep.subr.mxu0 0.0
        %1656 = vmatpush2.xpose.msra.mxu0 0.0
        %1657 = vmatprep.subr.mxu0 0.0
        %1658 = vmatpush2.xpose.msra.mxu0 0.0
        %1659 = vmatprep.subr.mxu0 0.0
        %1660 = vmatpush2.xpose.msra.mxu0 0.0
        %1661 = vmatprep.subr.mxu0 0.0
        %1662 = vmatpush2.xpose.msra.mxu0 0.0
        %1663 = vmatprep.subr.mxu0 0.0
        %1664 = vmatpush2.xpose.msra.mxu0 0.0
        %1665 = vmatprep.subr.mxu0 0.0
        %1666 = vmatpush2.xpose.msra.mxu0 0.0
        %1667 = vmatprep.subr.mxu0 0.0
        %1668 = vmatpush2.xpose.msra.mxu0 0.0
        %1669 = vmatprep.subr.mxu0 0.0
        %1670 = vmatpush2.xpose.msra.mxu0 0.0
        %1671 = vmatprep.subr.mxu0 0.0
        %1672 = vmatpush2.xpose.msra.mxu0 0.0
        %1673 = vmatprep.subr.mxu0 0.0
        %1674 = vmatpush2.xpose.msra.mxu0 0.0
        %1675 = vmatprep.subr.mxu0 0.0
        %1676 = vmatpush2.xpose.msra.mxu0 0.0
        %1677 = vmatprep.mubr.f32.mxu0 0.0
        %1678 = vmatmul.mubr.f32.gmra.mxu0 %v1609
        %v1679 = vpop.f32.mrf.mxu0
        %v1680 = vadd.f32 %v709, %v1679
        %v1681 = vpop.f32.mrf.mxu0
        %1682 = vdwg.mxu0
        %v1683 = vsel %vm712, %v1602, -inf
        %1684 = vmax.xlane.f32.xlu0 %v1683
        %v1685 = vpop.xlane.xlu0 %1684
        %v1686 = vsel %vm712, %v1680, -inf
        %1687 = vmax.xlane.f32.xlu0 %v1686
        %v1688 = vpop.xlane.xlu0 %1687
        %v1689 = vsub.f32 %v1602, %v1685
        %v1690 = vsub.f32 %v1680, %v1688
        %v1691 = vmul.f32 %v1689, 1.442695
        %v1692 = vpow.pop %v1691
        %v1693 = vmul.f32 %v1690, 1.442695
        %v1694 = vpow.pop %v1693
        %v1695 = vsel %vm712, %v1692, 0.0
        %1696 = vadd.xlane.f32.xlu0 %v1695
        %v1697 = vpop.xlane.xlu0 %1696
        %v1698 = vsel %vm712, %v1694, 0.0
        %1699 = vadd.xlane.f32.xlu0 %v1698
        %v1700 = vpop.xlane.xlu0 %1699
        %v1701 = vrcp.pop %v1697
        %v1702 = vrcp.pop %v1700
        %v1703 = vmul.f32 %v1692, %v1701
        %v1704 = vmul.f32 %v1694, %v1702
        %1705 = vrot.lane.b32.xlu0 %v688, 112
        %v1706 = vpop.permute.xlu0 %1705
        %v1709 = vsel %vm712, %v1703, 0
        %1711 = vmatprep.subr.mxu0 0.0
        %1712 = vmatpush1.msra.mxu0 0.0
        %1713 = vmatprep.subr.mxu0 0.0
        %1714 = vmatpush1.msra.mxu0 0.0
        %1715 = vmatprep.subr.mxu0 0.0
        %1716 = vmatpush1.msra.mxu0 0.0
        %1717 = vmatprep.subr.mxu0 0.0
        %1718 = vmatpush1.msra.mxu0 0.0
        %1719 = vmatprep.subr.mxu0 0.0
        %1720 = vmatpush1.msra.mxu0 0.0
        %1721 = vmatprep.subr.mxu0 0.0
        %1722 = vmatpush1.msra.mxu0 0.0
        %1723 = vmatprep.subr.mxu0 0.0
        %1724 = vmatpush1.msra.mxu0 0.0
        %1725 = vmatprep.subr.mxu0 0.0
        %1726 = vmatpush1.msra.mxu0 0.0
        %1727 = vmatprep.subr.mxu0 0.0
        %1728 = vmatpush1.msra.mxu0 0.0
        %1729 = vmatprep.subr.mxu0 0.0
        %1730 = vmatpush1.msra.mxu0 0.0
        %1731 = vmatprep.subr.mxu0 0.0
        %1732 = vmatpush1.msra.mxu0 0.0
        %1733 = vmatprep.subr.mxu0 0.0
        %1734 = vmatpush1.msra.mxu0 0.0
        %1735 = vmatprep.subr.mxu0 0.0
        %1736 = vmatpush1.msra.mxu0 0.0
        %1737 = vmatprep.subr.mxu0 0.0
        %1738 = vmatpush1.msra.mxu0 0.0
        %1739 = vmatprep.subr.mxu0 0.0
        %1740 = vmatpush1.msra.mxu0 0.0
        %1741 = vmatprep.subr.mxu0 0.0
        %1742 = vmatpush1.msra.mxu0 %v1706
        %1743 = vmatprep.subr.mxu0 0.0
        %1744 = vmatpush2.msra.mxu0 0.0
        %1745 = vmatprep.subr.mxu0 0.0
        %1746 = vmatpush2.msra.mxu0 0.0
        %1747 = vmatprep.subr.mxu0 0.0
        %1748 = vmatpush2.msra.mxu0 0.0
        %1749 = vmatprep.subr.mxu0 0.0
        %1750 = vmatpush2.msra.mxu0 0.0
        %1751 = vmatprep.subr.mxu0 0.0
        %1752 = vmatpush2.msra.mxu0 0.0
        %1753 = vmatprep.subr.mxu0 0.0
        %1754 = vmatpush2.msra.mxu0 0.0
        %1755 = vmatprep.subr.mxu0 0.0
        %1756 = vmatpush2.msra.mxu0 0.0
        %1757 = vmatprep.subr.mxu0 0.0
        %1758 = vmatpush2.msra.mxu0 0.0
        %1759 = vmatprep.subr.mxu0 0.0
        %1760 = vmatpush2.msra.mxu0 0.0
        %1761 = vmatprep.subr.mxu0 0.0
        %1762 = vmatpush2.msra.mxu0 0.0
        %1763 = vmatprep.subr.mxu0 0.0
        %1764 = vmatpush2.msra.mxu0 0.0
        %1765 = vmatprep.subr.mxu0 0.0
        %1766 = vmatpush2.msra.mxu0 0.0
        %1767 = vmatprep.subr.mxu0 0.0
        %1768 = vmatpush2.msra.mxu0 0.0
        %1769 = vmatprep.subr.mxu0 0.0
        %1770 = vmatpush2.msra.mxu0 0.0
        %1771 = vmatprep.subr.mxu0 0.0
        %1772 = vmatpush2.msra.mxu0 0.0
        %1773 = vmatprep.subr.mxu0 0.0
        %1774 = vmatpush2.msra.mxu0 0.0
        %1775 = vmatprep.mubr.f32.mxu0 0.0
        %1776 = vmatmul.mubr.f32.gmra.mxu0 %v1709
        %v1777 = vpop.f32.mrf.mxu0
        %v1778 = vadd.f32 0.0, %v1777
        %v1779 = vpop.f32.mrf.mxu0
        %1780 = vdwg.mxu0
        %1781 = vrot.lane.b32.xlu0 %v693, 112
        %v1782 = vpop.permute.xlu0 %1781
        %v1785 = vsel %vm712, %v1704, 0
        %1787 = vmatprep.subr.mxu0 0.0
        %1788 = vmatpush1.msra.mxu0 0.0
        %1789 = vmatprep.subr.mxu0 0.0
        %1790 = vmatpush1.msra.mxu0 0.0
        %1791 = vmatprep.subr.mxu0 0.0
        %1792 = vmatpush1.msra.mxu0 0.0
        %1793 = vmatprep.subr.mxu0 0.0
        %1794 = vmatpush1.msra.mxu0 0.0
        %1795 = vmatprep.subr.mxu0 0.0
        %1796 = vmatpush1.msra.mxu0 0.0
        %1797 = vmatprep.subr.mxu0 0.0
        %1798 = vmatpush1.msra.mxu0 0.0
        %1799 = vmatprep.subr.mxu0 0.0
        %1800 = vmatpush1.msra.mxu0 0.0
        %1801 = vmatprep.subr.mxu0 0.0
        %1802 = vmatpush1.msra.mxu0 0.0
        %1803 = vmatprep.subr.mxu0 0.0
        %1804 = vmatpush1.msra.mxu0 0.0
        %1805 = vmatprep.subr.mxu0 0.0
        %1806 = vmatpush1.msra.mxu0 0.0
        %1807 = vmatprep.subr.mxu0 0.0
        %1808 = vmatpush1.msra.mxu0 0.0
        %1809 = vmatprep.subr.mxu0 0.0
        %1810 = vmatpush1.msra.mxu0 0.0
        %1811 = vmatprep.subr.mxu0 0.0
        %1812 = vmatpush1.msra.mxu0 0.0
        %1813 = vmatprep.subr.mxu0 0.0
        %1814 = vmatpush1.msra.mxu0 0.0
        %1815 = vmatprep.subr.mxu0 0.0
        %1816 = vmatpush1.msra.mxu0 0.0
        %1817 = vmatprep.subr.mxu0 0.0
        %1818 = vmatpush1.msra.mxu0 %v1782
        %1819 = vmatprep.subr.mxu0 0.0
        %1820 = vmatpush2.msra.mxu0 0.0
        %1821 = vmatprep.subr.mxu0 0.0
        %1822 = vmatpush2.msra.mxu0 0.0
        %1823 = vmatprep.subr.mxu0 0.0
        %1824 = vmatpush2.msra.mxu0 0.0
        %1825 = vmatprep.subr.mxu0 0.0
        %1826 = vmatpush2.msra.mxu0 0.0
        %1827 = vmatprep.subr.mxu0 0.0
        %1828 = vmatpush2.msra.mxu0 0.0
        %1829 = vmatprep.subr.mxu0 0.0
        %1830 = vmatpush2.msra.mxu0 0.0
        %1831 = vmatprep.subr.mxu0 0.0
        %1832 = vmatpush2.msra.mxu0 0.0
        %1833 = vmatprep.subr.mxu0 0.0
        %1834 = vmatpush2.msra.mxu0 0.0
        %1835 = vmatprep.subr.mxu0 0.0
        %1836 = vmatpush2.msra.mxu0 0.0
        %1837 = vmatprep.subr.mxu0 0.0
        %1838 = vmatpush2.msra.mxu0 0.0
        %1839 = vmatprep.subr.mxu0 0.0
        %1840 = vmatpush2.msra.mxu0 0.0
        %1841 = vmatprep.subr.mxu0 0.0
        %1842 = vmatpush2.msra.mxu0 0.0
        %1843 = vmatprep.subr.mxu0 0.0
        %1844 = vmatpush2.msra.mxu0 0.0
        %1845 = vmatprep.subr.mxu0 0.0
        %1846 = vmatpush2.msra.mxu0 0.0
        %1847 = vmatprep.subr.mxu0 0.0
        %1848 = vmatpush2.msra.mxu0 0.0
        %1849 = vmatprep.subr.mxu0 0.0
        %1850 = vmatpush2.msra.mxu0 0.0
        %1851 = vmatprep.mubr.f32.mxu0 0.0
        %1852 = vmatmul.mubr.f32.gmra.mxu0 %v1785
        %v1853 = vpop.f32.mrf.mxu0
        %v1854 = vadd.f32 0.0, %v1853
        %v1855 = vpop.f32.mrf.mxu0
        %1856 = vdwg.mxu0
        %v1858 = vsel %vm712, %v1778, 0
        %v1861 = vsel %vm712, %v1854, 0
        %1863 = vmatprep.subr.mxu0 0.0
        %1864 = vmatpush1.msra.mxu0 0.0
        %1865 = vmatprep.subr.mxu0 0.0
        %1866 = vmatpush1.msra.mxu0 0.0
        %1867 = vmatprep.subr.mxu0 0.0
        %1868 = vmatpush1.msra.mxu0 0.0
        %1869 = vmatprep.subr.mxu0 0.0
        %1870 = vmatpush1.msra.mxu0 0.0
        %1871 = vmatprep.subr.mxu0 0.0
        %1872 = vmatpush1.msra.mxu0 0.0
        %1873 = vmatprep.subr.mxu0 0.0
        %1874 = vmatpush1.msra.mxu0 0.0
        %1875 = vmatprep.subr.mxu0 0.0
        %1876 = vmatpush1.msra.mxu0 0.0
        %1877 = vmatprep.subr.mxu0 0.0
        %1878 = vmatpush1.msra.mxu0 0.0
        %1879 = vmatprep.subr.mxu0 0.0
        %1880 = vmatpush1.msra.mxu0 0.0
        %1881 = vmatprep.subr.mxu0 0.0
        %1882 = vmatpush1.msra.mxu0 0.0
        %1883 = vmatprep.subr.mxu0 0.0
        %1884 = vmatpush1.msra.mxu0 0.0
        %1885 = vmatprep.subr.mxu0 0.0
        %1886 = vmatpush1.msra.mxu0 0.0
        %1887 = vmatprep.subr.mxu0 0.0
        %1888 = vmatpush1.msra.mxu0 0.0
        %1889 = vmatprep.subr.mxu0 0.0
        %1890 = vmatpush1.msra.mxu0 0.0
        %1891 = vmatprep.subr.mxu0 0.0
        %1892 = vmatpush1.msra.mxu0 0.0
        %1893 = vmatprep.subr.mxu0 0.0
        %1894 = vmatpush1.msra.mxu0 %v435
        %1895 = vmatprep.subr.mxu0 0.0
        %1896 = vmatpush2.msra.mxu0 0.0
        %1897 = vmatprep.subr.mxu0 0.0
        %1898 = vmatpush2.msra.mxu0 0.0
        %1899 = vmatprep.subr.mxu0 0.0
        %1900 = vmatpush2.msra.mxu0 0.0
        %1901 = vmatprep.subr.mxu0 0.0
        %1902 = vmatpush2.msra.mxu0 0.0
        %1903 = vmatprep.subr.mxu0 0.0
        %1904 = vmatpush2.msra.mxu0 0.0
        %1905 = vmatprep.subr.mxu0 0.0
        %1906 = vmatpush2.msra.mxu0 0.0
        %1907 = vmatprep.subr.mxu0 0.0
        %1908 = vmatpush2.msra.mxu0 0.0
        %1909 = vmatprep.subr.mxu0 0.0
        %1910 = vmatpush2.msra.mxu0 0.0
        %1911 = vmatprep.subr.mxu0 0.0
        %1912 = vmatpush2.msra.mxu0 0.0
        %1913 = vmatprep.subr.mxu0 0.0
        %1914 = vmatpush2.msra.mxu0 0.0
        %1915 = vmatprep.subr.mxu0 0.0
        %1916 = vmatpush2.msra.mxu0 0.0
        %1917 = vmatprep.subr.mxu0 0.0
        %1918 = vmatpush2.msra.mxu0 0.0
        %1919 = vmatprep.subr.mxu0 0.0
        %1920 = vmatpush2.msra.mxu0 0.0
        %1921 = vmatprep.subr.mxu0 0.0
        %1922 = vmatpush2.msra.mxu0 0.0
        %1923 = vmatprep.subr.mxu0 0.0
        %1924 = vmatpush2.msra.mxu0 0.0
        %1925 = vmatprep.subr.mxu0 0.0
        %1926 = vmatpush2.msra.mxu0 0.0
        %1927 = vmatprep.mubr.f32.mxu0 0.0
        %1928 = vmatmul.mubr.f32.gmra.mxu0 %v1858
        %v1929 = vpop.f32.mrf.mxu0
        %v1930 = vadd.f32 0.0, %v1929
        %v1931 = vpop.f32.mrf.mxu0
        %1932 = vmatprep.mubr.f32.mxu0 0.0
        %1933 = vmatmul.mubr.f32.gmra.mxu0 %v1861
        %v1934 = vpop.f32.mrf.mxu0
        %v1935 = vadd.f32 0.0, %v1934
        %v1936 = vpop.f32.mrf.mxu0
        %1937 = vdwg.mxu0
        %v1938 = vadd.f32 %v1519, %v1930
        %v1939 = vadd.f32 %v1524, %v1935
        %1940 = vrot.lane.b32.xlu0 %v698, 104
        %v1941 = vpop.permute.xlu0 %1940
        %1942 = vrot.lane.b32.xlu0 %v607, 104
        %v1943 = vpop.permute.xlu0 %1942
        %v1944 = vsel %vm712, %v1941, 0
        %v1946 = vsel %vm712, %v1943, 0
        %1948 = vmatprep.subr.mxu0 0.0
        %1949 = vmatpush1.xpose.msra.mxu0 0.0
        %1950 = vmatprep.subr.mxu0 0.0
        %1951 = vmatpush1.xpose.msra.mxu0 0.0
        %1952 = vmatprep.subr.mxu0 0.0
        %1953 = vmatpush1.xpose.msra.mxu0 0.0
        %1954 = vmatprep.subr.mxu0 0.0
        %1955 = vmatpush1.xpose.msra.mxu0 0.0
        %1956 = vmatprep.subr.mxu0 0.0
        %1957 = vmatpush1.xpose.msra.mxu0 0.0
        %1958 = vmatprep.subr.mxu0 0.0
        %1959 = vmatpush1.xpose.msra.mxu0 0.0
        %1960 = vmatprep.subr.mxu0 0.0
        %1961 = vmatpush1.xpose.msra.mxu0 0.0
        %1962 = vmatprep.subr.mxu0 0.0
        %1963 = vmatpush1.xpose.msra.mxu0 0.0
        %1964 = vmatprep.subr.mxu0 0.0
        %1965 = vmatpush1.xpose.msra.mxu0 0.0
        %1966 = vmatprep.subr.mxu0 0.0
        %1967 = vmatpush1.xpose.msra.mxu0 0.0
        %1968 = vmatprep.subr.mxu0 0.0
        %1969 = vmatpush1.xpose.msra.mxu0 0.0
        %1970 = vmatprep.subr.mxu0 0.0
        %1971 = vmatpush1.xpose.msra.mxu0 0.0
        %1972 = vmatprep.subr.mxu0 0.0
        %1973 = vmatpush1.xpose.msra.mxu0 0.0
        %1974 = vmatprep.subr.mxu0 0.0
        %1975 = vmatpush1.xpose.msra.mxu0 0.0
        %1976 = vmatprep.subr.mxu0 0.0
        %1977 = vmatpush1.xpose.msra.mxu0 0.0
        %1978 = vmatprep.subr.mxu0 0.0
        %1979 = vmatpush1.xpose.msra.mxu0 %v1946
        %1980 = vmatprep.subr.mxu0 0.0
        %1981 = vmatpush2.xpose.msra.mxu0 0.0
        %1982 = vmatprep.subr.mxu0 0.0
        %1983 = vmatpush2.xpose.msra.mxu0 0.0
        %1984 = vmatprep.subr.mxu0 0.0
        %1985 = vmatpush2.xpose.msra.mxu0 0.0
        %1986 = vmatprep.subr.mxu0 0.0
        %1987 = vmatpush2.xpose.msra.mxu0 0.0
        %1988 = vmatprep.subr.mxu0 0.0
        %1989 = vmatpush2.xpose.msra.mxu0 0.0
        %1990 = vmatprep.subr.mxu0 0.0
        %1991 = vmatpush2.xpose.msra.mxu0 0.0
        %1992 = vmatprep.subr.mxu0 0.0
        %1993 = vmatpush2.xpose.msra.mxu0 0.0
        %1994 = vmatprep.subr.mxu0 0.0
        %1995 = vmatpush2.xpose.msra.mxu0 0.0
        %1996 = vmatprep.subr.mxu0 0.0
        %1997 = vmatpush2.xpose.msra.mxu0 0.0
        %1998 = vmatprep.subr.mxu0 0.0
        %1999 = vmatpush2.xpose.msra.mxu0 0.0
        %2000 = vmatprep.subr.mxu0 0.0
        %2001 = vmatpush2.xpose.msra.mxu0 0.0
        %2002 = vmatprep.subr.mxu0 0.0
        %2003 = vmatpush2.xpose.msra.mxu0 0.0
        %2004 = vmatprep.subr.mxu0 0.0
        %2005 = vmatpush2.xpose.msra.mxu0 0.0
        %2006 = vmatprep.subr.mxu0 0.0
        %2007 = vmatpush2.xpose.msra.mxu0 0.0
        %2008 = vmatprep.subr.mxu0 0.0
        %2009 = vmatpush2.xpose.msra.mxu0 0.0
        %2010 = vmatprep.subr.mxu0 0.0
        %2011 = vmatpush2.xpose.msra.mxu0 0.0
        %2012 = vmatprep.mubr.f32.mxu0 0.0
        %2013 = vmatmul.mubr.f32.gmra.mxu0 %v1944
        %v2014 = vpop.f32.mrf.mxu0
        %v2015 = vadd.f32 %v705, %v2014
        %v2016 = vpop.f32.mrf.mxu0
        %2017 = vdwg.mxu0
        %2018 = vrot.lane.b32.xlu0 %v699, 104
        %v2019 = vpop.permute.xlu0 %2018
        %2020 = vrot.lane.b32.xlu0 %v612, 104
        %v2021 = vpop.permute.xlu0 %2020
        %v2022 = vsel %vm712, %v2019, 0
        %v2024 = vsel %vm712, %v2021, 0
        %2026 = vmatprep.subr.mxu0 0.0
        %2027 = vmatpush1.xpose.msra.mxu0 0.0
        %2028 = vmatprep.subr.mxu0 0.0
        %2029 = vmatpush1.xpose.msra.mxu0 0.0
        %2030 = vmatprep.subr.mxu0 0.0
        %2031 = vmatpush1.xpose.msra.mxu0 0.0
        %2032 = vmatprep.subr.mxu0 0.0
        %2033 = vmatpush1.xpose.msra.mxu0 0.0
        %2034 = vmatprep.subr.mxu0 0.0
        %2035 = vmatpush1.xpose.msra.mxu0 0.0
        %2036 = vmatprep.subr.mxu0 0.0
        %2037 = vmatpush1.xpose.msra.mxu0 0.0
        %2038 = vmatprep.subr.mxu0 0.0
        %2039 = vmatpush1.xpose.msra.mxu0 0.0
        %2040 = vmatprep.subr.mxu0 0.0
        %2041 = vmatpush1.xpose.msra.mxu0 0.0
        %2042 = vmatprep.subr.mxu0 0.0
        %2043 = vmatpush1.xpose.msra.mxu0 0.0
        %2044 = vmatprep.subr.mxu0 0.0
        %2045 = vmatpush1.xpose.msra.mxu0 0.0
        %2046 = vmatprep.subr.mxu0 0.0
        %2047 = vmatpush1.xpose.msra.mxu0 0.0
        %2048 = vmatprep.subr.mxu0 0.0
        %2049 = vmatpush1.xpose.msra.mxu0 0.0
        %2050 = vmatprep.subr.mxu0 0.0
        %2051 = vmatpush1.xpose.msra.mxu0 0.0
        %2052 = vmatprep.subr.mxu0 0.0
        %2053 = vmatpush1.xpose.msra.mxu0 0.0
        %2054 = vmatprep.subr.mxu0 0.0
        %2055 = vmatpush1.xpose.msra.mxu0 0.0
        %2056 = vmatprep.subr.mxu0 0.0
        %2057 = vmatpush1.xpose.msra.mxu0 %v2024
        %2058 = vmatprep.subr.mxu0 0.0
        %2059 = vmatpush2.xpose.msra.mxu0 0.0
        %2060 = vmatprep.subr.mxu0 0.0
        %2061 = vmatpush2.xpose.msra.mxu0 0.0
        %2062 = vmatprep.subr.mxu0 0.0
        %2063 = vmatpush2.xpose.msra.mxu0 0.0
        %2064 = vmatprep.subr.mxu0 0.0
        %2065 = vmatpush2.xpose.msra.mxu0 0.0
        %2066 = vmatprep.subr.mxu0 0.0
        %2067 = vmatpush2.xpose.msra.mxu0 0.0
        %2068 = vmatprep.subr.mxu0 0.0
        %2069 = vmatpush2.xpose.msra.mxu0 0.0
        %2070 = vmatprep.subr.mxu0 0.0
        %2071 = vmatpush2.xpose.msra.mxu0 0.0
        %2072 = vmatprep.subr.mxu0 0.0
        %2073 = vmatpush2.xpose.msra.mxu0 0.0
        %2074 = vmatprep.subr.mxu0 0.0
        %2075 = vmatpush2.xpose.msra.mxu0 0.0
        %2076 = vmatprep.subr.mxu0 0.0
        %2077 = vmatpush2.xpose.msra.mxu0 0.0
        %2078 = vmatprep.subr.mxu0 0.0
        %2079 = vmatpush2.xpose.msra.mxu0 0.0
        %2080 = vmatprep.subr.mxu0 0.0
        %2081 = vmatpush2.xpose.msra.mxu0 0.0
        %2082 = vmatprep.subr.mxu0 0.0
        %2083 = vmatpush2.xpose.msra.mxu0 0.0
        %2084 = vmatprep.subr.mxu0 0.0
        %2085 = vmatpush2.xpose.msra.mxu0 0.0
        %2086 = vmatprep.subr.mxu0 0.0
        %2087 = vmatpush2.xpose.msra.mxu0 0.0
        %2088 = vmatprep.subr.mxu0 0.0
        %2089 = vmatpush2.xpose.msra.mxu0 0.0
        %2090 = vmatprep.mubr.f32.mxu0 0.0
        %2091 = vmatmul.mubr.f32.gmra.mxu0 %v2022
        %v2092 = vpop.f32.mrf.mxu0
        %v2093 = vadd.f32 %v709, %v2092
        %v2094 = vpop.f32.mrf.mxu0
        %2095 = vdwg.mxu0
        %v2096 = vsel %vm712, %v2015, -inf
        %2097 = vmax.xlane.f32.xlu0 %v2096
        %v2098 = vpop.xlane.xlu0 %2097
        %v2099 = vsel %vm712, %v2093, -inf
        %2100 = vmax.xlane.f32.xlu0 %v2099
        %v2101 = vpop.xlane.xlu0 %2100
        %v2102 = vsub.f32 %v2015, %v2098
        %v2103 = vsub.f32 %v2093, %v2101
        %v2104 = vmul.f32 %v2102, 1.442695
        %v2105 = vpow.pop %v2104
        %v2106 = vmul.f32 %v2103, 1.442695
        %v2107 = vpow.pop %v2106
        %v2108 = vsel %vm712, %v2105, 0.0
        %2109 = vadd.xlane.f32.xlu0 %v2108
        %v2110 = vpop.xlane.xlu0 %2109
        %v2111 = vsel %vm712, %v2107, 0.0
        %2112 = vadd.xlane.f32.xlu0 %v2111
        %v2113 = vpop.xlane.xlu0 %2112
        %v2114 = vrcp.pop %v2110
        %v2115 = vrcp.pop %v2113
        %v2116 = vmul.f32 %v2105, %v2114
        %v2117 = vmul.f32 %v2107, %v2115
        %2118 = vrot.lane.b32.xlu0 %v688, 104
        %v2119 = vpop.permute.xlu0 %2118
        %v2122 = vsel %vm712, %v2116, 0
        %2124 = vmatprep.subr.mxu0 0.0
        %2125 = vmatpush1.msra.mxu0 0.0
        %2126 = vmatprep.subr.mxu0 0.0
        %2127 = vmatpush1.msra.mxu0 0.0
        %2128 = vmatprep.subr.mxu0 0.0
        %2129 = vmatpush1.msra.mxu0 0.0
        %2130 = vmatprep.subr.mxu0 0.0
        %2131 = vmatpush1.msra.mxu0 0.0
        %2132 = vmatprep.subr.mxu0 0.0
        %2133 = vmatpush1.msra.mxu0 0.0
        %2134 = vmatprep.subr.mxu0 0.0
        %2135 = vmatpush1.msra.mxu0 0.0
        %2136 = vmatprep.subr.mxu0 0.0
        %2137 = vmatpush1.msra.mxu0 0.0
        %2138 = vmatprep.subr.mxu0 0.0
        %2139 = vmatpush1.msra.mxu0 0.0
        %2140 = vmatprep.subr.mxu0 0.0
        %2141 = vmatpush1.msra.mxu0 0.0
        %2142 = vmatprep.subr.mxu0 0.0
        %2143 = vmatpush1.msra.mxu0 0.0
        %2144 = vmatprep.subr.mxu0 0.0
        %2145 = vmatpush1.msra.mxu0 0.0
        %2146 = vmatprep.subr.mxu0 0.0
        %2147 = vmatpush1.msra.mxu0 0.0
        %2148 = vmatprep.subr.mxu0 0.0
        %2149 = vmatpush1.msra.mxu0 0.0
        %2150 = vmatprep.subr.mxu0 0.0
        %2151 = vmatpush1.msra.mxu0 0.0
        %2152 = vmatprep.subr.mxu0 0.0
        %2153 = vmatpush1.msra.mxu0 0.0
        %2154 = vmatprep.subr.mxu0 0.0
        %2155 = vmatpush1.msra.mxu0 %v2119
        %2156 = vmatprep.subr.mxu0 0.0
        %2157 = vmatpush2.msra.mxu0 0.0
        %2158 = vmatprep.subr.mxu0 0.0
        %2159 = vmatpush2.msra.mxu0 0.0
        %2160 = vmatprep.subr.mxu0 0.0
        %2161 = vmatpush2.msra.mxu0 0.0
        %2162 = vmatprep.subr.mxu0 0.0
        %2163 = vmatpush2.msra.mxu0 0.0
        %2164 = vmatprep.subr.mxu0 0.0
        %2165 = vmatpush2.msra.mxu0 0.0
        %2166 = vmatprep.subr.mxu0 0.0
        %2167 = vmatpush2.msra.mxu0 0.0
        %2168 = vmatprep.subr.mxu0 0.0
        %2169 = vmatpush2.msra.mxu0 0.0
        %2170 = vmatprep.subr.mxu0 0.0
        %2171 = vmatpush2.msra.mxu0 0.0
        %2172 = vmatprep.subr.mxu0 0.0
        %2173 = vmatpush2.msra.mxu0 0.0
        %2174 = vmatprep.subr.mxu0 0.0
        %2175 = vmatpush2.msra.mxu0 0.0
        %2176 = vmatprep.subr.mxu0 0.0
        %2177 = vmatpush2.msra.mxu0 0.0
        %2178 = vmatprep.subr.mxu0 0.0
        %2179 = vmatpush2.msra.mxu0 0.0
        %2180 = vmatprep.subr.mxu0 0.0
        %2181 = vmatpush2.msra.mxu0 0.0
        %2182 = vmatprep.subr.mxu0 0.0
        %2183 = vmatpush2.msra.mxu0 0.0
        %2184 = vmatprep.subr.mxu0 0.0
        %2185 = vmatpush2.msra.mxu0 0.0
        %2186 = vmatprep.subr.mxu0 0.0
        %2187 = vmatpush2.msra.mxu0 0.0
        %2188 = vmatprep.mubr.f32.mxu0 0.0
        %2189 = vmatmul.mubr.f32.gmra.mxu0 %v2122
        %v2190 = vpop.f32.mrf.mxu0
        %v2191 = vadd.f32 0.0, %v2190
        %v2192 = vpop.f32.mrf.mxu0
        %2193 = vdwg.mxu0
        %2194 = vrot.lane.b32.xlu0 %v693, 104
        %v2195 = vpop.permute.xlu0 %2194
        %v2198 = vsel %vm712, %v2117, 0
        %2200 = vmatprep.subr.mxu0 0.0
        %2201 = vmatpush1.msra.mxu0 0.0
        %2202 = vmatprep.subr.mxu0 0.0
        %2203 = vmatpush1.msra.mxu0 0.0
        %2204 = vmatprep.subr.mxu0 0.0
        %2205 = vmatpush1.msra.mxu0 0.0
        %2206 = vmatprep.subr.mxu0 0.0
        %2207 = vmatpush1.msra.mxu0 0.0
        %2208 = vmatprep.subr.mxu0 0.0
        %2209 = vmatpush1.msra.mxu0 0.0
        %2210 = vmatprep.subr.mxu0 0.0
        %2211 = vmatpush1.msra.mxu0 0.0
        %2212 = vmatprep.subr.mxu0 0.0
        %2213 = vmatpush1.msra.mxu0 0.0
        %2214 = vmatprep.subr.mxu0 0.0
        %2215 = vmatpush1.msra.mxu0 0.0
        %2216 = vmatprep.subr.mxu0 0.0
        %2217 = vmatpush1.msra.mxu0 0.0
        %2218 = vmatprep.subr.mxu0 0.0
        %2219 = vmatpush1.msra.mxu0 0.0
        %2220 = vmatprep.subr.mxu0 0.0
        %2221 = vmatpush1.msra.mxu0 0.0
        %2222 = vmatprep.subr.mxu0 0.0
        %2223 = vmatpush1.msra.mxu0 0.0
        %2224 = vmatprep.subr.mxu0 0.0
        %2225 = vmatpush1.msra.mxu0 0.0
        %2226 = vmatprep.subr.mxu0 0.0
        %2227 = vmatpush1.msra.mxu0 0.0
        %2228 = vmatprep.subr.mxu0 0.0
        %2229 = vmatpush1.msra.mxu0 0.0
        %2230 = vmatprep.subr.mxu0 0.0
        %2231 = vmatpush1.msra.mxu0 %v2195
        %2232 = vmatprep.subr.mxu0 0.0
        %2233 = vmatpush2.msra.mxu0 0.0
        %2234 = vmatprep.subr.mxu0 0.0
        %2235 = vmatpush2.msra.mxu0 0.0
        %2236 = vmatprep.subr.mxu0 0.0
        %2237 = vmatpush2.msra.mxu0 0.0
        %2238 = vmatprep.subr.mxu0 0.0
        %2239 = vmatpush2.msra.mxu0 0.0
        %2240 = vmatprep.subr.mxu0 0.0
        %2241 = vmatpush2.msra.mxu0 0.0
        %2242 = vmatprep.subr.mxu0 0.0
        %2243 = vmatpush2.msra.mxu0 0.0
        %2244 = vmatprep.subr.mxu0 0.0
        %2245 = vmatpush2.msra.mxu0 0.0
        %2246 = vmatprep.subr.mxu0 0.0
        %2247 = vmatpush2.msra.mxu0 0.0
        %2248 = vmatprep.subr.mxu0 0.0
        %2249 = vmatpush2.msra.mxu0 0.0
        %2250 = vmatprep.subr.mxu0 0.0
        %2251 = vmatpush2.msra.mxu0 0.0
        %2252 = vmatprep.subr.mxu0 0.0
        %2253 = vmatpush2.msra.mxu0 0.0
        %2254 = vmatprep.subr.mxu0 0.0
        %2255 = vmatpush2.msra.mxu0 0.0
        %2256 = vmatprep.subr.mxu0 0.0
        %2257 = vmatpush2.msra.mxu0 0.0
        %2258 = vmatprep.subr.mxu0 0.0
        %2259 = vmatpush2.msra.mxu0 0.0
        %2260 = vmatprep.subr.mxu0 0.0
        %2261 = vmatpush2.msra.mxu0 0.0
        %2262 = vmatprep.subr.mxu0 0.0
        %2263 = vmatpush2.msra.mxu0 0.0
        %2264 = vmatprep.mubr.f32.mxu0 0.0
        %2265 = vmatmul.mubr.f32.gmra.mxu0 %v2198
        %v2266 = vpop.f32.mrf.mxu0
        %v2267 = vadd.f32 0.0, %v2266
        %v2268 = vpop.f32.mrf.mxu0
        %2269 = vdwg.mxu0
        %v2271 = vsel %vm712, %v2191, 0
        %v2274 = vsel %vm712, %v2267, 0
        %2276 = vmatprep.subr.mxu0 0.0
        %2277 = vmatpush1.msra.mxu0 0.0
        %2278 = vmatprep.subr.mxu0 0.0
        %2279 = vmatpush1.msra.mxu0 0.0
        %2280 = vmatprep.subr.mxu0 0.0
        %2281 = vmatpush1.msra.mxu0 0.0
        %2282 = vmatprep.subr.mxu0 0.0
        %2283 = vmatpush1.msra.mxu0 0.0
        %2284 = vmatprep.subr.mxu0 0.0
        %2285 = vmatpush1.msra.mxu0 0.0
        %2286 = vmatprep.subr.mxu0 0.0
        %2287 = vmatpush1.msra.mxu0 0.0
        %2288 = vmatprep.subr.mxu0 0.0
        %2289 = vmatpush1.msra.mxu0 0.0
        %2290 = vmatprep.subr.mxu0 0.0
        %2291 = vmatpush1.msra.mxu0 0.0
        %2292 = vmatprep.subr.mxu0 0.0
        %2293 = vmatpush1.msra.mxu0 0.0
        %2294 = vmatprep.subr.mxu0 0.0
        %2295 = vmatpush1.msra.mxu0 0.0
        %2296 = vmatprep.subr.mxu0 0.0
        %2297 = vmatpush1.msra.mxu0 0.0
        %2298 = vmatprep.subr.mxu0 0.0
        %2299 = vmatpush1.msra.mxu0 0.0
        %2300 = vmatprep.subr.mxu0 0.0
        %2301 = vmatpush1.msra.mxu0 0.0
        %2302 = vmatprep.subr.mxu0 0.0
        %2303 = vmatpush1.msra.mxu0 0.0
        %2304 = vmatprep.subr.mxu0 0.0
        %2305 = vmatpush1.msra.mxu0 0.0
        %2306 = vmatprep.subr.mxu0 0.0
        %2307 = vmatpush1.msra.mxu0 %v436
        %2308 = vmatprep.subr.mxu0 0.0
        %2309 = vmatpush2.msra.mxu0 0.0
        %2310 = vmatprep.subr.mxu0 0.0
        %2311 = vmatpush2.msra.mxu0 0.0
        %2312 = vmatprep.subr.mxu0 0.0
        %2313 = vmatpush2.msra.mxu0 0.0
        %2314 = vmatprep.subr.mxu0 0.0
        %2315 = vmatpush2.msra.mxu0 0.0
        %2316 = vmatprep.subr.mxu0 0.0
        %2317 = vmatpush2.msra.mxu0 0.0
        %2318 = vmatprep.subr.mxu0 0.0
        %2319 = vmatpush2.msra.mxu0 0.0
        %2320 = vmatprep.subr.mxu0 0.0
        %2321 = vmatpush2.msra.mxu0 0.0
        %2322 = vmatprep.subr.mxu0 0.0
        %2323 = vmatpush2.msra.mxu0 0.0
        %2324 = vmatprep.subr.mxu0 0.0
        %2325 = vmatpush2.msra.mxu0 0.0
        %2326 = vmatprep.subr.mxu0 0.0
        %2327 = vmatpush2.msra.mxu0 0.0
        %2328 = vmatprep.subr.mxu0 0.0
        %2329 = vmatpush2.msra.mxu0 0.0
        %2330 = vmatprep.subr.mxu0 0.0
        %2331 = vmatpush2.msra.mxu0 0.0
        %2332 = vmatprep.subr.mxu0 0.0
        %2333 = vmatpush2.msra.mxu0 0.0
        %2334 = vmatprep.subr.mxu0 0.0
        %2335 = vmatpush2.msra.mxu0 0.0
        %2336 = vmatprep.subr.mxu0 0.0
        %2337 = vmatpush2.msra.mxu0 0.0
        %2338 = vmatprep.subr.mxu0 0.0
        %2339 = vmatpush2.msra.mxu0 0.0
        %2340 = vmatprep.mubr.f32.mxu0 0.0
        %2341 = vmatmul.mubr.f32.gmra.mxu0 %v2271
        %v2342 = vpop.f32.mrf.mxu0
        %v2343 = vadd.f32 0.0, %v2342
        %v2344 = vpop.f32.mrf.mxu0
        %2345 = vmatprep.mubr.f32.mxu0 0.0
        %2346 = vmatmul.mubr.f32.gmra.mxu0 %v2274
        %v2347 = vpop.f32.mrf.mxu0
        %v2348 = vadd.f32 0.0, %v2347
        %v2349 = vpop.f32.mrf.mxu0
        %2350 = vdwg.mxu0
        %v2351 = vadd.f32 %v1938, %v2343
        %v2352 = vadd.f32 %v1939, %v2348
        %v2354 = vlaneseq
        %v2355 = vshrl.u32 %v2354, 7
        %v2356 = vsub.s32 0, %v2355
        %v2357 = vrot.slane %v440, %v2356
        %v2359 = vadd.f32 %v2351, %v2357
        %v2360 = vadd.f32 %v2352, %v2357
        %v2361 = vadd.f32 %v2359, %v419
        %v2362 = vadd.f32 %v2360, %v420
        %v2363 = vsel %vm452, %v2361, 0.0
        %2364 = vadd.xlane.f32.xlu0 %v2363
        %v2365 = vpop.xlane.xlu0 %2364
        %v2366 = vsel %vm452, %v2362, 0.0
        %2367 = vadd.xlane.f32.xlu0 %v2366
        %v2368 = vpop.xlane.xlu0 %2367
        %v2369 = vrcp.pop 32.0
        %v2370 = vmul.f32 %v2365, %v2369
        %v2371 = vmul.f32 %v2368, %v2369
        %v2372 = vsub.f32 %v2361, %v2370
        %v2373 = vsub.f32 %v2362, %v2371
        %v2374 = vmul.f32 %v2372, %v2372
        %v2375 = vmul.f32 %v2373, %v2373
        %v2376 = vsel %vm452, %v2374, 0.0
        %2377 = vadd.xlane.f32.xlu0 %v2376
        %v2378 = vpop.xlane.xlu0 %2377
        %v2379 = vsel %vm452, %v2375, 0.0
        %2380 = vadd.xlane.f32.xlu0 %v2379
        %v2381 = vpop.xlane.xlu0 %2380
        %v2382 = vmul.f32 %v2378, %v2369
        %v2383 = vmul.f32 %v2381, %v2369
        %v2384 = vadd.f32 %v2382, 1e-12
        %v2385 = vadd.f32 %v2383, 1e-12
        %v2386 = vrsqrt.pop %v2384
        %v2387 = vrsqrt.pop %v2385
        %v2388 = vmul.f32 %v2372, %v2386
        %v2389 = vmul.f32 %v2373, %v2387
        %v2391 = vlaneseq
        %v2392 = vshrl.u32 %v2391, 7
        %v2393 = vsub.s32 0, %v2392
        %v2394 = vrot.slane %v441, %v2393
        %v2396 = vmul.f32 %v2388, %v2394
        %v2397 = vmul.f32 %v2389, %v2394
        %v2399 = vlaneseq
        %v2400 = vshrl.u32 %v2399, 7
        %v2401 = vsub.s32 0, %v2400
        %v2402 = vrot.slane %v442, %v2401
        %v2404 = vadd.f32 %v2396, %v2402
        %v2405 = vadd.f32 %v2397, %v2402
        %v2406 = vld [vmem:[%s401] sm:$0xff]
        %v2407 = vld [vmem:[%s401 + $0x8] sm:$0xff]
        %v2408 = vld [vmem:[%s401 + $0x10] sm:$0xff]
        %v2409 = vld [vmem:[%s401 + $0x18] sm:$0xff]
        %v2410 = vld [vmem:[%s404] sm:$0x1]
        %v2412 = vlaneseq
        %v2413 = vshrl.u32 %v2412, 7
        %v2414 = vsub.s32 0, %v2413
        %v2415 = vrot.slane %v2410, %v2414
        %v2418 = vsel %vm452, %v2404, 0
        %v2421 = vsel %vm452, %v2405, 0
        %2423 = vmatprep.subr.mxu0 0.0
        %2424 = vmatpush1.msra.mxu0 0.0
        %2425 = vmatprep.subr.mxu0 0.0
        %2426 = vmatpush1.msra.mxu0 0.0
        %2427 = vmatprep.subr.mxu0 0.0
        %2428 = vmatpush1.msra.mxu0 0.0
        %2429 = vmatprep.subr.mxu0 0.0
        %2430 = vmatpush1.msra.mxu0 0.0
        %2431 = vmatprep.subr.mxu0 0.0
        %2432 = vmatpush1.msra.mxu0 0.0
        %2433 = vmatprep.subr.mxu0 0.0
        %2434 = vmatpush1.msra.mxu0 0.0
        %2435 = vmatprep.subr.mxu0 0.0
        %2436 = vmatpush1.msra.mxu0 0.0
        %2437 = vmatprep.subr.mxu0 0.0
        %2438 = vmatpush1.msra.mxu0 0.0
        %2439 = vmatprep.subr.mxu0 0.0
        %2440 = vmatpush1.msra.mxu0 0.0
        %2441 = vmatprep.subr.mxu0 0.0
        %2442 = vmatpush1.msra.mxu0 0.0
        %2443 = vmatprep.subr.mxu0 0.0
        %2444 = vmatpush1.msra.mxu0 0.0
        %2445 = vmatprep.subr.mxu0 0.0
        %2446 = vmatpush1.msra.mxu0 0.0
        %2447 = vmatprep.subr.mxu0 0.0
        %2448 = vmatpush1.msra.mxu0 %v2409
        %2449 = vmatprep.subr.mxu0 0.0
        %2450 = vmatpush1.msra.mxu0 %v2408
        %2451 = vmatprep.subr.mxu0 0.0
        %2452 = vmatpush1.msra.mxu0 %v2407
        %2453 = vmatprep.subr.mxu0 0.0
        %2454 = vmatpush1.msra.mxu0 %v2406
        %2455 = vmatprep.subr.mxu0 0.0
        %2456 = vmatpush2.msra.mxu0 0.0
        %2457 = vmatprep.subr.mxu0 0.0
        %2458 = vmatpush2.msra.mxu0 0.0
        %2459 = vmatprep.subr.mxu0 0.0
        %2460 = vmatpush2.msra.mxu0 0.0
        %2461 = vmatprep.subr.mxu0 0.0
        %2462 = vmatpush2.msra.mxu0 0.0
        %2463 = vmatprep.subr.mxu0 0.0
        %2464 = vmatpush2.msra.mxu0 0.0
        %2465 = vmatprep.subr.mxu0 0.0
        %2466 = vmatpush2.msra.mxu0 0.0
        %2467 = vmatprep.subr.mxu0 0.0
        %2468 = vmatpush2.msra.mxu0 0.0
        %2469 = vmatprep.subr.mxu0 0.0
        %2470 = vmatpush2.msra.mxu0 0.0
        %2471 = vmatprep.subr.mxu0 0.0
        %2472 = vmatpush2.msra.mxu0 0.0
        %2473 = vmatprep.subr.mxu0 0.0
        %2474 = vmatpush2.msra.mxu0 0.0
        %2475 = vmatprep.subr.mxu0 0.0
        %2476 = vmatpush2.msra.mxu0 0.0
        %2477 = vmatprep.subr.mxu0 0.0
        %2478 = vmatpush2.msra.mxu0 0.0
        %2479 = vmatprep.subr.mxu0 0.0
        %2480 = vmatpush2.msra.mxu0 0.0
        %2481 = vmatprep.subr.mxu0 0.0
        %2482 = vmatpush2.msra.mxu0 0.0
        %2483 = vmatprep.subr.mxu0 0.0
        %2484 = vmatpush2.msra.mxu0 0.0
        %2485 = vmatprep.subr.mxu0 0.0
        %2486 = vmatpush2.msra.mxu0 0.0
        %2487 = vmatprep.mubr.f32.mxu0 0.0
        %2488 = vmatmul.mubr.f32.gmra.mxu0 %v2418
        %v2489 = vpop.f32.mrf.mxu0
        %v2490 = vadd.f32 %v2415, %v2489
        %v2491 = vpop.f32.mrf.mxu0
        %2492 = vmatprep.mubr.f32.mxu0 0.0
        %2493 = vmatmul.mubr.f32.gmra.mxu0 %v2421
        %v2494 = vpop.f32.mrf.mxu0
        %v2495 = vadd.f32 %v2415, %v2494
        %v2496 = vpop.f32.mrf.mxu0
        %2497 = vdwg.mxu0
        %v2498 = vmul.f32 %v2490, 0.5
        %v2499 = vmul.f32 %v2495, 0.5
        %v2500 = vmul.f32 %v2490, 0.044715
        %v2501 = vmul.f32 %v2495, 0.044715
        %v2502 = vmul.f32 %v2500, %v2490
        %v2503 = vmul.f32 %v2501, %v2495
        %v2504 = vmul.f32 %v2502, %v2490
        %v2505 = vmul.f32 %v2503, %v2495
        %v2506 = vadd.f32 %v2490, %v2504
        %v2507 = vadd.f32 %v2495, %v2505
        %v2508 = vmul.f32 %v2506, 0.7978846
        %v2509 = vmul.f32 %v2507, 0.7978846
        %v2510 = vtanh.pop %v2508
        %v2511 = vtanh.pop %v2509
        %v2512 = vadd.f32 %v2510, 1.0
        %v2513 = vadd.f32 %v2511, 1.0
        %v2514 = vmul.f32 %v2498, %v2512
        %v2515 = vmul.f32 %v2499, %v2513
        %v2516 = vld [vmem:[%s409] sm:$0xff]
        %v2517 = vld [vmem:[%s409 + $0x8] sm:$0xff]
        %v2518 = vld [vmem:[%s409 + $0x10] sm:$0xff]
        %v2519 = vld [vmem:[%s409 + $0x18] sm:$0xff]
        %v2520 = vld [vmem:[%s409 + $0x20] sm:$0xff]
        %v2521 = vld [vmem:[%s409 + $0x28] sm:$0xff]
        %v2522 = vld [vmem:[%s409 + $0x30] sm:$0xff]
        %v2523 = vld [vmem:[%s409 + $0x38] sm:$0xff]
        %v2525 = vlaneseq
        %v2526 = vshrl.u32 %v2525, 7
        %v2527 = vsub.s32 0, %v2526
        %v2528 = vrot.slane %v443, %v2527
        %vm2530 = vcmask 523264
        %v2532 = vsel %vm2530, %v2514, 0
        %v2535 = vsel %vm2530, %v2515, 0
        %2537 = vmatprep.subr.mxu0 0.0
        %2538 = vmatpush1.msra.mxu0 0.0
        %2539 = vmatprep.subr.mxu0 0.0
        %2540 = vmatpush1.msra.mxu0 0.0
        %2541 = vmatprep.subr.mxu0 0.0
        %2542 = vmatpush1.msra.mxu0 0.0
        %2543 = vmatprep.subr.mxu0 0.0
        %2544 = vmatpush1.msra.mxu0 0.0
        %2545 = vmatprep.subr.mxu0 0.0
        %2546 = vmatpush1.msra.mxu0 0.0
        %2547 = vmatprep.subr.mxu0 0.0
        %2548 = vmatpush1.msra.mxu0 0.0
        %2549 = vmatprep.subr.mxu0 0.0
        %2550 = vmatpush1.msra.mxu0 0.0
        %2551 = vmatprep.subr.mxu0 0.0
        %2552 = vmatpush1.msra.mxu0 0.0
        %2553 = vmatprep.subr.mxu0 0.0
        %2554 = vmatpush1.msra.mxu0 %v2523
        %2555 = vmatprep.subr.mxu0 0.0
        %2556 = vmatpush1.msra.mxu0 %v2522
        %2557 = vmatprep.subr.mxu0 0.0
        %2558 = vmatpush1.msra.mxu0 %v2521
        %2559 = vmatprep.subr.mxu0 0.0
        %2560 = vmatpush1.msra.mxu0 %v2520
        %2561 = vmatprep.subr.mxu0 0.0
        %2562 = vmatpush1.msra.mxu0 %v2519
        %2563 = vmatprep.subr.mxu0 0.0
        %2564 = vmatpush1.msra.mxu0 %v2518
        %2565 = vmatprep.subr.mxu0 0.0
        %2566 = vmatpush1.msra.mxu0 %v2517
        %2567 = vmatprep.subr.mxu0 0.0
        %2568 = vmatpush1.msra.mxu0 %v2516
        %2569 = vmatprep.subr.mxu0 0.0
        %2570 = vmatpush2.msra.mxu0 0.0
        %2571 = vmatprep.subr.mxu0 0.0
        %2572 = vmatpush2.msra.mxu0 0.0
        %2573 = vmatprep.subr.mxu0 0.0
        %2574 = vmatpush2.msra.mxu0 0.0
        %2575 = vmatprep.subr.mxu0 0.0
        %2576 = vmatpush2.msra.mxu0 0.0
        %2577 = vmatprep.subr.mxu0 0.0
        %2578 = vmatpush2.msra.mxu0 0.0
        %2579 = vmatprep.subr.mxu0 0.0
        %2580 = vmatpush2.msra.mxu0 0.0
        %2581 = vmatprep.subr.mxu0 0.0
        %2582 = vmatpush2.msra.mxu0 0.0
        %2583 = vmatprep.subr.mxu0 0.0
        %2584 = vmatpush2.msra.mxu0 0.0
        %2585 = vmatprep.subr.mxu0 0.0
        %2586 = vmatpush2.msra.mxu0 0.0
        %2587 = vmatprep.subr.mxu0 0.0
        %2588 = vmatpush2.msra.mxu0 0.0
        %2589 = vmatprep.subr.mxu0 0.0
        %2590 = vmatpush2.msra.mxu0 0.0
        %2591 = vmatprep.subr.mxu0 0.0
        %2592 = vmatpush2.msra.mxu0 0.0
        %2593 = vmatprep.subr.mxu0 0.0
        %2594 = vmatpush2.msra.mxu0 0.0
        %2595 = vmatprep.subr.mxu0 0.0
        %2596 = vmatpush2.msra.mxu0 0.0
        %2597 = vmatprep.subr.mxu0 0.0
        %2598 = vmatpush2.msra.mxu0 0.0
        %2599 = vmatprep.subr.mxu0 0.0
        %2600 = vmatpush2.msra.mxu0 0.0
        %2601 = vmatprep.mubr.f32.mxu0 0.0
        %2602 = vmatmul.mubr.f32.gmra.mxu0 %v2532
        %v2603 = vpop.f32.mrf.mxu0
        %v2604 = vadd.f32 %v2528, %v2603
        %v2605 = vpop.f32.mrf.mxu0
        %2606 = vmatprep.mubr.f32.mxu0 0.0
        %2607 = vmatmul.mubr.f32.gmra.mxu0 %v2535
        %v2608 = vpop.f32.mrf.mxu0
        %v2609 = vadd.f32 %v2528, %v2608
        %v2610 = vpop.f32.mrf.mxu0
        %2611 = vdwg.mxu0
        %v2612 = vadd.f32 %v2604, %v2404
        %v2613 = vadd.f32 %v2609, %v2405
        %v2614 = vsel %vm452, %v2612, 0.0
        %2615 = vadd.xlane.f32.xlu0 %v2614
        %v2616 = vpop.xlane.xlu0 %2615
        %v2617 = vsel %vm452, %v2613, 0.0
        %2618 = vadd.xlane.f32.xlu0 %v2617
        %v2619 = vpop.xlane.xlu0 %2618
        %v2620 = vmul.f32 %v2616, %v2369
        %v2621 = vmul.f32 %v2619, %v2369
        %v2622 = vsub.f32 %v2612, %v2620
        %v2623 = vsub.f32 %v2613, %v2621
        %v2624 = vmul.f32 %v2622, %v2622
        %v2625 = vmul.f32 %v2623, %v2623
        %v2626 = vsel %vm452, %v2624, 0.0
        %2627 = vadd.xlane.f32.xlu0 %v2626
        %v2628 = vpop.xlane.xlu0 %2627
        %v2629 = vsel %vm452, %v2625, 0.0
        %2630 = vadd.xlane.f32.xlu0 %v2629
        %v2631 = vpop.xlane.xlu0 %2630
        %v2632 = vmul.f32 %v2628, %v2369
        %v2633 = vmul.f32 %v2631, %v2369
        %v2634 = vadd.f32 %v2632, 1e-12
        %v2635 = vadd.f32 %v2633, 1e-12
        %v2636 = vrsqrt.pop %v2634
        %v2637 = vrsqrt.pop %v2635
        %v2638 = vmul.f32 %v2622, %v2636
        %v2639 = vmul.f32 %v2623, %v2637
        %v2641 = vlaneseq
        %v2642 = vshrl.u32 %v2641, 7
        %v2643 = vsub.s32 0, %v2642
        %v2644 = vrot.slane %v444, %v2643
        %v2646 = vmul.f32 %v2638, %v2644
        %v2647 = vmul.f32 %v2639, %v2644
        %v2649 = vlaneseq
        %v2650 = vshrl.u32 %v2649, 7
        %v2651 = vsub.s32 0, %v2650
        %v2652 = vrot.slane %v445, %v2651
        %v2654 = vadd.f32 %v2646, %v2652
        %v2655 = vadd.f32 %v2647, %v2652
        %2656 = vst.msk [vmem:[#allocation2] sm:$0xff] %vm452, %v2654
        %2657 = vst.msk [vmem:[#allocation2 + $0x8] sm:$0xff] %vm452, %v2655
        %p2658 = scmp.eq.s32.totalorder %s24, 1
        // Predicated region
        $region65: #{tpu_custom_call.1} parent=55 // pred_check
          %p2659 = pneg %p2658
        $region66: #{tpu_custom_call.1} parent=55 // pred_check_branch
          %2661 = sbr.rel (%p2659) target = $region68
        $region67: #{tpu_custom_call.1} parent=55 // pred_region
          %v2662 = vld [vmem:[%s7] sm:$0xff]
          %v2663 = vld [vmem:[%s7 + $0x8] sm:$0xff]
          %v2664 = vld [vmem:[%s7 + $0x10] sm:$0xff]
          %v2665 = vld [vmem:[%s7 + $0x18] sm:$0xff]
          %v2666 = vld [vmem:[%s8] sm:$0x1]
          %v2668 = vlaneseq
          %v2669 = vshrl.u32 %v2668, 7
          %v2670 = vsub.s32 0, %v2669
          %v2671 = vrot.slane %v2666, %v2670
          %v2674 = vsel %vm452, %v2654, 0
          %v2677 = vsel %vm452, %v2655, 0
          %2679 = vmatprep.subr.mxu0 0.0
          %2680 = vmatpush1.msra.mxu0 0.0
          %2681 = vmatprep.subr.mxu0 0.0
          %2682 = vmatpush1.msra.mxu0 0.0
          %2683 = vmatprep.subr.mxu0 0.0
          %2684 = vmatpush1.msra.mxu0 0.0
          %2685 = vmatprep.subr.mxu0 0.0
          %2686 = vmatpush1.msra.mxu0 0.0
          %2687 = vmatprep.subr.mxu0 0.0
          %2688 = vmatpush1.msra.mxu0 0.0
          %2689 = vmatprep.subr.mxu0 0.0
          %2690 = vmatpush1.msra.mxu0 0.0
          %2691 = vmatprep.subr.mxu0 0.0
          %2692 = vmatpush1.msra.mxu0 0.0
          %2693 = vmatprep.subr.mxu0 0.0
          %2694 = vmatpush1.msra.mxu0 0.0
          %2695 = vmatprep.subr.mxu0 0.0
          %2696 = vmatpush1.msra.mxu0 0.0
          %2697 = vmatprep.subr.mxu0 0.0
          %2698 = vmatpush1.msra.mxu0 0.0
          %2699 = vmatprep.subr.mxu0 0.0
          %2700 = vmatpush1.msra.mxu0 0.0
          %2701 = vmatprep.subr.mxu0 0.0
          %2702 = vmatpush1.msra.mxu0 0.0
          %2703 = vmatprep.subr.mxu0 0.0
          %2704 = vmatpush1.msra.mxu0 %v2665
          %2705 = vmatprep.subr.mxu0 0.0
          %2706 = vmatpush1.msra.mxu0 %v2664
          %2707 = vmatprep.subr.mxu0 0.0
          %2708 = vmatpush1.msra.mxu0 %v2663
          %2709 = vmatprep.subr.mxu0 0.0
          %2710 = vmatpush1.msra.mxu0 %v2662
          %2711 = vmatprep.subr.mxu0 0.0
          %2712 = vmatpush2.msra.mxu0 0.0
          %2713 = vmatprep.subr.mxu0 0.0
          %2714 = vmatpush2.msra.mxu0 0.0
          %2715 = vmatprep.subr.mxu0 0.0
          %2716 = vmatpush2.msra.mxu0 0.0
          %2717 = vmatprep.subr.mxu0 0.0
          %2718 = vmatpush2.msra.mxu0 0.0
          %2719 = vmatprep.subr.mxu0 0.0
          %2720 = vmatpush2.msra.mxu0 0.0
          %2721 = vmatprep.subr.mxu0 0.0
          %2722 = vmatpush2.msra.mxu0 0.0
          %2723 = vmatprep.subr.mxu0 0.0
          %2724 = vmatpush2.msra.mxu0 0.0
          %2725 = vmatprep.subr.mxu0 0.0
          %2726 = vmatpush2.msra.mxu0 0.0
          %2727 = vmatprep.subr.mxu0 0.0
          %2728 = vmatpush2.msra.mxu0 0.0
          %2729 = vmatprep.subr.mxu0 0.0
          %2730 = vmatpush2.msra.mxu0 0.0
          %2731 = vmatprep.subr.mxu0 0.0
          %2732 = vmatpush2.msra.mxu0 0.0
          %2733 = vmatprep.subr.mxu0 0.0
          %2734 = vmatpush2.msra.mxu0 0.0
          %2735 = vmatprep.subr.mxu0 0.0
          %2736 = vmatpush2.msra.mxu0 0.0
          %2737 = vmatprep.subr.mxu0 0.0
          %2738 = vmatpush2.msra.mxu0 0.0
          %2739 = vmatprep.subr.mxu0 0.0
          %2740 = vmatpush2.msra.mxu0 0.0
          %2741 = vmatprep.subr.mxu0 0.0
          %2742 = vmatpush2.msra.mxu0 0.0
          %2743 = vmatprep.mubr.f32.mxu0 0.0
          %2744 = vmatmul.mubr.f32.gmra.mxu0 %v2674
          %v2745 = vpop.f32.mrf.mxu0
          %v2746 = vadd.f32 %v2671, %v2745
          %v2747 = vpop.f32.mrf.mxu0
          %2748 = vmatprep.mubr.f32.mxu0 0.0
          %2749 = vmatmul.mubr.f32.gmra.mxu0 %v2677
          %v2750 = vpop.f32.mrf.mxu0
          %v2751 = vadd.f32 %v2671, %v2750
          %v2752 = vpop.f32.mrf.mxu0
          %2753 = vdwg.mxu0
          %2754 = vmax.xlane.f32.xlu0 %v2746
          %v2755 = vpop.xlane.xlu0 %2754
          %2756 = vmax.xlane.f32.xlu0 %v2751
          %v2757 = vpop.xlane.xlu0 %2756
          %v2758 = vsub.f32 %v2746, %v2755
          %v2759 = vsub.f32 %v2751, %v2757
          %v2760 = vmul.f32 %v2758, 1.442695
          %v2761 = vpow.pop %v2760
          %v2762 = vmul.f32 %v2759, 1.442695
          %v2763 = vpow.pop %v2762
          %2764 = vadd.xlane.f32.xlu0 %v2761
          %v2765 = vpop.xlane.xlu0 %2764
          %2766 = vadd.xlane.f32.xlu0 %v2763
          %v2767 = vpop.xlane.xlu0 %2766
          %v2768 = vlog2.pop %v2765
          %v2769 = vmul.f32 %v2768, 0.6931472
          %v2770 = vlog2.pop %v2767
          %v2771 = vmul.f32 %v2770, 0.6931472
          %v2772 = vsub.f32 %v2758, %v2769
          %v2773 = vsub.f32 %v2759, %v2771
          %2774 = vst [vmem:[#allocation6] sm:$0xff] %v2772
          %2775 = vst [vmem:[#allocation6 + $0x8] sm:$0xff] %v2773
        $region68: #{tpu_custom_call.1} parent=55 // pred_fallthru
          _
        // Predicated region
        $region69: #{tpu_custom_call.1} parent=55 // pred_check
          %p2776 = pneg %p251
        $region70: #{tpu_custom_call.1} parent=55 // pred_check_branch
          %2778 = sbr.rel (%p2776) target = $region72
        $region71: #{tpu_custom_call.1} parent=55 // pred_region
          %s2780 = ssub.s32 256, 256
          %2781 = vsyncadd [#allocation5], %s2780
          %s2782 = sshll.u32 [#allocation6], 4
          %s2783 = int_to_ptr.vmem [resolvable:$true] %s2782
          %2788 = dma.vmem_to_hbm [thread:$0]  %s2783, 256, %s9, [#allocation5], 128, 128, 8
        $region72: #{tpu_custom_call.1} parent=55 // pred_fallthru
          _
        // Predicated region
        $region73: #{tpu_custom_call.1} parent=55 // pred_check
          %p2789 = pneg %p251
        $region74: #{tpu_custom_call.1} parent=55 // pred_check_branch
          %2791 = sbr.rel (%p2789) target = $region76
        $region75: #{tpu_custom_call.1} parent=55 // pred_region
          %2792 = dma.done [#allocation5], 256
        $region76: #{tpu_custom_call.1} parent=55 // pred_fallthru
          _
      $region56: #{tpu_custom_call.1} parent=5 // pred_fallthru
        _
      %p2793 = scmp.le.s32.totalorder 2, %s19
      // Predicated region
      $region77: #{tpu_custom_call.1} parent=5 // pred_check
        %p2794 = pneg %p2793
      $region78: #{tpu_custom_call.1} parent=5 // pred_check_branch
        %2796 = sbr.rel (%p2794) target = $region80
      $region79: #{tpu_custom_call.1} parent=5 // pred_region
        %s2797 = ssub.s32 %s19, 2
      $region80: #{tpu_custom_call.1} parent=5 // pred_fallthru
        _
    $region6: #{tpu_custom_call.1} parent=1 // loop_footer
      %s23 = sadd.s32 1, %s19
    $region7: #{tpu_custom_call.1} parent=1 // loop_footer_branch
      %18 = sbr.rel target = $region3
    $region8: #{tpu_custom_call.1} parent=1 // loop_exit
      _
    %2798 = vsyncpa [#allocation4], 1
    %s2799 = scalar_lea.sflag [#allocation4], 1
    %2800 = vsyncpa %s2799, 1
    %2801 = vsyncpa [#allocation5], 1
    %s2802 = scalar_lea.sflag [#allocation5], 1
    %2803 = vsyncpa %s2802, 1

</llo_original>
